<compile_context>
chip_gen: v5e
topology: v5e:2x2
jax: 0.10.0
libtpu: 0.0.40
codegen_flags: <defaults>
</compile_context>

<pallas_src>
import jax
import jax.numpy as jnp
from jax import lax
from jax.experimental import pallas as pl
from jax.experimental.pallas import tpu as pltpu

EPS = 1e-5


def se_conv_bn_kernel(xse_ref, w1t_ref, b1_ref, x_ref, w2_ref,
                      gamma_ref, beta_ref, out_ref):
    # --- conv2d107 (1x1, 40 -> 960) + sigmoid, lane-major row ---------------
    # xse_ref: [1, 40] f32, w1t_ref: [40, 960] f32, b1_ref: [1, 960] f32.
    # Tiny matvec on the (otherwise idle) MXU; sigmoid on the EUP.
    se_pre = jnp.dot(xse_ref[...], w1t_ref[...],
                     preferred_element_type=jnp.float32) + b1_ref[...]
    se = jax.nn.sigmoid(se_pre)                                # [1, 960] f32

    # --- fold the SE gate into w2's columns ----------------------------------
    # w2_ref: [160, 960] bf16.  Scaling w2 touches ~3.7x fewer elements than
    # scaling x, and x is then consumed directly by the matmul below.
    w2s = (w2_ref[...].astype(jnp.float32) * se).astype(jnp.bfloat16)  # [160,960]

    # --- conv2d108 (1x1, 960 -> 160, no bias) --------------------------------
    # x_ref: [960, 196] f32, cast to bf16 in vregs; f32 MXU accumulation.
    z = jnp.dot(w2s, x_ref[...].astype(jnp.bfloat16),
                preferred_element_type=jnp.float32)            # [160, 196] f32

    # --- BatchNorm2d(160), training mode (batch stats over N*H*W, N=1) ------
    inv_n = 1.0 / z.shape[1]
    s1 = jnp.sum(z, axis=1, keepdims=True)                     # [160, 1]
    s2 = jnp.sum(z * z, axis=1, keepdims=True)                 # [160, 1]
    mean = s1 * inv_n
    var = jnp.maximum(s2 * inv_n - mean * mean, 0.0)           # biased, guarded
    scale = lax.rsqrt(var + EPS) * gamma_ref[...]              # [160, 1]
    out_ref[...] = (z - mean) * scale + beta_ref[...]


def prepare_params(w1, b1, w2, gamma, beta):
    """One-time parameter layout prep.  Call OUTSIDE jit (init time)."""
    Cmid, Cse = w1.shape[0], w1.shape[1]          # 960, 40
    Cout, Cin = w2.shape[0], w2.shape[1]          # 160, 960
    w1t = jnp.transpose(w1.reshape(Cmid, Cse))    # [40, 960] f32
    b1_row = b1.reshape(1, Cmid)                  # [1, 960]  f32 (dense lane row)
    w2_r = w2.reshape(Cout, Cin).astype(jnp.bfloat16)  # [160, 960] bf16 (init-time cast)
    gamma_col = gamma.reshape(Cout, 1)            # [160, 1]
    beta_col = beta.reshape(Cout, 1)              # [160, 1]
    return w1t, b1_row, w2_r, gamma_col, beta_col


def se_conv_bn(x332, x329, w1t, b1_row, w2_r, gamma_col, beta_col):
    """x332: [1, 40, 1, 1], x329: [1, 960, 14, 14] -> [1, 160, 14, 14]."""
    N, Cin, H, W = x329.shape
    assert N == 1, "kernel BN statistics / channel-major reshape assume N == 1"
    Cse = x332.shape[1]
    Cout = w2_r.shape[0]
    HW = H * W

    # Channel-major layout: pure reshapes of contiguous NCHW data (no transposes,
    # no dtype converts -- those were done once at init in prepare_params).
    xse = x332.reshape(1, Cse)                    # [1, 40]
    x_cm = x329.reshape(Cin, HW)                  # [960, 196]

    vmem = pl.BlockSpec(memory_space=pltpu.MemorySpace.VMEM)
    cost = pl.CostEstimate(
        flops=2 * Cout * Cin * HW + 2 * Cin * Cse,       # ~6.0e7
        transcendentals=Cin + Cout,                      # sigmoid + rsqrt
        bytes_accessed=(x_cm.size * 4 + w2_r.size * 2 + w1t.size * 4
                        + b1_row.size * 4 + xse.size * 4
                        + (gamma_col.size + beta_col.size) * 4
                        + Cout * HW * 4),                # ~1.35e6
    )
    out_cm = pl.pallas_call(
        se_conv_bn_kernel,
        out_shape=jax.ShapeDtypeStruct((Cout, HW), jnp.float32),
        in_specs=[vmem] * 7,
        out_specs=vmem,
        cost_estimate=cost,
    )(xse, w1t, b1_row, x_cm, w2_r, gamma_col, beta_col)

    # [160, 196] -> NCHW [1, 160, 14, 14]: pure reshape, no transpose.
    return out_cm.reshape(N, Cout, H, W)


def reference(x332, x329, w1, b1, w2, gamma, beta):
    """Pure-f32 JAX reference of the PyTorch forward (training-mode BN)."""
    # TODO(synk): training-mode BatchNorm also updates running_mean/running_var
    # buffers in PyTorch; that stateful side effect is not emitted here (the
    # forward output does not depend on it).
    Cmid, Cse = w1.shape[0], w1.shape[1]
    Cout = w2.shape[0]
    hp = lax.Precision.HIGHEST
    x333 = jnp.einsum('oc,nchw->nohw', w1.reshape(Cmid, Cse), x332,
                      precision=hp) + b1.reshape(1, Cmid, 1, 1)
    x334 = jax.nn.sigmoid(x333)
    x335 = x334 * x329
    x336 = jnp.einsum('oc,nchw->nohw', w2.reshape(Cout, x329.shape[1]), x335,
                      precision=hp)
    mean = jnp.mean(x336, axis=(0, 2, 3), keepdims=True)
    var = jnp.mean((x336 - mean) ** 2, axis=(0, 2, 3), keepdims=True)
    return (x336 - mean) / jnp.sqrt(var + EPS) * gamma.reshape(1, -1, 1, 1) \
        + beta.reshape(1, -1, 1, 1)


if __name__ == "__main__":
    key = jax.random.PRNGKey(0)
    k1, k2, k3, k4, k5, k6, k7 = jax.random.split(key, 7)

    # Inputs (shapes fixed by the module's conv channel counts).
    x329 = jax.random.normal(k1, (1, 960, 14, 14), dtype=jnp.float32)
    x332 = jax.random.normal(k2, (1, 40, 1, 1), dtype=jnp.float32)

    # Deterministic synthetic parameters.
    w1 = jax.random.normal(k3, (960, 40, 1, 1), dtype=jnp.float32) * 0.05   # conv2d107.weight
    b1 = jax.random.normal(k4, (960,), dtype=jnp.float32) * 0.05            # conv2d107.bias
    w2 = jax.random.normal(k5, (160, 960, 1, 1), dtype=jnp.float32) * 0.02  # conv2d108.weight
    gamma = 1.0 + 0.1 * jax.random.normal(k6, (160,), dtype=jnp.float32)    # bn weight
    beta = 0.1 * jax.random.normal(k7, (160,), dtype=jnp.float32)           # bn bias

    # Init-time (outside jit) parameter layout prep: w1 transpose, w2 bf16 cast.
    params = prepare_params(w1, b1, w2, gamma, beta)

    fn = jax.jit(se_conv_bn)
    out = fn(x332, x329, *params)
    out = jax.block_until_ready(out)

    ref = reference(x332, x329, w1, b1, w2, gamma, beta)
    assert out.shape == (1, 160, 14, 14)
    # Tolerance accounts for the deliberate bf16 MXU operands on the 960-deep
    # contraction (f32 accumulation keeps it unbiased); everything else is f32.
    assert jnp.allclose(out, ref, atol=2e-2, rtol=2e-2), \
        f"max abs err {jnp.max(jnp.abs(out - ref))}"

    print("KERNEL_OK")
</pallas_src>

<mosaic_0001>
module attributes {stable_mosaic.version = 11 : i64} {
  func.func @se_conv_bn_kernel(%arg0: memref<1x40xf32, #tpu.memory_space<vmem>>, %arg1: memref<40x960xf32, #tpu.memory_space<vmem>>, %arg2: memref<1x960xf32, #tpu.memory_space<vmem>>, %arg3: memref<960x196xf32, #tpu.memory_space<vmem>>, %arg4: memref<160x960xbf16, #tpu.memory_space<vmem>>, %arg5: memref<160x1xf32, #tpu.memory_space<vmem>>, %arg6: memref<160x1xf32, #tpu.memory_space<vmem>>, %arg7: memref<160x196xf32, #tpu.memory_space<vmem>>) attributes {dimension_semantics = [], scalar_prefetch = 0 : i64, scratch_operands = 0 : i64, tpu.core_type = #tpu.core_type<tc>} {
    %c0 = arith.constant 0 : index
    %c0_0 = arith.constant 0 : index
    %0 = vector.load %arg0[%c0, %c0_0] : memref<1x40xf32, #tpu.memory_space<vmem>>, vector<1x40xf32>
    %c0_1 = arith.constant 0 : index
    %c0_2 = arith.constant 0 : index
    %1 = vector.load %arg1[%c0_1, %c0_2] : memref<40x960xf32, #tpu.memory_space<vmem>>, vector<40x960xf32>
    %cst = arith.constant dense<0.000000e+00> : vector<1x960xf32>
    %2 = tpu.matmul %0, %1, %cst {dimension_numbers = #tpu.dot_dimension_numbers<[1], [0], [0], [1], [0, 0, 1, 1], [], []>} : vector<1x40xf32>, vector<40x960xf32>, vector<1x960xf32> -> vector<1x960xf32>
    %c0_3 = arith.constant 0 : index
    %c0_4 = arith.constant 0 : index
    %3 = vector.load %arg2[%c0_3, %c0_4] : memref<1x960xf32, #tpu.memory_space<vmem>>, vector<1x960xf32>
    %4 = arith.addf %2, %3 : vector<1x960xf32>
    %5 = arith.negf %4 : vector<1x960xf32>
    %6 = math.exp %5 : vector<1x960xf32>
    %cst_5 = arith.constant 1.000000e+00 : f32
    %7 = vector.broadcast %cst_5 : f32 to vector<1x960xf32>
    %8 = arith.addf %7, %6 : vector<1x960xf32>
    %9 = arith.divf %7, %8 : vector<1x960xf32>
    %c0_6 = arith.constant 0 : index
    %c0_7 = arith.constant 0 : index
    %10 = vector.load %arg4[%c0_6, %c0_7] : memref<160x960xbf16, #tpu.memory_space<vmem>>, vector<160x960xbf16>
    %11 = arith.extf %10 : vector<160x960xbf16> to vector<160x960xf32>
    %12 = vector.broadcast %9 : vector<1x960xf32> to vector<160x960xf32>
    %13 = arith.mulf %11, %12 : vector<160x960xf32>
    %14 = arith.truncf %13 : vector<160x960xf32> to vector<160x960xbf16>
    %c0_8 = arith.constant 0 : index
    %c0_9 = arith.constant 0 : index
    %15 = vector.load %arg3[%c0_8, %c0_9] : memref<960x196xf32, #tpu.memory_space<vmem>>, vector<960x196xf32>
    %16 = arith.truncf %15 : vector<960x196xf32> to vector<960x196xbf16>
    %cst_10 = arith.constant dense<0.000000e+00> : vector<160x196xf32>
    %17 = tpu.matmul %14, %16, %cst_10 {dimension_numbers = #tpu.dot_dimension_numbers<[1], [0], [0], [1], [0, 0, 1, 1], [], []>} : vector<160x960xbf16>, vector<960x196xbf16>, vector<160x196xf32> -> vector<160x196xf32>
    %cst_11 = arith.constant dense<0.000000e+00> : vector<160xf32>
    %18 = vector.multi_reduction <add>, %17, %cst_11 [1] : vector<160x196xf32> to vector<160xf32>
    %19 = vector.shape_cast %18 : vector<160xf32> to vector<160x1xf32>
    %20 = arith.mulf %17, %17 : vector<160x196xf32>
    %cst_12 = arith.constant dense<0.000000e+00> : vector<160xf32>
    %21 = vector.multi_reduction <add>, %20, %cst_12 [1] : vector<160x196xf32> to vector<160xf32>
    %22 = vector.shape_cast %21 : vector<160xf32> to vector<160x1xf32>
    %cst_13 = arith.constant 0.00510204071 : f32
    %23 = vector.broadcast %cst_13 : f32 to vector<160x1xf32>
    %24 = arith.mulf %19, %23 : vector<160x1xf32>
    %cst_14 = arith.constant 0.00510204071 : f32
    %25 = vector.broadcast %cst_14 : f32 to vector<160x1xf32>
    %26 = arith.mulf %22, %25 : vector<160x1xf32>
    %27 = arith.mulf %24, %24 : vector<160x1xf32>
    %28 = arith.subf %26, %27 : vector<160x1xf32>
    %cst_15 = arith.constant 0.000000e+00 : f32
    %29 = vector.broadcast %cst_15 : f32 to vector<160x1xf32>
    %30 = arith.maximumf %28, %29 : vector<160x1xf32>
    %cst_16 = arith.constant 9.99999974E-6 : f32
    %31 = vector.broadcast %cst_16 : f32 to vector<160x1xf32>
    %32 = arith.addf %30, %31 : vector<160x1xf32>
    %33 = math.rsqrt %32 : vector<160x1xf32>
    %c0_17 = arith.constant 0 : index
    %c0_18 = arith.constant 0 : index
    %34 = vector.load %arg5[%c0_17, %c0_18] : memref<160x1xf32, #tpu.memory_space<vmem>>, vector<160x1xf32>
    %35 = arith.mulf %33, %34 : vector<160x1xf32>
    %36 = vector.broadcast %24 : vector<160x1xf32> to vector<160x196xf32>
    %37 = arith.subf %17, %36 : vector<160x196xf32>
    %38 = vector.broadcast %35 : vector<160x1xf32> to vector<160x196xf32>
    %39 = arith.mulf %37, %38 : vector<160x196xf32>
    %c0_19 = arith.constant 0 : index
    %c0_20 = arith.constant 0 : index
    %40 = vector.load %arg6[%c0_19, %c0_20] : memref<160x1xf32, #tpu.memory_space<vmem>>, vector<160x1xf32>
    %41 = vector.broadcast %40 : vector<160x1xf32> to vector<160x196xf32>
    %42 = arith.addf %39, %41 : vector<160x196xf32>
    %c0_21 = arith.constant 0 : index
    %c0_22 = arith.constant 0 : index
    %43 = vector.load %arg7[%c0_21, %c0_22] : memref<160x196xf32, #tpu.memory_space<vmem>>, vector<160x196xf32>
    tpu.vector_store %arg7[%c0_21, %c0_22], %42 {strides = array<i32>} : memref<160x196xf32, #tpu.memory_space<vmem>>, vector<160x196xf32>,
    return
  }
}

</mosaic_0001>

<llo_original>
// kernel: se_conv_bn.1
$region0: #{se_conv_bn.1}
  #allocation0 [shape = 'u32[]', space=smem, size = 0x4, offset = 0x4, fixed_abs, tag = 'smem constant byte address 0x4 - core index']
  #allocation1 [shape = 'u32[72,128]{1,0:T(1,128)}', space=vmem, size = 0x9000, scoped, tag = 'internal scratch']
  %s0 = inlined_call_operand.vmem [shape: f32[1,40], index: 0, kind: input, shape index: {}]
  %s1 = inlined_call_operand.vmem [shape: f32[40,960], index: 1, kind: input, shape index: {}]
  %s2 = inlined_call_operand.vmem [shape: f32[1,960], index: 2, kind: input, shape index: {}]
  %s3 = inlined_call_operand.vmem [shape: f32[960,196], index: 3, kind: input, shape index: {}]
  %s4 = inlined_call_operand.vmem [shape: bf16[160,960], index: 4, kind: input, shape index: {}]
  %s5 = inlined_call_operand.vmem [shape: f32[160,1], index: 5, kind: input, shape index: {}]
  %s6 = inlined_call_operand.vmem [shape: f32[160,1], index: 6, kind: input, shape index: {}]
  %s7 = inlined_call_operand.vmem [shape: f32[160,196], index: 7, kind: output, shape index: {}]
  %s8 = sld [smem:[#allocation0]]
  $region38: #{se_conv_bn.1} parent=0
    _
  %s10 = ssub.s32 1, %s8
  %s11 = scalar_select 0, %s10, %s8
  // Predicated region
  $region2: #{se_conv_bn.1} parent=0 // pred_check
    _
  $region3: #{se_conv_bn.1} parent=0 // pred_check_branch
    %13 = sbr.rel (0) target = $region5
  $region4: #{se_conv_bn.1} parent=0 // pred_region
    _
  $region5: #{se_conv_bn.1} parent=0 // pred_fallthru
    _
  // Predicated region
  $region6: #{se_conv_bn.1} parent=0 // pred_check
    _
  $region7: #{se_conv_bn.1} parent=0 // pred_check_branch
    %15 = sbr.rel (0) target = $region9
  $region8: #{se_conv_bn.1} parent=0 // pred_region
    _
  $region9: #{se_conv_bn.1} parent=0 // pred_fallthru
    _
  // Predicated region
  $region10: #{se_conv_bn.1} parent=0 // pred_check
    _
  $region11: #{se_conv_bn.1} parent=0 // pred_check_branch
    %17 = sbr.rel (0) target = $region13
  $region12: #{se_conv_bn.1} parent=0 // pred_region
    _
  $region13: #{se_conv_bn.1} parent=0 // pred_fallthru
    _
  // Predicated region
  $region14: #{se_conv_bn.1} parent=0 // pred_check
    _
  $region15: #{se_conv_bn.1} parent=0 // pred_check_branch
    %19 = sbr.rel (0) target = $region17
  $region16: #{se_conv_bn.1} parent=0 // pred_region
    _
  $region17: #{se_conv_bn.1} parent=0 // pred_fallthru
    _
  // Predicated region
  $region18: #{se_conv_bn.1} parent=0 // pred_check
    _
  $region19: #{se_conv_bn.1} parent=0 // pred_check_branch
    %21 = sbr.rel (0) target = $region21
  $region20: #{se_conv_bn.1} parent=0 // pred_region
    _
  $region21: #{se_conv_bn.1} parent=0 // pred_fallthru
    _
  // Predicated region
  $region22: #{se_conv_bn.1} parent=0 // pred_check
    _
  $region23: #{se_conv_bn.1} parent=0 // pred_check_branch
    %23 = sbr.rel (0) target = $region25
  $region24: #{se_conv_bn.1} parent=0 // pred_region
    _
  $region25: #{se_conv_bn.1} parent=0 // pred_fallthru
    _
  // Predicated region
  $region26: #{se_conv_bn.1} parent=0 // pred_check
    _
  $region27: #{se_conv_bn.1} parent=0 // pred_check_branch
    %25 = sbr.rel (0) target = $region29
  $region28: #{se_conv_bn.1} parent=0 // pred_region
    _
  $region29: #{se_conv_bn.1} parent=0 // pred_fallthru
    _
  %v27 = vld [vmem:[%s0] sm:$0x1]
  %v28 = vld [vmem:[%s1] sm:$0xff]
  %v29 = vld [vmem:[%s1 + $0x8] sm:$0xff]
  %v30 = vld [vmem:[%s1 + $0x10] sm:$0xff]
  %v31 = vld [vmem:[%s1 + $0x18] sm:$0xff]
  %v32 = vld [vmem:[%s1 + $0x20] sm:$0xff]
  %v33 = vld [vmem:[%s1 + $0x28] sm:$0xff]
  %v34 = vld [vmem:[%s1 + $0x30] sm:$0xff]
  %v35 = vld [vmem:[%s1 + $0x38] sm:$0xff]
  %v36 = vld [vmem:[%s1 + $0x40] sm:$0xff]
  %v37 = vld [vmem:[%s1 + $0x48] sm:$0xff]
  %v38 = vld [vmem:[%s1 + $0x50] sm:$0xff]
  %v39 = vld [vmem:[%s1 + $0x58] sm:$0xff]
  %v40 = vld [vmem:[%s1 + $0x60] sm:$0xff]
  %v41 = vld [vmem:[%s1 + $0x68] sm:$0xff]
  %v42 = vld [vmem:[%s1 + $0x70] sm:$0xff]
  %v43 = vld [vmem:[%s1 + $0x78] sm:$0xff]
  %v44 = vld [vmem:[%s1 + $0x80] sm:$0xff]
  %v45 = vld [vmem:[%s1 + $0x88] sm:$0xff]
  %v46 = vld [vmem:[%s1 + $0x90] sm:$0xff]
  %v47 = vld [vmem:[%s1 + $0x98] sm:$0xff]
  %v48 = vld [vmem:[%s1 + $0xa0] sm:$0xff]
  %v49 = vld [vmem:[%s1 + $0xa8] sm:$0xff]
  %v50 = vld [vmem:[%s1 + $0xb0] sm:$0xff]
  %v51 = vld [vmem:[%s1 + $0xb8] sm:$0xff]
  %v52 = vld [vmem:[%s1 + $0xc0] sm:$0xff]
  %v53 = vld [vmem:[%s1 + $0xc8] sm:$0xff]
  %v54 = vld [vmem:[%s1 + $0xd0] sm:$0xff]
  %v55 = vld [vmem:[%s1 + $0xd8] sm:$0xff]
  %v56 = vld [vmem:[%s1 + $0xe0] sm:$0xff]
  %v57 = vld [vmem:[%s1 + $0xe8] sm:$0xff]
  %v58 = vld [vmem:[%s1 + $0xf0] sm:$0xff]
  %v59 = vld [vmem:[%s1 + $0xf8] sm:$0xff]
  %v60 = vld [vmem:[%s1 + $0x100] sm:$0xff]
  %v61 = vld [vmem:[%s1 + $0x108] sm:$0xff]
  %v62 = vld [vmem:[%s1 + $0x110] sm:$0xff]
  %v63 = vld [vmem:[%s1 + $0x118] sm:$0xff]
  %v64 = vld [vmem:[%s1 + $0x120] sm:$0xff]
  %v65 = vld [vmem:[%s1 + $0x128] sm:$0xff]
  %v66 = vld [vmem:[%s1 + $0x130] sm:$0xff]
  %v67 = vld [vmem:[%s1 + $0x138] sm:$0xff]
  %v68 = vld [vmem:[%s2] sm:$0xff]
  %v70 = vperm.slane %v68, 0
  %v71 = vperm.slane %v68, 1
  %v72 = vperm.slane %v68, 2
  %v73 = vperm.slane %v68, 3
  %v74 = vperm.slane %v68, 4
  %v75 = vperm.slane %v68, 5
  %v76 = vperm.slane %v68, 6
  %v77 = vperm.slane %v68, 7
  %vm86 = vcmask 326656
  %v88 = vsel %vm86, %v27, 0
  %90 = vmatpush.msra.mxu0 0.0
  %91 = vmatpush.msra.mxu0 0.0
  %92 = vmatpush.msra.mxu0 0.0
  %93 = vmatpush.msra.mxu0 0.0
  %94 = vmatpush.msra.mxu0 0.0
  %95 = vmatpush.msra.mxu0 0.0
  %96 = vmatpush.msra.mxu0 0.0
  %97 = vmatpush.msra.mxu0 0.0
  %98 = vmatpush.msra.mxu0 0.0
  %99 = vmatpush.msra.mxu0 0.0
  %100 = vmatpush.msra.mxu0 0.0
  %101 = vmatpush.msra.mxu0 %v60
  %102 = vmatpush.msra.mxu0 %v52
  %103 = vmatpush.msra.mxu0 %v44
  %104 = vmatpush.msra.mxu0 %v36
  %105 = vmatpush.msra.mxu0 %v28
  %106 = vmatmul.f32.gmra.mxu0 %v88
  %v107 = vpop.f32.mrf.mxu0
  %v108 = vadd.f32 %v70, %v107
  %109 = vdwg.mxu0
  %110 = vmatpush.msra.mxu0 0.0
  %111 = vmatpush.msra.mxu0 0.0
  %112 = vmatpush.msra.mxu0 0.0
  %113 = vmatpush.msra.mxu0 0.0
  %114 = vmatpush.msra.mxu0 0.0
  %115 = vmatpush.msra.mxu0 0.0
  %116 = vmatpush.msra.mxu0 0.0
  %117 = vmatpush.msra.mxu0 0.0
  %118 = vmatpush.msra.mxu0 0.0
  %119 = vmatpush.msra.mxu0 0.0
  %120 = vmatpush.msra.mxu0 0.0
  %121 = vmatpush.msra.mxu0 %v61
  %122 = vmatpush.msra.mxu0 %v53
  %123 = vmatpush.msra.mxu0 %v45
  %124 = vmatpush.msra.mxu0 %v37
  %125 = vmatpush.msra.mxu0 %v29
  %126 = vmatmul.f32.gmra.mxu0 %v88
  %v127 = vpop.f32.mrf.mxu0
  %v128 = vadd.f32 %v71, %v127
  %129 = vdwg.mxu0
  %130 = vmatpush.msra.mxu0 0.0
  %131 = vmatpush.msra.mxu0 0.0
  %132 = vmatpush.msra.mxu0 0.0
  %133 = vmatpush.msra.mxu0 0.0
  %134 = vmatpush.msra.mxu0 0.0
  %135 = vmatpush.msra.mxu0 0.0
  %136 = vmatpush.msra.mxu0 0.0
  %137 = vmatpush.msra.mxu0 0.0
  %138 = vmatpush.msra.mxu0 0.0
  %139 = vmatpush.msra.mxu0 0.0
  %140 = vmatpush.msra.mxu0 0.0
  %141 = vmatpush.msra.mxu0 %v62
  %142 = vmatpush.msra.mxu0 %v54
  %143 = vmatpush.msra.mxu0 %v46
  %144 = vmatpush.msra.mxu0 %v38
  %145 = vmatpush.msra.mxu0 %v30
  %146 = vmatmul.f32.gmra.mxu0 %v88
  %v147 = vpop.f32.mrf.mxu0
  %v148 = vadd.f32 %v72, %v147
  %149 = vdwg.mxu0
  %150 = vmatpush.msra.mxu0 0.0
  %151 = vmatpush.msra.mxu0 0.0
  %152 = vmatpush.msra.mxu0 0.0
  %153 = vmatpush.msra.mxu0 0.0
  %154 = vmatpush.msra.mxu0 0.0
  %155 = vmatpush.msra.mxu0 0.0
  %156 = vmatpush.msra.mxu0 0.0
  %157 = vmatpush.msra.mxu0 0.0
  %158 = vmatpush.msra.mxu0 0.0
  %159 = vmatpush.msra.mxu0 0.0
  %160 = vmatpush.msra.mxu0 0.0
  %161 = vmatpush.msra.mxu0 %v63
  %162 = vmatpush.msra.mxu0 %v55
  %163 = vmatpush.msra.mxu0 %v47
  %164 = vmatpush.msra.mxu0 %v39
  %165 = vmatpush.msra.mxu0 %v31
  %166 = vmatmul.f32.gmra.mxu0 %v88
  %v167 = vpop.f32.mrf.mxu0
  %v168 = vadd.f32 %v73, %v167
  %169 = vdwg.mxu0
  %170 = vmatpush.msra.mxu0 0.0
  %171 = vmatpush.msra.mxu0 0.0
  %172 = vmatpush.msra.mxu0 0.0
  %173 = vmatpush.msra.mxu0 0.0
  %174 = vmatpush.msra.mxu0 0.0
  %175 = vmatpush.msra.mxu0 0.0
  %176 = vmatpush.msra.mxu0 0.0
  %177 = vmatpush.msra.mxu0 0.0
  %178 = vmatpush.msra.mxu0 0.0
  %179 = vmatpush.msra.mxu0 0.0
  %180 = vmatpush.msra.mxu0 0.0
  %181 = vmatpush.msra.mxu0 %v64
  %182 = vmatpush.msra.mxu0 %v56
  %183 = vmatpush.msra.mxu0 %v48
  %184 = vmatpush.msra.mxu0 %v40
  %185 = vmatpush.msra.mxu0 %v32
  %186 = vmatmul.f32.gmra.mxu0 %v88
  %v187 = vpop.f32.mrf.mxu0
  %v188 = vadd.f32 %v74, %v187
  %189 = vdwg.mxu0
  %190 = vmatpush.msra.mxu0 0.0
  %191 = vmatpush.msra.mxu0 0.0
  %192 = vmatpush.msra.mxu0 0.0
  %193 = vmatpush.msra.mxu0 0.0
  %194 = vmatpush.msra.mxu0 0.0
  %195 = vmatpush.msra.mxu0 0.0
  %196 = vmatpush.msra.mxu0 0.0
  %197 = vmatpush.msra.mxu0 0.0
  %198 = vmatpush.msra.mxu0 0.0
  %199 = vmatpush.msra.mxu0 0.0
  %200 = vmatpush.msra.mxu0 0.0
  %201 = vmatpush.msra.mxu0 %v65
  %202 = vmatpush.msra.mxu0 %v57
  %203 = vmatpush.msra.mxu0 %v49
  %204 = vmatpush.msra.mxu0 %v41
  %205 = vmatpush.msra.mxu0 %v33
  %206 = vmatmul.f32.gmra.mxu0 %v88
  %v207 = vpop.f32.mrf.mxu0
  %v208 = vadd.f32 %v75, %v207
  %209 = vdwg.mxu0
  %210 = vmatpush.msra.mxu0 0.0
  %211 = vmatpush.msra.mxu0 0.0
  %212 = vmatpush.msra.mxu0 0.0
  %213 = vmatpush.msra.mxu0 0.0
  %214 = vmatpush.msra.mxu0 0.0
  %215 = vmatpush.msra.mxu0 0.0
  %216 = vmatpush.msra.mxu0 0.0
  %217 = vmatpush.msra.mxu0 0.0
  %218 = vmatpush.msra.mxu0 0.0
  %219 = vmatpush.msra.mxu0 0.0
  %220 = vmatpush.msra.mxu0 0.0
  %221 = vmatpush.msra.mxu0 %v66
  %222 = vmatpush.msra.mxu0 %v58
  %223 = vmatpush.msra.mxu0 %v50
  %224 = vmatpush.msra.mxu0 %v42
  %225 = vmatpush.msra.mxu0 %v34
  %226 = vmatmul.f32.gmra.mxu0 %v88
  %v227 = vpop.f32.mrf.mxu0
  %v228 = vadd.f32 %v76, %v227
  %229 = vdwg.mxu0
  %230 = vmatpush.msra.mxu0 0.0
  %231 = vmatpush.msra.mxu0 0.0
  %232 = vmatpush.msra.mxu0 0.0
  %233 = vmatpush.msra.mxu0 0.0
  %234 = vmatpush.msra.mxu0 0.0
  %235 = vmatpush.msra.mxu0 0.0
  %236 = vmatpush.msra.mxu0 0.0
  %237 = vmatpush.msra.mxu0 0.0
  %238 = vmatpush.msra.mxu0 0.0
  %239 = vmatpush.msra.mxu0 0.0
  %240 = vmatpush.msra.mxu0 0.0
  %241 = vmatpush.msra.mxu0 %v67
  %242 = vmatpush.msra.mxu0 %v59
  %243 = vmatpush.msra.mxu0 %v51
  %244 = vmatpush.msra.mxu0 %v43
  %245 = vmatpush.msra.mxu0 %v35
  %246 = vmatmul.f32.gmra.mxu0 %v88
  %v247 = vpop.f32.mrf.mxu0
  %v248 = vadd.f32 %v77, %v247
  %249 = vdwg.mxu0
  %v250 = vxor.u32 %v108, 2147483648
  %v251 = vxor.u32 %v128, 2147483648
  %v252 = vxor.u32 %v148, 2147483648
  %v253 = vxor.u32 %v168, 2147483648
  %v254 = vxor.u32 %v188, 2147483648
  %v255 = vxor.u32 %v208, 2147483648
  %v256 = vxor.u32 %v228, 2147483648
  %v257 = vxor.u32 %v248, 2147483648
  %v258 = vmul.f32 %v250, 1.442695
  %v259 = vpow.pop %v258
  %v260 = vmul.f32 %v251, 1.442695
  %v261 = vpow.pop %v260
  %v262 = vmul.f32 %v252, 1.442695
  %v263 = vpow.pop %v262
  %v264 = vmul.f32 %v253, 1.442695
  %v265 = vpow.pop %v264
  %v266 = vmul.f32 %v254, 1.442695
  %v267 = vpow.pop %v266
  %v268 = vmul.f32 %v255, 1.442695
  %v269 = vpow.pop %v268
  %v270 = vmul.f32 %v256, 1.442695
  %v271 = vpow.pop %v270
  %v272 = vmul.f32 %v257, 1.442695
  %v273 = vpow.pop %v272
  %v274 = vadd.f32 %v259, 1.0
  %v275 = vadd.f32 %v261, 1.0
  %v276 = vadd.f32 %v263, 1.0
  %v277 = vadd.f32 %v265, 1.0
  %v278 = vadd.f32 %v267, 1.0
  %v279 = vadd.f32 %v269, 1.0
  %v280 = vadd.f32 %v271, 1.0
  %v281 = vadd.f32 %v273, 1.0
  %v282 = vrcp.pop %v274
  %v283 = vmul.f32 %v274, %v282
  %v284 = vsub.f32 1.0, %v283
  %v285 = vmul.f32 %v282, %v284
  %v286 = vadd.f32 %v282, %v285
  %vm287 = vweird.f32 %v274
  %vm288 = vweird.f32 %v282
  %vm289 = vmor %vm287, %vm288
  %v290 = vsel %vm289, %v282, %v286
  %v291 = vand.u32 2147483647, %v274
  %vm292 = vcmp.eq.f32.partialorder %v291, 8.507059e+37
  %v293 = vand.u32 %v274, 2147483648
  %v294 = vor.u32 1.1754944e-38, %v293
  %v295 = vsel %vm292, %v294, %v290
  %v296 = vmul.f32 1.0, %v295
  %v297 = vrcp.pop %v275
  %v298 = vmul.f32 %v275, %v297
  %v299 = vsub.f32 1.0, %v298
  %v300 = vmul.f32 %v297, %v299
  %v301 = vadd.f32 %v297, %v300
  %vm302 = vweird.f32 %v275
  %vm303 = vweird.f32 %v297
  %vm304 = vmor %vm302, %vm303
  %v305 = vsel %vm304, %v297, %v301
  %v306 = vand.u32 2147483647, %v275
  %vm307 = vcmp.eq.f32.partialorder %v306, 8.507059e+37
  %v308 = vand.u32 %v275, 2147483648
  %v309 = vor.u32 1.1754944e-38, %v308
  %v310 = vsel %vm307, %v309, %v305
  %v311 = vmul.f32 1.0, %v310
  %v312 = vrcp.pop %v276
  %v313 = vmul.f32 %v276, %v312
  %v314 = vsub.f32 1.0, %v313
  %v315 = vmul.f32 %v312, %v314
  %v316 = vadd.f32 %v312, %v315
  %vm317 = vweird.f32 %v276
  %vm318 = vweird.f32 %v312
  %vm319 = vmor %vm317, %vm318
  %v320 = vsel %vm319, %v312, %v316
  %v321 = vand.u32 2147483647, %v276
  %vm322 = vcmp.eq.f32.partialorder %v321, 8.507059e+37
  %v323 = vand.u32 %v276, 2147483648
  %v324 = vor.u32 1.1754944e-38, %v323
  %v325 = vsel %vm322, %v324, %v320
  %v326 = vmul.f32 1.0, %v325
  %v327 = vrcp.pop %v277
  %v328 = vmul.f32 %v277, %v327
  %v329 = vsub.f32 1.0, %v328
  %v330 = vmul.f32 %v327, %v329
  %v331 = vadd.f32 %v327, %v330
  %vm332 = vweird.f32 %v277
  %vm333 = vweird.f32 %v327
  %vm334 = vmor %vm332, %vm333
  %v335 = vsel %vm334, %v327, %v331
  %v336 = vand.u32 2147483647, %v277
  %vm337 = vcmp.eq.f32.partialorder %v336, 8.507059e+37
  %v338 = vand.u32 %v277, 2147483648
  %v339 = vor.u32 1.1754944e-38, %v338
  %v340 = vsel %vm337, %v339, %v335
  %v341 = vmul.f32 1.0, %v340
  %v342 = vrcp.pop %v278
  %v343 = vmul.f32 %v278, %v342
  %v344 = vsub.f32 1.0, %v343
  %v345 = vmul.f32 %v342, %v344
  %v346 = vadd.f32 %v342, %v345
  %vm347 = vweird.f32 %v278
  %vm348 = vweird.f32 %v342
  %vm349 = vmor %vm347, %vm348
  %v350 = vsel %vm349, %v342, %v346
  %v351 = vand.u32 2147483647, %v278
  %vm352 = vcmp.eq.f32.partialorder %v351, 8.507059e+37
  %v353 = vand.u32 %v278, 2147483648
  %v354 = vor.u32 1.1754944e-38, %v353
  %v355 = vsel %vm352, %v354, %v350
  %v356 = vmul.f32 1.0, %v355
  %v357 = vrcp.pop %v279
  %v358 = vmul.f32 %v279, %v357
  %v359 = vsub.f32 1.0, %v358
  %v360 = vmul.f32 %v357, %v359
  %v361 = vadd.f32 %v357, %v360
  %vm362 = vweird.f32 %v279
  %vm363 = vweird.f32 %v357
  %vm364 = vmor %vm362, %vm363
  %v365 = vsel %vm364, %v357, %v361
  %v366 = vand.u32 2147483647, %v279
  %vm367 = vcmp.eq.f32.partialorder %v366, 8.507059e+37
  %v368 = vand.u32 %v279, 2147483648
  %v369 = vor.u32 1.1754944e-38, %v368
  %v370 = vsel %vm367, %v369, %v365
  %v371 = vmul.f32 1.0, %v370
  %v372 = vrcp.pop %v280
  %v373 = vmul.f32 %v280, %v372
  %v374 = vsub.f32 1.0, %v373
  %v375 = vmul.f32 %v372, %v374
  %v376 = vadd.f32 %v372, %v375
  %vm377 = vweird.f32 %v280
  %vm378 = vweird.f32 %v372
  %vm379 = vmor %vm377, %vm378
  %v380 = vsel %vm379, %v372, %v376
  %v381 = vand.u32 2147483647, %v280
  %vm382 = vcmp.eq.f32.partialorder %v381, 8.507059e+37
  %v383 = vand.u32 %v280, 2147483648
  %v384 = vor.u32 1.1754944e-38, %v383
  %v385 = vsel %vm382, %v384, %v380
  %v386 = vmul.f32 1.0, %v385
  %v387 = vrcp.pop %v281
  %v388 = vmul.f32 %v281, %v387
  %v389 = vsub.f32 1.0, %v388
  %v390 = vmul.f32 %v387, %v389
  %v391 = vadd.f32 %v387, %v390
  %vm392 = vweird.f32 %v281
  %vm393 = vweird.f32 %v387
  %vm394 = vmor %vm392, %vm393
  %v395 = vsel %vm394, %v387, %v391
  %v396 = vand.u32 2147483647, %v281
  %vm397 = vcmp.eq.f32.partialorder %v396, 8.507059e+37
  %v398 = vand.u32 %v281, 2147483648
  %v399 = vor.u32 1.1754944e-38, %v398
  %v400 = vsel %vm397, %v399, %v395
  %v401 = vmul.f32 1.0, %v400
  %v402 = vld [vmem:[%s4] sm:$0xff]
  %v403 = vld [vmem:[%s4 + $0x8] sm:$0xff]
  %v404 = vld [vmem:[%s4 + $0x10] sm:$0xff]
  %v405 = vld [vmem:[%s4 + $0x18] sm:$0xff]
  %v406 = vld [vmem:[%s4 + $0x20] sm:$0xff]
  %v407 = vld [vmem:[%s4 + $0x28] sm:$0xff]
  %v408 = vld [vmem:[%s4 + $0x30] sm:$0xff]
  %v409 = vld [vmem:[%s4 + $0x38] sm:$0xff]
  %v410 = vld [vmem:[%s4 + $0x40] sm:$0xff]
  %v411 = vld [vmem:[%s4 + $0x48] sm:$0xff]
  %v412 = vld [vmem:[%s4 + $0x50] sm:$0xff]
  %v413 = vld [vmem:[%s4 + $0x58] sm:$0xff]
  %v414 = vld [vmem:[%s4 + $0x60] sm:$0xff]
  %v415 = vld [vmem:[%s4 + $0x68] sm:$0xff]
  %v416 = vld [vmem:[%s4 + $0x70] sm:$0xff]
  %v417 = vld [vmem:[%s4 + $0x78] sm:$0xff]
  %v418 = vld [vmem:[%s4 + $0x80] sm:$0xff]
  %v419 = vld [vmem:[%s4 + $0x88] sm:$0xff]
  %v420 = vld [vmem:[%s4 + $0x90] sm:$0xff]
  %v421 = vld [vmem:[%s4 + $0x98] sm:$0xff]
  %v422 = vld [vmem:[%s4 + $0xa0] sm:$0xff]
  %v423 = vld [vmem:[%s4 + $0xa8] sm:$0xff]
  %v424 = vld [vmem:[%s4 + $0xb0] sm:$0xff]
  %v425 = vld [vmem:[%s4 + $0xb8] sm:$0xff]
  %v426 = vld [vmem:[%s4 + $0xc0] sm:$0xff]
  %v427 = vld [vmem:[%s4 + $0xc8] sm:$0xff]
  %v428 = vld [vmem:[%s4 + $0xd0] sm:$0xff]
  %v429 = vld [vmem:[%s4 + $0xd8] sm:$0xff]
  %v430 = vld [vmem:[%s4 + $0xe0] sm:$0xff]
  %v431 = vld [vmem:[%s4 + $0xe8] sm:$0xff]
  %v432 = vld [vmem:[%s4 + $0xf0] sm:$0xff]
  %v433 = vld [vmem:[%s4 + $0xf8] sm:$0xff]
  %v434 = vld [vmem:[%s4 + $0x100] sm:$0xff]
  %v435 = vld [vmem:[%s4 + $0x108] sm:$0xff]
  %v436 = vld [vmem:[%s4 + $0x110] sm:$0xff]
  %v437 = vld [vmem:[%s4 + $0x118] sm:$0xff]
  %v438 = vld [vmem:[%s4 + $0x120] sm:$0xff]
  %v439 = vld [vmem:[%s4 + $0x128] sm:$0xff]
  %v440 = vld [vmem:[%s4 + $0x130] sm:$0xff]
  %v441 = vld [vmem:[%s4 + $0x138] sm:$0xff]
  %v442 = vld [vmem:[%s4 + $0x140] sm:$0xff]
  %v443 = vld [vmem:[%s4 + $0x148] sm:$0xff]
  %v444 = vld [vmem:[%s4 + $0x150] sm:$0xff]
  %v445 = vld [vmem:[%s4 + $0x158] sm:$0xff]
  %v446 = vld [vmem:[%s4 + $0x160] sm:$0xff]
  %v447 = vld [vmem:[%s4 + $0x168] sm:$0xff]
  %v448 = vld [vmem:[%s4 + $0x170] sm:$0xff]
  %v449 = vld [vmem:[%s4 + $0x178] sm:$0xff]
  %v450 = vld [vmem:[%s4 + $0x180] sm:$0xff]
  %v451 = vld [vmem:[%s4 + $0x188] sm:$0xff]
  %v452 = vld [vmem:[%s4 + $0x190] sm:$0xff]
  %v453 = vld [vmem:[%s4 + $0x198] sm:$0xff]
  %v454 = vld [vmem:[%s4 + $0x1a0] sm:$0xff]
  %v455 = vld [vmem:[%s4 + $0x1a8] sm:$0xff]
  %v456 = vld [vmem:[%s4 + $0x1b0] sm:$0xff]
  %v457 = vld [vmem:[%s4 + $0x1b8] sm:$0xff]
  %v458 = vld [vmem:[%s4 + $0x1c0] sm:$0xff]
  %v459 = vld [vmem:[%s4 + $0x1c8] sm:$0xff]
  %v460 = vld [vmem:[%s4 + $0x1d0] sm:$0xff]
  %v461 = vld [vmem:[%s4 + $0x1d8] sm:$0xff]
  %v462 = vld [vmem:[%s4 + $0x1e0] sm:$0xff]
  %v463 = vld [vmem:[%s4 + $0x1e8] sm:$0xff]
  %v464 = vld [vmem:[%s4 + $0x1f0] sm:$0xff]
  %v465 = vld [vmem:[%s4 + $0x1f8] sm:$0xff]
  %v466 = vld [vmem:[%s4 + $0x200] sm:$0xff]
  %v467 = vld [vmem:[%s4 + $0x208] sm:$0xff]
  %v468 = vld [vmem:[%s4 + $0x210] sm:$0xff]
  %v469 = vld [vmem:[%s4 + $0x218] sm:$0xff]
  %v470 = vld [vmem:[%s4 + $0x220] sm:$0xff]
  %v471 = vld [vmem:[%s4 + $0x228] sm:$0xff]
  %v472 = vld [vmem:[%s4 + $0x230] sm:$0xff]
  %v473 = vld [vmem:[%s4 + $0x238] sm:$0xff]
  %v474 = vld [vmem:[%s4 + $0x240] sm:$0xff]
  %v475 = vld [vmem:[%s4 + $0x248] sm:$0xff]
  %v476 = vld [vmem:[%s4 + $0x250] sm:$0xff]
  %v477 = vld [vmem:[%s4 + $0x258] sm:$0xff]
  %v478 = vld [vmem:[%s4 + $0x260] sm:$0xff]
  %v479 = vld [vmem:[%s4 + $0x268] sm:$0xff]
  %v480 = vld [vmem:[%s4 + $0x270] sm:$0xff]
  %v481 = vld [vmem:[%s4 + $0x278] sm:$0xff]
  %v482 = vunpack.c.l.bf16 %v402
  %v483 = vunpack.c.h.bf16 %v402
  %v484 = vunpack.c.l.bf16 %v403
  %v485 = vunpack.c.h.bf16 %v403
  %v486 = vunpack.c.l.bf16 %v404
  %v487 = vunpack.c.h.bf16 %v404
  %v488 = vunpack.c.l.bf16 %v405
  %v489 = vunpack.c.h.bf16 %v405
  %v490 = vunpack.c.l.bf16 %v406
  %v491 = vunpack.c.h.bf16 %v406
  %v492 = vunpack.c.l.bf16 %v407
  %v493 = vunpack.c.h.bf16 %v407
  %v494 = vunpack.c.l.bf16 %v408
  %v495 = vunpack.c.h.bf16 %v408
  %v496 = vunpack.c.l.bf16 %v409
  %v497 = vunpack.c.h.bf16 %v409
  %v498 = vunpack.c.l.bf16 %v410
  %v499 = vunpack.c.h.bf16 %v410
  %v500 = vunpack.c.l.bf16 %v411
  %v501 = vunpack.c.h.bf16 %v411
  %v502 = vunpack.c.l.bf16 %v412
  %v503 = vunpack.c.h.bf16 %v412
  %v504 = vunpack.c.l.bf16 %v413
  %v505 = vunpack.c.h.bf16 %v413
  %v506 = vunpack.c.l.bf16 %v414
  %v507 = vunpack.c.h.bf16 %v414
  %v508 = vunpack.c.l.bf16 %v415
  %v509 = vunpack.c.h.bf16 %v415
  %v510 = vunpack.c.l.bf16 %v416
  %v511 = vunpack.c.h.bf16 %v416
  %v512 = vunpack.c.l.bf16 %v417
  %v513 = vunpack.c.h.bf16 %v417
  %v514 = vunpack.c.l.bf16 %v418
  %v515 = vunpack.c.h.bf16 %v418
  %v516 = vunpack.c.l.bf16 %v419
  %v517 = vunpack.c.h.bf16 %v419
  %v518 = vunpack.c.l.bf16 %v420
  %v519 = vunpack.c.h.bf16 %v420
  %v520 = vunpack.c.l.bf16 %v421
  %v521 = vunpack.c.h.bf16 %v421
  %v522 = vunpack.c.l.bf16 %v422
  %v523 = vunpack.c.h.bf16 %v422
  %v524 = vunpack.c.l.bf16 %v423
  %v525 = vunpack.c.h.bf16 %v423
  %v526 = vunpack.c.l.bf16 %v424
  %v527 = vunpack.c.h.bf16 %v424
  %v528 = vunpack.c.l.bf16 %v425
  %v529 = vunpack.c.h.bf16 %v425
  %v530 = vunpack.c.l.bf16 %v426
  %v531 = vunpack.c.h.bf16 %v426
  %v532 = vunpack.c.l.bf16 %v427
  %v533 = vunpack.c.h.bf16 %v427
  %v534 = vunpack.c.l.bf16 %v428
  %v535 = vunpack.c.h.bf16 %v428
  %v536 = vunpack.c.l.bf16 %v429
  %v537 = vunpack.c.h.bf16 %v429
  %v538 = vunpack.c.l.bf16 %v430
  %v539 = vunpack.c.h.bf16 %v430
  %v540 = vunpack.c.l.bf16 %v431
  %v541 = vunpack.c.h.bf16 %v431
  %v542 = vunpack.c.l.bf16 %v432
  %v543 = vunpack.c.h.bf16 %v432
  %v544 = vunpack.c.l.bf16 %v433
  %v545 = vunpack.c.h.bf16 %v433
  %v546 = vunpack.c.l.bf16 %v434
  %v547 = vunpack.c.h.bf16 %v434
  %v548 = vunpack.c.l.bf16 %v435
  %v549 = vunpack.c.h.bf16 %v435
  %v550 = vunpack.c.l.bf16 %v436
  %v551 = vunpack.c.h.bf16 %v436
  %v552 = vunpack.c.l.bf16 %v437
  %v553 = vunpack.c.h.bf16 %v437
  %v554 = vunpack.c.l.bf16 %v438
  %v555 = vunpack.c.h.bf16 %v438
  %v556 = vunpack.c.l.bf16 %v439
  %v557 = vunpack.c.h.bf16 %v439
  %v558 = vunpack.c.l.bf16 %v440
  %v559 = vunpack.c.h.bf16 %v440
  %v560 = vunpack.c.l.bf16 %v441
  %v561 = vunpack.c.h.bf16 %v441
  %v562 = vunpack.c.l.bf16 %v442
  %v563 = vunpack.c.h.bf16 %v442
  %v564 = vunpack.c.l.bf16 %v443
  %v565 = vunpack.c.h.bf16 %v443
  %v566 = vunpack.c.l.bf16 %v444
  %v567 = vunpack.c.h.bf16 %v444
  %v568 = vunpack.c.l.bf16 %v445
  %v569 = vunpack.c.h.bf16 %v445
  %v570 = vunpack.c.l.bf16 %v446
  %v571 = vunpack.c.h.bf16 %v446
  %v572 = vunpack.c.l.bf16 %v447
  %v573 = vunpack.c.h.bf16 %v447
  %v574 = vunpack.c.l.bf16 %v448
  %v575 = vunpack.c.h.bf16 %v448
  %v576 = vunpack.c.l.bf16 %v449
  %v577 = vunpack.c.h.bf16 %v449
  %v578 = vunpack.c.l.bf16 %v450
  %v579 = vunpack.c.h.bf16 %v450
  %v580 = vunpack.c.l.bf16 %v451
  %v581 = vunpack.c.h.bf16 %v451
  %v582 = vunpack.c.l.bf16 %v452
  %v583 = vunpack.c.h.bf16 %v452
  %v584 = vunpack.c.l.bf16 %v453
  %v585 = vunpack.c.h.bf16 %v453
  %v586 = vunpack.c.l.bf16 %v454
  %v587 = vunpack.c.h.bf16 %v454
  %v588 = vunpack.c.l.bf16 %v455
  %v589 = vunpack.c.h.bf16 %v455
  %v590 = vunpack.c.l.bf16 %v456
  %v591 = vunpack.c.h.bf16 %v456
  %v592 = vunpack.c.l.bf16 %v457
  %v593 = vunpack.c.h.bf16 %v457
  %v594 = vunpack.c.l.bf16 %v458
  %v595 = vunpack.c.h.bf16 %v458
  %v596 = vunpack.c.l.bf16 %v459
  %v597 = vunpack.c.h.bf16 %v459
  %v598 = vunpack.c.l.bf16 %v460
  %v599 = vunpack.c.h.bf16 %v460
  %v600 = vunpack.c.l.bf16 %v461
  %v601 = vunpack.c.h.bf16 %v461
  %v602 = vunpack.c.l.bf16 %v462
  %v603 = vunpack.c.h.bf16 %v462
  %v604 = vunpack.c.l.bf16 %v463
  %v605 = vunpack.c.h.bf16 %v463
  %v606 = vunpack.c.l.bf16 %v464
  %v607 = vunpack.c.h.bf16 %v464
  %v608 = vunpack.c.l.bf16 %v465
  %v609 = vunpack.c.h.bf16 %v465
  %v610 = vunpack.c.l.bf16 %v466
  %v611 = vunpack.c.h.bf16 %v466
  %v612 = vunpack.c.l.bf16 %v467
  %v613 = vunpack.c.h.bf16 %v467
  %v614 = vunpack.c.l.bf16 %v468
  %v615 = vunpack.c.h.bf16 %v468
  %v616 = vunpack.c.l.bf16 %v469
  %v617 = vunpack.c.h.bf16 %v469
  %v618 = vunpack.c.l.bf16 %v470
  %v619 = vunpack.c.h.bf16 %v470
  %v620 = vunpack.c.l.bf16 %v471
  %v621 = vunpack.c.h.bf16 %v471
  %v622 = vunpack.c.l.bf16 %v472
  %v623 = vunpack.c.h.bf16 %v472
  %v624 = vunpack.c.l.bf16 %v473
  %v625 = vunpack.c.h.bf16 %v473
  %v626 = vunpack.c.l.bf16 %v474
  %v627 = vunpack.c.h.bf16 %v474
  %v628 = vunpack.c.l.bf16 %v475
  %v629 = vunpack.c.h.bf16 %v475
  %v630 = vunpack.c.l.bf16 %v476
  %v631 = vunpack.c.h.bf16 %v476
  %v632 = vunpack.c.l.bf16 %v477
  %v633 = vunpack.c.h.bf16 %v477
  %v634 = vunpack.c.l.bf16 %v478
  %v635 = vunpack.c.h.bf16 %v478
  %v636 = vunpack.c.l.bf16 %v479
  %v637 = vunpack.c.h.bf16 %v479
  %v638 = vunpack.c.l.bf16 %v480
  %v639 = vunpack.c.h.bf16 %v480
  %v640 = vunpack.c.l.bf16 %v481
  %v641 = vunpack.c.h.bf16 %v481
  %v642 = vperm.slane %v296, 0
  %v643 = vperm.slane %v311, 0
  %v644 = vperm.slane %v326, 0
  %v645 = vperm.slane %v341, 0
  %v646 = vperm.slane %v356, 0
  %v647 = vperm.slane %v371, 0
  %v648 = vperm.slane %v386, 0
  %v649 = vperm.slane %v401, 0
  %v650 = vmul.f32 %v482, %v642
  %v651 = vmul.f32 %v483, %v643
  %v652 = vmul.f32 %v484, %v644
  %v653 = vmul.f32 %v485, %v645
  %v654 = vmul.f32 %v486, %v646
  %v655 = vmul.f32 %v487, %v647
  %v656 = vmul.f32 %v488, %v648
  %v657 = vmul.f32 %v489, %v649
  %v658 = vmul.f32 %v490, %v642
  %v659 = vmul.f32 %v491, %v643
  %v660 = vmul.f32 %v492, %v644
  %v661 = vmul.f32 %v493, %v645
  %v662 = vmul.f32 %v494, %v646
  %v663 = vmul.f32 %v495, %v647
  %v664 = vmul.f32 %v496, %v648
  %v665 = vmul.f32 %v497, %v649
  %v666 = vmul.f32 %v498, %v642
  %v667 = vmul.f32 %v499, %v643
  %v668 = vmul.f32 %v500, %v644
  %v669 = vmul.f32 %v501, %v645
  %v670 = vmul.f32 %v502, %v646
  %v671 = vmul.f32 %v503, %v647
  %v672 = vmul.f32 %v504, %v648
  %v673 = vmul.f32 %v505, %v649
  %v674 = vmul.f32 %v506, %v642
  %v675 = vmul.f32 %v507, %v643
  %v676 = vmul.f32 %v508, %v644
  %v677 = vmul.f32 %v509, %v645
  %v678 = vmul.f32 %v510, %v646
  %v679 = vmul.f32 %v511, %v647
  %v680 = vmul.f32 %v512, %v648
  %v681 = vmul.f32 %v513, %v649
  %v682 = vmul.f32 %v514, %v642
  %v683 = vmul.f32 %v515, %v643
  %v684 = vmul.f32 %v516, %v644
  %v685 = vmul.f32 %v517, %v645
  %v686 = vmul.f32 %v518, %v646
  %v687 = vmul.f32 %v519, %v647
  %v688 = vmul.f32 %v520, %v648
  %v689 = vmul.f32 %v521, %v649
  %v690 = vmul.f32 %v522, %v642
  %v691 = vmul.f32 %v523, %v643
  %v692 = vmul.f32 %v524, %v644
  %v693 = vmul.f32 %v525, %v645
  %v694 = vmul.f32 %v526, %v646
  %v695 = vmul.f32 %v527, %v647
  %v696 = vmul.f32 %v528, %v648
  %v697 = vmul.f32 %v529, %v649
  %v698 = vmul.f32 %v530, %v642
  %v699 = vmul.f32 %v531, %v643
  %v700 = vmul.f32 %v532, %v644
  %v701 = vmul.f32 %v533, %v645
  %v702 = vmul.f32 %v534, %v646
  %v703 = vmul.f32 %v535, %v647
  %v704 = vmul.f32 %v536, %v648
  %v705 = vmul.f32 %v537, %v649
  %v706 = vmul.f32 %v538, %v642
  %v707 = vmul.f32 %v539, %v643
  %v708 = vmul.f32 %v540, %v644
  %v709 = vmul.f32 %v541, %v645
  %v710 = vmul.f32 %v542, %v646
  %v711 = vmul.f32 %v543, %v647
  %v712 = vmul.f32 %v544, %v648
  %v713 = vmul.f32 %v545, %v649
  %v714 = vmul.f32 %v546, %v642
  %v715 = vmul.f32 %v547, %v643
  %v716 = vmul.f32 %v548, %v644
  %v717 = vmul.f32 %v549, %v645
  %v718 = vmul.f32 %v550, %v646
  %v719 = vmul.f32 %v551, %v647
  %v720 = vmul.f32 %v552, %v648
  %v721 = vmul.f32 %v553, %v649
  %v722 = vmul.f32 %v554, %v642
  %v723 = vmul.f32 %v555, %v643
  %v724 = vmul.f32 %v556, %v644
  %v725 = vmul.f32 %v557, %v645
  %v726 = vmul.f32 %v558, %v646
  %v727 = vmul.f32 %v559, %v647
  %v728 = vmul.f32 %v560, %v648
  %v729 = vmul.f32 %v561, %v649
  %v730 = vmul.f32 %v562, %v642
  %v731 = vmul.f32 %v563, %v643
  %v732 = vmul.f32 %v564, %v644
  %v733 = vmul.f32 %v565, %v645
  %v734 = vmul.f32 %v566, %v646
  %v735 = vmul.f32 %v567, %v647
  %v736 = vmul.f32 %v568, %v648
  %v737 = vmul.f32 %v569, %v649
  %v738 = vmul.f32 %v570, %v642
  %v739 = vmul.f32 %v571, %v643
  %v740 = vmul.f32 %v572, %v644
  %v741 = vmul.f32 %v573, %v645
  %v742 = vmul.f32 %v574, %v646
  %v743 = vmul.f32 %v575, %v647
  %v744 = vmul.f32 %v576, %v648
  %v745 = vmul.f32 %v577, %v649
  %v746 = vmul.f32 %v578, %v642
  %v747 = vmul.f32 %v579, %v643
  %v748 = vmul.f32 %v580, %v644
  %v749 = vmul.f32 %v581, %v645
  %v750 = vmul.f32 %v582, %v646
  %v751 = vmul.f32 %v583, %v647
  %v752 = vmul.f32 %v584, %v648
  %v753 = vmul.f32 %v585, %v649
  %v754 = vmul.f32 %v586, %v642
  %v755 = vmul.f32 %v587, %v643
  %v756 = vmul.f32 %v588, %v644
  %v757 = vmul.f32 %v589, %v645
  %v758 = vmul.f32 %v590, %v646
  %v759 = vmul.f32 %v591, %v647
  %v760 = vmul.f32 %v592, %v648
  %v761 = vmul.f32 %v593, %v649
  %v762 = vmul.f32 %v594, %v642
  %v763 = vmul.f32 %v595, %v643
  %v764 = vmul.f32 %v596, %v644
  %v765 = vmul.f32 %v597, %v645
  %v766 = vmul.f32 %v598, %v646
  %v767 = vmul.f32 %v599, %v647
  %v768 = vmul.f32 %v600, %v648
  %v769 = vmul.f32 %v601, %v649
  %v770 = vmul.f32 %v602, %v642
  %v771 = vmul.f32 %v603, %v643
  %v772 = vmul.f32 %v604, %v644
  %v773 = vmul.f32 %v605, %v645
  %v774 = vmul.f32 %v606, %v646
  %v775 = vmul.f32 %v607, %v647
  %v776 = vmul.f32 %v608, %v648
  %v777 = vmul.f32 %v609, %v649
  %v778 = vmul.f32 %v610, %v642
  %v779 = vmul.f32 %v611, %v643
  %v780 = vmul.f32 %v612, %v644
  %v781 = vmul.f32 %v613, %v645
  %v782 = vmul.f32 %v614, %v646
  %v783 = vmul.f32 %v615, %v647
  %v784 = vmul.f32 %v616, %v648
  %v785 = vmul.f32 %v617, %v649
  %v786 = vmul.f32 %v618, %v642
  %v787 = vmul.f32 %v619, %v643
  %v788 = vmul.f32 %v620, %v644
  %v789 = vmul.f32 %v621, %v645
  %v790 = vmul.f32 %v622, %v646
  %v791 = vmul.f32 %v623, %v647
  %v792 = vmul.f32 %v624, %v648
  %v793 = vmul.f32 %v625, %v649
  %v794 = vmul.f32 %v626, %v642
  %v795 = vmul.f32 %v627, %v643
  %v796 = vmul.f32 %v628, %v644
  %v797 = vmul.f32 %v629, %v645
  %v798 = vmul.f32 %v630, %v646
  %v799 = vmul.f32 %v631, %v647
  %v800 = vmul.f32 %v632, %v648
  %v801 = vmul.f32 %v633, %v649
  %v802 = vmul.f32 %v634, %v642
  %v803 = vmul.f32 %v635, %v643
  %v804 = vmul.f32 %v636, %v644
  %v805 = vmul.f32 %v637, %v645
  %v806 = vmul.f32 %v638, %v646
  %v807 = vmul.f32 %v639, %v647
  %v808 = vmul.f32 %v640, %v648
  %v809 = vmul.f32 %v641, %v649
  %v810 = vpack.c.bf16 %v658, %v650
  %v811 = vpack.c.bf16 %v659, %v651
  %v812 = vpack.c.bf16 %v660, %v652
  %v813 = vpack.c.bf16 %v661, %v653
  %v814 = vpack.c.bf16 %v662, %v654
  %v815 = vpack.c.bf16 %v663, %v655
  %v816 = vpack.c.bf16 %v664, %v656
  %v817 = vpack.c.bf16 %v665, %v657
  %v818 = vpack.c.bf16 %v674, %v666
  %v819 = vpack.c.bf16 %v675, %v667
  %v820 = vpack.c.bf16 %v676, %v668
  %v821 = vpack.c.bf16 %v677, %v669
  %v822 = vpack.c.bf16 %v678, %v670
  %v823 = vpack.c.bf16 %v679, %v671
  %v824 = vpack.c.bf16 %v680, %v672
  %v825 = vpack.c.bf16 %v681, %v673
  %v826 = vpack.c.bf16 %v690, %v682
  %v827 = vpack.c.bf16 %v691, %v683
  %v828 = vpack.c.bf16 %v692, %v684
  %v829 = vpack.c.bf16 %v693, %v685
  %v830 = vpack.c.bf16 %v694, %v686
  %v831 = vpack.c.bf16 %v695, %v687
  %v832 = vpack.c.bf16 %v696, %v688
  %v833 = vpack.c.bf16 %v697, %v689
  %v834 = vpack.c.bf16 %v706, %v698
  %v835 = vpack.c.bf16 %v707, %v699
  %v836 = vpack.c.bf16 %v708, %v700
  %v837 = vpack.c.bf16 %v709, %v701
  %v838 = vpack.c.bf16 %v710, %v702
  %v839 = vpack.c.bf16 %v711, %v703
  %v840 = vpack.c.bf16 %v712, %v704
  %v841 = vpack.c.bf16 %v713, %v705
  %v842 = vpack.c.bf16 %v722, %v714
  %v843 = vpack.c.bf16 %v723, %v715
  %v844 = vpack.c.bf16 %v724, %v716
  %v845 = vpack.c.bf16 %v725, %v717
  %v846 = vpack.c.bf16 %v726, %v718
  %v847 = vpack.c.bf16 %v727, %v719
  %v848 = vpack.c.bf16 %v728, %v720
  %v849 = vpack.c.bf16 %v729, %v721
  %v850 = vpack.c.bf16 %v738, %v730
  %v851 = vpack.c.bf16 %v739, %v731
  %v852 = vpack.c.bf16 %v740, %v732
  %v853 = vpack.c.bf16 %v741, %v733
  %v854 = vpack.c.bf16 %v742, %v734
  %v855 = vpack.c.bf16 %v743, %v735
  %v856 = vpack.c.bf16 %v744, %v736
  %v857 = vpack.c.bf16 %v745, %v737
  %v858 = vpack.c.bf16 %v754, %v746
  %v859 = vpack.c.bf16 %v755, %v747
  %v860 = vpack.c.bf16 %v756, %v748
  %v861 = vpack.c.bf16 %v757, %v749
  %v862 = vpack.c.bf16 %v758, %v750
  %v863 = vpack.c.bf16 %v759, %v751
  %v864 = vpack.c.bf16 %v760, %v752
  %v865 = vpack.c.bf16 %v761, %v753
  %v866 = vpack.c.bf16 %v770, %v762
  %v867 = vpack.c.bf16 %v771, %v763
  %v868 = vpack.c.bf16 %v772, %v764
  %v869 = vpack.c.bf16 %v773, %v765
  %v870 = vpack.c.bf16 %v774, %v766
  %v871 = vpack.c.bf16 %v775, %v767
  %v872 = vpack.c.bf16 %v776, %v768
  %v873 = vpack.c.bf16 %v777, %v769
  %v874 = vpack.c.bf16 %v786, %v778
  %v875 = vpack.c.bf16 %v787, %v779
  %v876 = vpack.c.bf16 %v788, %v780
  %v877 = vpack.c.bf16 %v789, %v781
  %v878 = vpack.c.bf16 %v790, %v782
  %v879 = vpack.c.bf16 %v791, %v783
  %v880 = vpack.c.bf16 %v792, %v784
  %v881 = vpack.c.bf16 %v793, %v785
  %v882 = vpack.c.bf16 %v802, %v794
  %v883 = vpack.c.bf16 %v803, %v795
  %v884 = vpack.c.bf16 %v804, %v796
  %v885 = vpack.c.bf16 %v805, %v797
  %v886 = vpack.c.bf16 %v806, %v798
  %v887 = vpack.c.bf16 %v807, %v799
  %v888 = vpack.c.bf16 %v808, %v800
  %v889 = vpack.c.bf16 %v809, %v801
  %v890 = vld [vmem:[%s3] sm:$0xff]
  %v891 = vld [vmem:[%s3 + $0x8] sm:$0xff]
  %v892 = vld [vmem:[%s3 + $0x10] sm:$0xff]
  %v893 = vld [vmem:[%s3 + $0x18] sm:$0xff]
  %v894 = vld [vmem:[%s3 + $0x20] sm:$0xff]
  %v895 = vld [vmem:[%s3 + $0x28] sm:$0xff]
  %v896 = vld [vmem:[%s3 + $0x30] sm:$0xff]
  %v897 = vld [vmem:[%s3 + $0x38] sm:$0xff]
  %v898 = vld [vmem:[%s3 + $0x40] sm:$0xff]
  %v899 = vld [vmem:[%s3 + $0x48] sm:$0xff]
  %v900 = vld [vmem:[%s3 + $0x50] sm:$0xff]
  %v901 = vld [vmem:[%s3 + $0x58] sm:$0xff]
  %v902 = vld [vmem:[%s3 + $0x60] sm:$0xff]
  %v903 = vld [vmem:[%s3 + $0x68] sm:$0xff]
  %v904 = vld [vmem:[%s3 + $0x70] sm:$0xff]
  %v905 = vld [vmem:[%s3 + $0x78] sm:$0xff]
  %v906 = vld [vmem:[%s3 + $0x80] sm:$0xff]
  %v907 = vld [vmem:[%s3 + $0x88] sm:$0xff]
  %v908 = vld [vmem:[%s3 + $0x90] sm:$0xff]
  %v909 = vld [vmem:[%s3 + $0x98] sm:$0xff]
  %v910 = vld [vmem:[%s3 + $0xa0] sm:$0xff]
  %v911 = vld [vmem:[%s3 + $0xa8] sm:$0xff]
  %v912 = vld [vmem:[%s3 + $0xb0] sm:$0xff]
  %v913 = vld [vmem:[%s3 + $0xb8] sm:$0xff]
  %v914 = vld [vmem:[%s3 + $0xc0] sm:$0xff]
  %v915 = vld [vmem:[%s3 + $0xc8] sm:$0xff]
  %v916 = vld [vmem:[%s3 + $0xd0] sm:$0xff]
  %v917 = vld [vmem:[%s3 + $0xd8] sm:$0xff]
  %v918 = vld [vmem:[%s3 + $0xe0] sm:$0xff]
  %v919 = vld [vmem:[%s3 + $0xe8] sm:$0xff]
  %v920 = vld [vmem:[%s3 + $0xf0] sm:$0xff]
  %v921 = vld [vmem:[%s3 + $0xf8] sm:$0xff]
  %v922 = vld [vmem:[%s3 + $0x100] sm:$0xff]
  %v923 = vld [vmem:[%s3 + $0x108] sm:$0xff]
  %v924 = vld [vmem:[%s3 + $0x110] sm:$0xff]
  %v925 = vld [vmem:[%s3 + $0x118] sm:$0xff]
  %v926 = vld [vmem:[%s3 + $0x120] sm:$0xff]
  %v927 = vld [vmem:[%s3 + $0x128] sm:$0xff]
  %v928 = vld [vmem:[%s3 + $0x130] sm:$0xff]
  %v929 = vld [vmem:[%s3 + $0x138] sm:$0xff]
  %v930 = vld [vmem:[%s3 + $0x140] sm:$0xff]
  %v931 = vld [vmem:[%s3 + $0x148] sm:$0xff]
  %v932 = vld [vmem:[%s3 + $0x150] sm:$0xff]
  %v933 = vld [vmem:[%s3 + $0x158] sm:$0xff]
  %v934 = vld [vmem:[%s3 + $0x160] sm:$0xff]
  %v935 = vld [vmem:[%s3 + $0x168] sm:$0xff]
  %v936 = vld [vmem:[%s3 + $0x170] sm:$0xff]
  %v937 = vld [vmem:[%s3 + $0x178] sm:$0xff]
  %v938 = vld [vmem:[%s3 + $0x180] sm:$0xff]
  %v939 = vld [vmem:[%s3 + $0x188] sm:$0xff]
  %v940 = vld [vmem:[%s3 + $0x190] sm:$0xff]
  %v941 = vld [vmem:[%s3 + $0x198] sm:$0xff]
  %v942 = vld [vmem:[%s3 + $0x1a0] sm:$0xff]
  %v943 = vld [vmem:[%s3 + $0x1a8] sm:$0xff]
  %v944 = vld [vmem:[%s3 + $0x1b0] sm:$0xff]
  %v945 = vld [vmem:[%s3 + $0x1b8] sm:$0xff]
  %v946 = vld [vmem:[%s3 + $0x1c0] sm:$0xff]
  %v947 = vld [vmem:[%s3 + $0x1c8] sm:$0xff]
  %v948 = vld [vmem:[%s3 + $0x1d0] sm:$0xff]
  %v949 = vld [vmem:[%s3 + $0x1d8] sm:$0xff]
  %v950 = vld [vmem:[%s3 + $0x1e0] sm:$0xff]
  %v951 = vld [vmem:[%s3 + $0x1e8] sm:$0xff]
  %v952 = vld [vmem:[%s3 + $0x1f0] sm:$0xff]
  %v953 = vld [vmem:[%s3 + $0x1f8] sm:$0xff]
  %v954 = vld [vmem:[%s3 + $0x200] sm:$0xff]
  %v955 = vld [vmem:[%s3 + $0x208] sm:$0xff]
  %v956 = vld [vmem:[%s3 + $0x210] sm:$0xff]
  %v957 = vld [vmem:[%s3 + $0x218] sm:$0xff]
  %v958 = vld [vmem:[%s3 + $0x220] sm:$0xff]
  %v959 = vld [vmem:[%s3 + $0x228] sm:$0xff]
  %v960 = vld [vmem:[%s3 + $0x230] sm:$0xff]
  %v961 = vld [vmem:[%s3 + $0x238] sm:$0xff]
  %v962 = vld [vmem:[%s3 + $0x240] sm:$0xff]
  %v963 = vld [vmem:[%s3 + $0x248] sm:$0xff]
  %v964 = vld [vmem:[%s3 + $0x250] sm:$0xff]
  %v965 = vld [vmem:[%s3 + $0x258] sm:$0xff]
  %v966 = vld [vmem:[%s3 + $0x260] sm:$0xff]
  %v967 = vld [vmem:[%s3 + $0x268] sm:$0xff]
  %v968 = vld [vmem:[%s3 + $0x270] sm:$0xff]
  %v969 = vld [vmem:[%s3 + $0x278] sm:$0xff]
  %v970 = vld [vmem:[%s3 + $0x280] sm:$0xff]
  %v971 = vld [vmem:[%s3 + $0x288] sm:$0xff]
  %v972 = vld [vmem:[%s3 + $0x290] sm:$0xff]
  %v973 = vld [vmem:[%s3 + $0x298] sm:$0xff]
  %v974 = vld [vmem:[%s3 + $0x2a0] sm:$0xff]
  %v975 = vld [vmem:[%s3 + $0x2a8] sm:$0xff]
  %v976 = vld [vmem:[%s3 + $0x2b0] sm:$0xff]
  %v977 = vld [vmem:[%s3 + $0x2b8] sm:$0xff]
  %v978 = vld [vmem:[%s3 + $0x2c0] sm:$0xff]
  %v979 = vld [vmem:[%s3 + $0x2c8] sm:$0xff]
  %v980 = vld [vmem:[%s3 + $0x2d0] sm:$0xff]
  %v981 = vld [vmem:[%s3 + $0x2d8] sm:$0xff]
  %v982 = vld [vmem:[%s3 + $0x2e0] sm:$0xff]
  %v983 = vld [vmem:[%s3 + $0x2e8] sm:$0xff]
  %v984 = vld [vmem:[%s3 + $0x2f0] sm:$0xff]
  %v985 = vld [vmem:[%s3 + $0x2f8] sm:$0xff]
  %v986 = vld [vmem:[%s3 + $0x300] sm:$0xff]
  %v987 = vld [vmem:[%s3 + $0x308] sm:$0xff]
  %v988 = vld [vmem:[%s3 + $0x310] sm:$0xff]
  %v989 = vld [vmem:[%s3 + $0x318] sm:$0xff]
  %v990 = vld [vmem:[%s3 + $0x320] sm:$0xff]
  %v991 = vld [vmem:[%s3 + $0x328] sm:$0xff]
  %v992 = vld [vmem:[%s3 + $0x330] sm:$0xff]
  %v993 = vld [vmem:[%s3 + $0x338] sm:$0xff]
  %v994 = vld [vmem:[%s3 + $0x340] sm:$0xff]
  %v995 = vld [vmem:[%s3 + $0x348] sm:$0xff]
  %v996 = vld [vmem:[%s3 + $0x350] sm:$0xff]
  %v997 = vld [vmem:[%s3 + $0x358] sm:$0xff]
  %v998 = vld [vmem:[%s3 + $0x360] sm:$0xff]
  %v999 = vld [vmem:[%s3 + $0x368] sm:$0xff]
  %v1000 = vld [vmem:[%s3 + $0x370] sm:$0xff]
  %v1001 = vld [vmem:[%s3 + $0x378] sm:$0xff]
  %v1002 = vld [vmem:[%s3 + $0x380] sm:$0xff]
  %v1003 = vld [vmem:[%s3 + $0x388] sm:$0xff]
  %v1004 = vld [vmem:[%s3 + $0x390] sm:$0xff]
  %v1005 = vld [vmem:[%s3 + $0x398] sm:$0xff]
  %v1006 = vld [vmem:[%s3 + $0x3a0] sm:$0xff]
  %v1007 = vld [vmem:[%s3 + $0x3a8] sm:$0xff]
  %v1008 = vld [vmem:[%s3 + $0x3b0] sm:$0xff]
  %v1009 = vld [vmem:[%s3 + $0x3b8] sm:$0xff]
  %v1010 = vld [vmem:[%s3 + $0x3c0] sm:$0xff]
  %v1011 = vld [vmem:[%s3 + $0x3c8] sm:$0xff]
  %v1012 = vld [vmem:[%s3 + $0x3d0] sm:$0xff]
  %v1013 = vld [vmem:[%s3 + $0x3d8] sm:$0xff]
  %v1014 = vld [vmem:[%s3 + $0x3e0] sm:$0xff]
  %v1015 = vld [vmem:[%s3 + $0x3e8] sm:$0xff]
  %v1016 = vld [vmem:[%s3 + $0x3f0] sm:$0xff]
  %v1017 = vld [vmem:[%s3 + $0x3f8] sm:$0xff]
  %v1018 = vld [vmem:[%s3 + $0x400] sm:$0xff]
  %v1019 = vld [vmem:[%s3 + $0x408] sm:$0xff]
  %v1020 = vld [vmem:[%s3 + $0x410] sm:$0xff]
  %v1021 = vld [vmem:[%s3 + $0x418] sm:$0xff]
  %v1022 = vld [vmem:[%s3 + $0x420] sm:$0xff]
  %v1023 = vld [vmem:[%s3 + $0x428] sm:$0xff]
  %v1024 = vld [vmem:[%s3 + $0x430] sm:$0xff]
  %v1025 = vld [vmem:[%s3 + $0x438] sm:$0xff]
  %v1026 = vld [vmem:[%s3 + $0x440] sm:$0xff]
  %v1027 = vld [vmem:[%s3 + $0x448] sm:$0xff]
  %v1028 = vld [vmem:[%s3 + $0x450] sm:$0xff]
  %v1029 = vld [vmem:[%s3 + $0x458] sm:$0xff]
  %v1030 = vld [vmem:[%s3 + $0x460] sm:$0xff]
  %v1031 = vld [vmem:[%s3 + $0x468] sm:$0xff]
  %v1032 = vld [vmem:[%s3 + $0x470] sm:$0xff]
  %v1033 = vld [vmem:[%s3 + $0x478] sm:$0xff]
  %v1034 = vld [vmem:[%s3 + $0x480] sm:$0xff]
  %v1035 = vld [vmem:[%s3 + $0x488] sm:$0xff]
  %v1036 = vld [vmem:[%s3 + $0x490] sm:$0xff]
  %v1037 = vld [vmem:[%s3 + $0x498] sm:$0xff]
  %v1038 = vld [vmem:[%s3 + $0x4a0] sm:$0xff]
  %v1039 = vld [vmem:[%s3 + $0x4a8] sm:$0xff]
  %v1040 = vld [vmem:[%s3 + $0x4b0] sm:$0xff]
  %v1041 = vld [vmem:[%s3 + $0x4b8] sm:$0xff]
  %v1042 = vld [vmem:[%s3 + $0x4c0] sm:$0xff]
  %v1043 = vld [vmem:[%s3 + $0x4c8] sm:$0xff]
  %v1044 = vld [vmem:[%s3 + $0x4d0] sm:$0xff]
  %v1045 = vld [vmem:[%s3 + $0x4d8] sm:$0xff]
  %v1046 = vld [vmem:[%s3 + $0x4e0] sm:$0xff]
  %v1047 = vld [vmem:[%s3 + $0x4e8] sm:$0xff]
  %v1048 = vld [vmem:[%s3 + $0x4f0] sm:$0xff]
  %v1049 = vld [vmem:[%s3 + $0x4f8] sm:$0xff]
  %v1050 = vld [vmem:[%s3 + $0x500] sm:$0xff]
  %v1051 = vld [vmem:[%s3 + $0x508] sm:$0xff]
  %v1052 = vld [vmem:[%s3 + $0x510] sm:$0xff]
  %v1053 = vld [vmem:[%s3 + $0x518] sm:$0xff]
  %v1054 = vld [vmem:[%s3 + $0x520] sm:$0xff]
  %v1055 = vld [vmem:[%s3 + $0x528] sm:$0xff]
  %v1056 = vld [vmem:[%s3 + $0x530] sm:$0xff]
  %v1057 = vld [vmem:[%s3 + $0x538] sm:$0xff]
  %v1058 = vld [vmem:[%s3 + $0x540] sm:$0xff]
  %v1059 = vld [vmem:[%s3 + $0x548] sm:$0xff]
  %v1060 = vld [vmem:[%s3 + $0x550] sm:$0xff]
  %v1061 = vld [vmem:[%s3 + $0x558] sm:$0xff]
  %v1062 = vld [vmem:[%s3 + $0x560] sm:$0xff]
  %v1063 = vld [vmem:[%s3 + $0x568] sm:$0xff]
  %v1064 = vld [vmem:[%s3 + $0x570] sm:$0xff]
  %v1065 = vld [vmem:[%s3 + $0x578] sm:$0xff]
  %v1066 = vld [vmem:[%s3 + $0x580] sm:$0xff]
  %v1067 = vld [vmem:[%s3 + $0x588] sm:$0xff]
  %v1068 = vld [vmem:[%s3 + $0x590] sm:$0xff]
  %v1069 = vld [vmem:[%s3 + $0x598] sm:$0xff]
  %v1070 = vld [vmem:[%s3 + $0x5a0] sm:$0xff]
  %v1071 = vld [vmem:[%s3 + $0x5a8] sm:$0xff]
  %v1072 = vld [vmem:[%s3 + $0x5b0] sm:$0xff]
  %v1073 = vld [vmem:[%s3 + $0x5b8] sm:$0xff]
  %v1074 = vld [vmem:[%s3 + $0x5c0] sm:$0xff]
  %v1075 = vld [vmem:[%s3 + $0x5c8] sm:$0xff]
  %v1076 = vld [vmem:[%s3 + $0x5d0] sm:$0xff]
  %v1077 = vld [vmem:[%s3 + $0x5d8] sm:$0xff]
  %v1078 = vld [vmem:[%s3 + $0x5e0] sm:$0xff]
  %v1079 = vld [vmem:[%s3 + $0x5e8] sm:$0xff]
  %v1080 = vld [vmem:[%s3 + $0x5f0] sm:$0xff]
  %v1081 = vld [vmem:[%s3 + $0x5f8] sm:$0xff]
  %v1082 = vld [vmem:[%s3 + $0x600] sm:$0xff]
  %v1083 = vld [vmem:[%s3 + $0x608] sm:$0xff]
  %v1084 = vld [vmem:[%s3 + $0x610] sm:$0xff]
  %v1085 = vld [vmem:[%s3 + $0x618] sm:$0xff]
  %v1086 = vld [vmem:[%s3 + $0x620] sm:$0xff]
  %v1087 = vld [vmem:[%s3 + $0x628] sm:$0xff]
  %v1088 = vld [vmem:[%s3 + $0x630] sm:$0xff]
  %v1089 = vld [vmem:[%s3 + $0x638] sm:$0xff]
  %v1090 = vld [vmem:[%s3 + $0x640] sm:$0xff]
  %v1091 = vld [vmem:[%s3 + $0x648] sm:$0xff]
  %v1092 = vld [vmem:[%s3 + $0x650] sm:$0xff]
  %v1093 = vld [vmem:[%s3 + $0x658] sm:$0xff]
  %v1094 = vld [vmem:[%s3 + $0x660] sm:$0xff]
  %v1095 = vld [vmem:[%s3 + $0x668] sm:$0xff]
  %v1096 = vld [vmem:[%s3 + $0x670] sm:$0xff]
  %v1097 = vld [vmem:[%s3 + $0x678] sm:$0xff]
  %v1098 = vld [vmem:[%s3 + $0x680] sm:$0xff]
  %v1099 = vld [vmem:[%s3 + $0x688] sm:$0xff]
  %v1100 = vld [vmem:[%s3 + $0x690] sm:$0xff]
  %v1101 = vld [vmem:[%s3 + $0x698] sm:$0xff]
  %v1102 = vld [vmem:[%s3 + $0x6a0] sm:$0xff]
  %v1103 = vld [vmem:[%s3 + $0x6a8] sm:$0xff]
  %v1104 = vld [vmem:[%s3 + $0x6b0] sm:$0xff]
  %v1105 = vld [vmem:[%s3 + $0x6b8] sm:$0xff]
  %v1106 = vld [vmem:[%s3 + $0x6c0] sm:$0xff]
  %v1107 = vld [vmem:[%s3 + $0x6c8] sm:$0xff]
  %v1108 = vld [vmem:[%s3 + $0x6d0] sm:$0xff]
  %v1109 = vld [vmem:[%s3 + $0x6d8] sm:$0xff]
  %v1110 = vld [vmem:[%s3 + $0x6e0] sm:$0xff]
  %v1111 = vld [vmem:[%s3 + $0x6e8] sm:$0xff]
  %v1112 = vld [vmem:[%s3 + $0x6f0] sm:$0xff]
  %v1113 = vld [vmem:[%s3 + $0x6f8] sm:$0xff]
  %v1114 = vld [vmem:[%s3 + $0x700] sm:$0xff]
  %v1115 = vld [vmem:[%s3 + $0x708] sm:$0xff]
  %v1116 = vld [vmem:[%s3 + $0x710] sm:$0xff]
  %v1117 = vld [vmem:[%s3 + $0x718] sm:$0xff]
  %v1118 = vld [vmem:[%s3 + $0x720] sm:$0xff]
  %v1119 = vld [vmem:[%s3 + $0x728] sm:$0xff]
  %v1120 = vld [vmem:[%s3 + $0x730] sm:$0xff]
  %v1121 = vld [vmem:[%s3 + $0x738] sm:$0xff]
  %v1122 = vld [vmem:[%s3 + $0x740] sm:$0xff]
  %v1123 = vld [vmem:[%s3 + $0x748] sm:$0xff]
  %v1124 = vld [vmem:[%s3 + $0x750] sm:$0xff]
  %v1125 = vld [vmem:[%s3 + $0x758] sm:$0xff]
  %v1126 = vld [vmem:[%s3 + $0x760] sm:$0xff]
  %v1127 = vld [vmem:[%s3 + $0x768] sm:$0xff]
  %v1128 = vld [vmem:[%s3 + $0x770] sm:$0xff]
  %v1129 = vld [vmem:[%s3 + $0x778] sm:$0xff]
  %v1130 = vpack.c.bf16 %v892, %v890
  %v1131 = vpack.c.bf16 %v893, %v891
  %v1132 = vpack.c.bf16 %v896, %v894
  %v1133 = vpack.c.bf16 %v897, %v895
  %v1134 = vpack.c.bf16 %v900, %v898
  %v1135 = vpack.c.bf16 %v901, %v899
  %v1136 = vpack.c.bf16 %v904, %v902
  %v1137 = vpack.c.bf16 %v905, %v903
  %v1138 = vpack.c.bf16 %v908, %v906
  %v1139 = vpack.c.bf16 %v909, %v907
  %v1140 = vpack.c.bf16 %v912, %v910
  %v1141 = vpack.c.bf16 %v913, %v911
  %v1142 = vpack.c.bf16 %v916, %v914
  %v1143 = vpack.c.bf16 %v917, %v915
  %v1144 = vpack.c.bf16 %v920, %v918
  %v1145 = vpack.c.bf16 %v921, %v919
  %v1146 = vpack.c.bf16 %v924, %v922
  %v1147 = vpack.c.bf16 %v925, %v923
  %v1148 = vpack.c.bf16 %v928, %v926
  %v1149 = vpack.c.bf16 %v929, %v927
  %v1150 = vpack.c.bf16 %v932, %v930
  %v1151 = vpack.c.bf16 %v933, %v931
  %v1152 = vpack.c.bf16 %v936, %v934
  %v1153 = vpack.c.bf16 %v937, %v935
  %v1154 = vpack.c.bf16 %v940, %v938
  %v1155 = vpack.c.bf16 %v941, %v939
  %v1156 = vpack.c.bf16 %v944, %v942
  %v1157 = vpack.c.bf16 %v945, %v943
  %v1158 = vpack.c.bf16 %v948, %v946
  %v1159 = vpack.c.bf16 %v949, %v947
  %v1160 = vpack.c.bf16 %v952, %v950
  %v1161 = vpack.c.bf16 %v953, %v951
  %v1162 = vpack.c.bf16 %v956, %v954
  %v1163 = vpack.c.bf16 %v957, %v955
  %v1164 = vpack.c.bf16 %v960, %v958
  %v1165 = vpack.c.bf16 %v961, %v959
  %v1166 = vpack.c.bf16 %v964, %v962
  %v1167 = vpack.c.bf16 %v965, %v963
  %v1168 = vpack.c.bf16 %v968, %v966
  %v1169 = vpack.c.bf16 %v969, %v967
  %v1170 = vpack.c.bf16 %v972, %v970
  %v1171 = vpack.c.bf16 %v973, %v971
  %v1172 = vpack.c.bf16 %v976, %v974
  %v1173 = vpack.c.bf16 %v977, %v975
  %v1174 = vpack.c.bf16 %v980, %v978
  %v1175 = vpack.c.bf16 %v981, %v979
  %v1176 = vpack.c.bf16 %v984, %v982
  %v1177 = vpack.c.bf16 %v985, %v983
  %v1178 = vpack.c.bf16 %v988, %v986
  %v1179 = vpack.c.bf16 %v989, %v987
  %v1180 = vpack.c.bf16 %v992, %v990
  %v1181 = vpack.c.bf16 %v993, %v991
  %v1182 = vpack.c.bf16 %v996, %v994
  %v1183 = vpack.c.bf16 %v997, %v995
  %v1184 = vpack.c.bf16 %v1000, %v998
  %v1185 = vpack.c.bf16 %v1001, %v999
  %v1186 = vpack.c.bf16 %v1004, %v1002
  %v1187 = vpack.c.bf16 %v1005, %v1003
  %v1188 = vpack.c.bf16 %v1008, %v1006
  %v1189 = vpack.c.bf16 %v1009, %v1007
  %v1190 = vpack.c.bf16 %v1012, %v1010
  %v1191 = vpack.c.bf16 %v1013, %v1011
  %v1192 = vpack.c.bf16 %v1016, %v1014
  %v1193 = vpack.c.bf16 %v1017, %v1015
  %v1194 = vpack.c.bf16 %v1020, %v1018
  %v1195 = vpack.c.bf16 %v1021, %v1019
  %v1196 = vpack.c.bf16 %v1024, %v1022
  %v1197 = vpack.c.bf16 %v1025, %v1023
  %v1198 = vpack.c.bf16 %v1028, %v1026
  %v1199 = vpack.c.bf16 %v1029, %v1027
  %v1200 = vpack.c.bf16 %v1032, %v1030
  %v1201 = vpack.c.bf16 %v1033, %v1031
  %v1202 = vpack.c.bf16 %v1036, %v1034
  %v1203 = vpack.c.bf16 %v1037, %v1035
  %v1204 = vpack.c.bf16 %v1040, %v1038
  %v1205 = vpack.c.bf16 %v1041, %v1039
  %v1206 = vpack.c.bf16 %v1044, %v1042
  %v1207 = vpack.c.bf16 %v1045, %v1043
  %v1208 = vpack.c.bf16 %v1048, %v1046
  %v1209 = vpack.c.bf16 %v1049, %v1047
  %v1210 = vpack.c.bf16 %v1052, %v1050
  %v1211 = vpack.c.bf16 %v1053, %v1051
  %v1212 = vpack.c.bf16 %v1056, %v1054
  %v1213 = vpack.c.bf16 %v1057, %v1055
  %v1214 = vpack.c.bf16 %v1060, %v1058
  %v1215 = vpack.c.bf16 %v1061, %v1059
  %v1216 = vpack.c.bf16 %v1064, %v1062
  %v1217 = vpack.c.bf16 %v1065, %v1063
  %v1218 = vpack.c.bf16 %v1068, %v1066
  %v1219 = vpack.c.bf16 %v1069, %v1067
  %v1220 = vpack.c.bf16 %v1072, %v1070
  %v1221 = vpack.c.bf16 %v1073, %v1071
  %v1222 = vpack.c.bf16 %v1076, %v1074
  %v1223 = vpack.c.bf16 %v1077, %v1075
  %v1224 = vpack.c.bf16 %v1080, %v1078
  %v1225 = vpack.c.bf16 %v1081, %v1079
  %v1226 = vpack.c.bf16 %v1084, %v1082
  %v1227 = vpack.c.bf16 %v1085, %v1083
  %v1228 = vpack.c.bf16 %v1088, %v1086
  %v1229 = vpack.c.bf16 %v1089, %v1087
  %v1230 = vpack.c.bf16 %v1092, %v1090
  %v1231 = vpack.c.bf16 %v1093, %v1091
  %v1232 = vpack.c.bf16 %v1096, %v1094
  %v1233 = vpack.c.bf16 %v1097, %v1095
  %v1234 = vpack.c.bf16 %v1100, %v1098
  %v1235 = vpack.c.bf16 %v1101, %v1099
  %v1236 = vpack.c.bf16 %v1104, %v1102
  %v1237 = vpack.c.bf16 %v1105, %v1103
  %v1238 = vpack.c.bf16 %v1108, %v1106
  %v1239 = vpack.c.bf16 %v1109, %v1107
  %v1240 = vpack.c.bf16 %v1112, %v1110
  %v1241 = vpack.c.bf16 %v1113, %v1111
  %v1242 = vpack.c.bf16 %v1116, %v1114
  %v1243 = vpack.c.bf16 %v1117, %v1115
  %v1244 = vpack.c.bf16 %v1120, %v1118
  %v1245 = vpack.c.bf16 %v1121, %v1119
  %v1246 = vpack.c.bf16 %v1124, %v1122
  %v1247 = vpack.c.bf16 %v1125, %v1123
  %v1248 = vpack.c.bf16 %v1128, %v1126
  %v1249 = vpack.c.bf16 %v1129, %v1127
  %vm1250 = vcmask 523264
  %v1252 = vsel %vm1250, %v817, 0
  %v1255 = vsel %vm1250, %v825, 0
  %v1258 = vsel %vm1250, %v833, 0
  %v1261 = vsel %vm1250, %v841, 0
  %v1264 = vsel %vm1250, %v849, 0
  %v1267 = vsel %vm1250, %v857, 0
  %v1270 = vsel %vm1250, %v865, 0
  %v1273 = vsel %vm1250, %v873, 0
  %v1276 = vsel %vm1250, %v881, 0
  %v1279 = vsel %vm1250, %v889, 0
  %1281 = vmatpush.bf16.msra.mxu0 %v1144
  %1282 = vmatpush.bf16.msra.mxu0 %v1142
  %1283 = vmatpush.bf16.msra.mxu0 %v1140
  %1284 = vmatpush.bf16.msra.mxu0 %v1138
  %1285 = vmatpush.bf16.msra.mxu0 %v1136
  %1286 = vmatpush.bf16.msra.mxu0 %v1134
  %1287 = vmatpush.bf16.msra.mxu0 %v1132
  %1288 = vmatpush.bf16.msra.mxu0 %v1130
  %1289 = vmatmul.bf16.gmra.mxu0 %v810
  %v1290 = vpop.f32.mrf.mxu0
  %v1291 = vadd.f32 0.0, %v1290
  %v1292 = vpop.f32.mrf.mxu0
  %v1293 = vadd.f32 0.0, %v1292
  %1294 = vmatmul.bf16.gmra.mxu0 %v818
  %v1295 = vpop.f32.mrf.mxu0
  %v1296 = vadd.f32 0.0, %v1295
  %v1297 = vpop.f32.mrf.mxu0
  %v1298 = vadd.f32 0.0, %v1297
  %1299 = vmatmul.bf16.gmra.mxu0 %v826
  %v1300 = vpop.f32.mrf.mxu0
  %v1301 = vadd.f32 0.0, %v1300
  %v1302 = vpop.f32.mrf.mxu0
  %v1303 = vadd.f32 0.0, %v1302
  %1304 = vmatmul.bf16.gmra.mxu0 %v834
  %v1305 = vpop.f32.mrf.mxu0
  %v1306 = vadd.f32 0.0, %v1305
  %v1307 = vpop.f32.mrf.mxu0
  %v1308 = vadd.f32 0.0, %v1307
  %1309 = vmatmul.bf16.gmra.mxu0 %v842
  %v1310 = vpop.f32.mrf.mxu0
  %v1311 = vadd.f32 0.0, %v1310
  %v1312 = vpop.f32.mrf.mxu0
  %v1313 = vadd.f32 0.0, %v1312
  %1314 = vmatmul.bf16.gmra.mxu0 %v850
  %v1315 = vpop.f32.mrf.mxu0
  %v1316 = vadd.f32 0.0, %v1315
  %v1317 = vpop.f32.mrf.mxu0
  %v1318 = vadd.f32 0.0, %v1317
  %1319 = vmatmul.bf16.gmra.mxu0 %v858
  %v1320 = vpop.f32.mrf.mxu0
  %v1321 = vadd.f32 0.0, %v1320
  %v1322 = vpop.f32.mrf.mxu0
  %v1323 = vadd.f32 0.0, %v1322
  %1324 = vmatmul.bf16.gmra.mxu0 %v866
  %v1325 = vpop.f32.mrf.mxu0
  %v1326 = vadd.f32 0.0, %v1325
  %v1327 = vpop.f32.mrf.mxu0
  %v1328 = vadd.f32 0.0, %v1327
  %1329 = vmatmul.bf16.gmra.mxu0 %v874
  %v1330 = vpop.f32.mrf.mxu0
  %v1331 = vadd.f32 0.0, %v1330
  %v1332 = vpop.f32.mrf.mxu0
  %v1333 = vadd.f32 0.0, %v1332
  %1334 = vmatmul.bf16.gmra.mxu0 %v882
  %v1335 = vpop.f32.mrf.mxu0
  %v1336 = vadd.f32 0.0, %v1335
  %v1337 = vpop.f32.mrf.mxu0
  %v1338 = vadd.f32 0.0, %v1337
  %1339 = vdwg.mxu0
  %1340 = vmatpush.bf16.msra.mxu0 %v1160
  %1341 = vmatpush.bf16.msra.mxu0 %v1158
  %1342 = vmatpush.bf16.msra.mxu0 %v1156
  %1343 = vmatpush.bf16.msra.mxu0 %v1154
  %1344 = vmatpush.bf16.msra.mxu0 %v1152
  %1345 = vmatpush.bf16.msra.mxu0 %v1150
  %1346 = vmatpush.bf16.msra.mxu0 %v1148
  %1347 = vmatpush.bf16.msra.mxu0 %v1146
  %1348 = vmatmul.bf16.gmra.mxu0 %v811
  %v1349 = vpop.f32.mrf.mxu0
  %v1350 = vadd.f32 %v1291, %v1349
  %v1351 = vpop.f32.mrf.mxu0
  %v1352 = vadd.f32 %v1293, %v1351
  %1353 = vmatmul.bf16.gmra.mxu0 %v819
  %v1354 = vpop.f32.mrf.mxu0
  %v1355 = vadd.f32 %v1296, %v1354
  %v1356 = vpop.f32.mrf.mxu0
  %v1357 = vadd.f32 %v1298, %v1356
  %1358 = vmatmul.bf16.gmra.mxu0 %v827
  %v1359 = vpop.f32.mrf.mxu0
  %v1360 = vadd.f32 %v1301, %v1359
  %v1361 = vpop.f32.mrf.mxu0
  %v1362 = vadd.f32 %v1303, %v1361
  %1363 = vmatmul.bf16.gmra.mxu0 %v835
  %v1364 = vpop.f32.mrf.mxu0
  %v1365 = vadd.f32 %v1306, %v1364
  %v1366 = vpop.f32.mrf.mxu0
  %v1367 = vadd.f32 %v1308, %v1366
  %1368 = vmatmul.bf16.gmra.mxu0 %v843
  %v1369 = vpop.f32.mrf.mxu0
  %v1370 = vadd.f32 %v1311, %v1369
  %v1371 = vpop.f32.mrf.mxu0
  %v1372 = vadd.f32 %v1313, %v1371
  %1373 = vmatmul.bf16.gmra.mxu0 %v851
  %v1374 = vpop.f32.mrf.mxu0
  %v1375 = vadd.f32 %v1316, %v1374
  %v1376 = vpop.f32.mrf.mxu0
  %v1377 = vadd.f32 %v1318, %v1376
  %1378 = vmatmul.bf16.gmra.mxu0 %v859
  %v1379 = vpop.f32.mrf.mxu0
  %v1380 = vadd.f32 %v1321, %v1379
  %v1381 = vpop.f32.mrf.mxu0
  %v1382 = vadd.f32 %v1323, %v1381
  %1383 = vmatmul.bf16.gmra.mxu0 %v867
  %v1384 = vpop.f32.mrf.mxu0
  %v1385 = vadd.f32 %v1326, %v1384
  %v1386 = vpop.f32.mrf.mxu0
  %v1387 = vadd.f32 %v1328, %v1386
  %1388 = vmatmul.bf16.gmra.mxu0 %v875
  %v1389 = vpop.f32.mrf.mxu0
  %v1390 = vadd.f32 %v1331, %v1389
  %v1391 = vpop.f32.mrf.mxu0
  %v1392 = vadd.f32 %v1333, %v1391
  %1393 = vmatmul.bf16.gmra.mxu0 %v883
  %v1394 = vpop.f32.mrf.mxu0
  %v1395 = vadd.f32 %v1336, %v1394
  %v1396 = vpop.f32.mrf.mxu0
  %v1397 = vadd.f32 %v1338, %v1396
  %1398 = vdwg.mxu0
  %1399 = vmatpush.bf16.msra.mxu0 %v1176
  %1400 = vmatpush.bf16.msra.mxu0 %v1174
  %1401 = vmatpush.bf16.msra.mxu0 %v1172
  %1402 = vmatpush.bf16.msra.mxu0 %v1170
  %1403 = vmatpush.bf16.msra.mxu0 %v1168
  %1404 = vmatpush.bf16.msra.mxu0 %v1166
  %1405 = vmatpush.bf16.msra.mxu0 %v1164
  %1406 = vmatpush.bf16.msra.mxu0 %v1162
  %1407 = vmatmul.bf16.gmra.mxu0 %v812
  %v1408 = vpop.f32.mrf.mxu0
  %v1409 = vadd.f32 %v1350, %v1408
  %v1410 = vpop.f32.mrf.mxu0
  %v1411 = vadd.f32 %v1352, %v1410
  %1412 = vmatmul.bf16.gmra.mxu0 %v820
  %v1413 = vpop.f32.mrf.mxu0
  %v1414 = vadd.f32 %v1355, %v1413
  %v1415 = vpop.f32.mrf.mxu0
  %v1416 = vadd.f32 %v1357, %v1415
  %1417 = vmatmul.bf16.gmra.mxu0 %v828
  %v1418 = vpop.f32.mrf.mxu0
  %v1419 = vadd.f32 %v1360, %v1418
  %v1420 = vpop.f32.mrf.mxu0
  %v1421 = vadd.f32 %v1362, %v1420
  %1422 = vmatmul.bf16.gmra.mxu0 %v836
  %v1423 = vpop.f32.mrf.mxu0
  %v1424 = vadd.f32 %v1365, %v1423
  %v1425 = vpop.f32.mrf.mxu0
  %v1426 = vadd.f32 %v1367, %v1425
  %1427 = vmatmul.bf16.gmra.mxu0 %v844
  %v1428 = vpop.f32.mrf.mxu0
  %v1429 = vadd.f32 %v1370, %v1428
  %v1430 = vpop.f32.mrf.mxu0
  %v1431 = vadd.f32 %v1372, %v1430
  %1432 = vmatmul.bf16.gmra.mxu0 %v852
  %v1433 = vpop.f32.mrf.mxu0
  %v1434 = vadd.f32 %v1375, %v1433
  %v1435 = vpop.f32.mrf.mxu0
  %v1436 = vadd.f32 %v1377, %v1435
  %1437 = vmatmul.bf16.gmra.mxu0 %v860
  %v1438 = vpop.f32.mrf.mxu0
  %v1439 = vadd.f32 %v1380, %v1438
  %v1440 = vpop.f32.mrf.mxu0
  %v1441 = vadd.f32 %v1382, %v1440
  %1442 = vmatmul.bf16.gmra.mxu0 %v868
  %v1443 = vpop.f32.mrf.mxu0
  %v1444 = vadd.f32 %v1385, %v1443
  %v1445 = vpop.f32.mrf.mxu0
  %v1446 = vadd.f32 %v1387, %v1445
  %1447 = vmatmul.bf16.gmra.mxu0 %v876
  %v1448 = vpop.f32.mrf.mxu0
  %v1449 = vadd.f32 %v1390, %v1448
  %v1450 = vpop.f32.mrf.mxu0
  %v1451 = vadd.f32 %v1392, %v1450
  %1452 = vmatmul.bf16.gmra.mxu0 %v884
  %v1453 = vpop.f32.mrf.mxu0
  %v1454 = vadd.f32 %v1395, %v1453
  %v1455 = vpop.f32.mrf.mxu0
  %v1456 = vadd.f32 %v1397, %v1455
  %1457 = vdwg.mxu0
  %1458 = vmatpush.bf16.msra.mxu0 %v1192
  %1459 = vmatpush.bf16.msra.mxu0 %v1190
  %1460 = vmatpush.bf16.msra.mxu0 %v1188
  %1461 = vmatpush.bf16.msra.mxu0 %v1186
  %1462 = vmatpush.bf16.msra.mxu0 %v1184
  %1463 = vmatpush.bf16.msra.mxu0 %v1182
  %1464 = vmatpush.bf16.msra.mxu0 %v1180
  %1465 = vmatpush.bf16.msra.mxu0 %v1178
  %1466 = vmatmul.bf16.gmra.mxu0 %v813
  %v1467 = vpop.f32.mrf.mxu0
  %v1468 = vadd.f32 %v1409, %v1467
  %v1469 = vpop.f32.mrf.mxu0
  %v1470 = vadd.f32 %v1411, %v1469
  %1471 = vmatmul.bf16.gmra.mxu0 %v821
  %v1472 = vpop.f32.mrf.mxu0
  %v1473 = vadd.f32 %v1414, %v1472
  %v1474 = vpop.f32.mrf.mxu0
  %v1475 = vadd.f32 %v1416, %v1474
  %1476 = vmatmul.bf16.gmra.mxu0 %v829
  %v1477 = vpop.f32.mrf.mxu0
  %v1478 = vadd.f32 %v1419, %v1477
  %v1479 = vpop.f32.mrf.mxu0
  %v1480 = vadd.f32 %v1421, %v1479
  %1481 = vmatmul.bf16.gmra.mxu0 %v837
  %v1482 = vpop.f32.mrf.mxu0
  %v1483 = vadd.f32 %v1424, %v1482
  %v1484 = vpop.f32.mrf.mxu0
  %v1485 = vadd.f32 %v1426, %v1484
  %1486 = vmatmul.bf16.gmra.mxu0 %v845
  %v1487 = vpop.f32.mrf.mxu0
  %v1488 = vadd.f32 %v1429, %v1487
  %v1489 = vpop.f32.mrf.mxu0
  %v1490 = vadd.f32 %v1431, %v1489
  %1491 = vmatmul.bf16.gmra.mxu0 %v853
  %v1492 = vpop.f32.mrf.mxu0
  %v1493 = vadd.f32 %v1434, %v1492
  %v1494 = vpop.f32.mrf.mxu0
  %v1495 = vadd.f32 %v1436, %v1494
  %1496 = vmatmul.bf16.gmra.mxu0 %v861
  %v1497 = vpop.f32.mrf.mxu0
  %v1498 = vadd.f32 %v1439, %v1497
  %v1499 = vpop.f32.mrf.mxu0
  %v1500 = vadd.f32 %v1441, %v1499
  %1501 = vmatmul.bf16.gmra.mxu0 %v869
  %v1502 = vpop.f32.mrf.mxu0
  %v1503 = vadd.f32 %v1444, %v1502
  %v1504 = vpop.f32.mrf.mxu0
  %v1505 = vadd.f32 %v1446, %v1504
  %1506 = vmatmul.bf16.gmra.mxu0 %v877
  %v1507 = vpop.f32.mrf.mxu0
  %v1508 = vadd.f32 %v1449, %v1507
  %v1509 = vpop.f32.mrf.mxu0
  %v1510 = vadd.f32 %v1451, %v1509
  %1511 = vmatmul.bf16.gmra.mxu0 %v885
  %v1512 = vpop.f32.mrf.mxu0
  %v1513 = vadd.f32 %v1454, %v1512
  %v1514 = vpop.f32.mrf.mxu0
  %v1515 = vadd.f32 %v1456, %v1514
  %1516 = vdwg.mxu0
  %1517 = vmatpush.bf16.msra.mxu0 %v1208
  %1518 = vmatpush.bf16.msra.mxu0 %v1206
  %1519 = vmatpush.bf16.msra.mxu0 %v1204
  %1520 = vmatpush.bf16.msra.mxu0 %v1202
  %1521 = vmatpush.bf16.msra.mxu0 %v1200
  %1522 = vmatpush.bf16.msra.mxu0 %v1198
  %1523 = vmatpush.bf16.msra.mxu0 %v1196
  %1524 = vmatpush.bf16.msra.mxu0 %v1194
  %1525 = vmatmul.bf16.gmra.mxu0 %v814
  %v1526 = vpop.f32.mrf.mxu0
  %v1527 = vadd.f32 %v1468, %v1526
  %v1528 = vpop.f32.mrf.mxu0
  %v1529 = vadd.f32 %v1470, %v1528
  %1530 = vmatmul.bf16.gmra.mxu0 %v822
  %v1531 = vpop.f32.mrf.mxu0
  %v1532 = vadd.f32 %v1473, %v1531
  %v1533 = vpop.f32.mrf.mxu0
  %v1534 = vadd.f32 %v1475, %v1533
  %1535 = vmatmul.bf16.gmra.mxu0 %v830
  %v1536 = vpop.f32.mrf.mxu0
  %v1537 = vadd.f32 %v1478, %v1536
  %v1538 = vpop.f32.mrf.mxu0
  %v1539 = vadd.f32 %v1480, %v1538
  %1540 = vmatmul.bf16.gmra.mxu0 %v838
  %v1541 = vpop.f32.mrf.mxu0
  %v1542 = vadd.f32 %v1483, %v1541
  %v1543 = vpop.f32.mrf.mxu0
  %v1544 = vadd.f32 %v1485, %v1543
  %1545 = vmatmul.bf16.gmra.mxu0 %v846
  %v1546 = vpop.f32.mrf.mxu0
  %v1547 = vadd.f32 %v1488, %v1546
  %v1548 = vpop.f32.mrf.mxu0
  %v1549 = vadd.f32 %v1490, %v1548
  %1550 = vmatmul.bf16.gmra.mxu0 %v854
  %v1551 = vpop.f32.mrf.mxu0
  %v1552 = vadd.f32 %v1493, %v1551
  %v1553 = vpop.f32.mrf.mxu0
  %v1554 = vadd.f32 %v1495, %v1553
  %1555 = vmatmul.bf16.gmra.mxu0 %v862
  %v1556 = vpop.f32.mrf.mxu0
  %v1557 = vadd.f32 %v1498, %v1556
  %v1558 = vpop.f32.mrf.mxu0
  %v1559 = vadd.f32 %v1500, %v1558
  %1560 = vmatmul.bf16.gmra.mxu0 %v870
  %v1561 = vpop.f32.mrf.mxu0
  %v1562 = vadd.f32 %v1503, %v1561
  %v1563 = vpop.f32.mrf.mxu0
  %v1564 = vadd.f32 %v1505, %v1563
  %1565 = vmatmul.bf16.gmra.mxu0 %v878
  %v1566 = vpop.f32.mrf.mxu0
  %v1567 = vadd.f32 %v1508, %v1566
  %v1568 = vpop.f32.mrf.mxu0
  %v1569 = vadd.f32 %v1510, %v1568
  %1570 = vmatmul.bf16.gmra.mxu0 %v886
  %v1571 = vpop.f32.mrf.mxu0
  %v1572 = vadd.f32 %v1513, %v1571
  %v1573 = vpop.f32.mrf.mxu0
  %v1574 = vadd.f32 %v1515, %v1573
  %1575 = vdwg.mxu0
  %1576 = vmatpush.bf16.msra.mxu0 %v1224
  %1577 = vmatpush.bf16.msra.mxu0 %v1222
  %1578 = vmatpush.bf16.msra.mxu0 %v1220
  %1579 = vmatpush.bf16.msra.mxu0 %v1218
  %1580 = vmatpush.bf16.msra.mxu0 %v1216
  %1581 = vmatpush.bf16.msra.mxu0 %v1214
  %1582 = vmatpush.bf16.msra.mxu0 %v1212
  %1583 = vmatpush.bf16.msra.mxu0 %v1210
  %1584 = vmatmul.bf16.gmra.mxu0 %v815
  %v1585 = vpop.f32.mrf.mxu0
  %v1586 = vadd.f32 %v1527, %v1585
  %v1587 = vpop.f32.mrf.mxu0
  %v1588 = vadd.f32 %v1529, %v1587
  %1589 = vmatmul.bf16.gmra.mxu0 %v823
  %v1590 = vpop.f32.mrf.mxu0
  %v1591 = vadd.f32 %v1532, %v1590
  %v1592 = vpop.f32.mrf.mxu0
  %v1593 = vadd.f32 %v1534, %v1592
  %1594 = vmatmul.bf16.gmra.mxu0 %v831
  %v1595 = vpop.f32.mrf.mxu0
  %v1596 = vadd.f32 %v1537, %v1595
  %v1597 = vpop.f32.mrf.mxu0
  %v1598 = vadd.f32 %v1539, %v1597
  %1599 = vmatmul.bf16.gmra.mxu0 %v839
  %v1600 = vpop.f32.mrf.mxu0
  %v1601 = vadd.f32 %v1542, %v1600
  %v1602 = vpop.f32.mrf.mxu0
  %v1603 = vadd.f32 %v1544, %v1602
  %1604 = vmatmul.bf16.gmra.mxu0 %v847
  %v1605 = vpop.f32.mrf.mxu0
  %v1606 = vadd.f32 %v1547, %v1605
  %v1607 = vpop.f32.mrf.mxu0
  %v1608 = vadd.f32 %v1549, %v1607
  %1609 = vmatmul.bf16.gmra.mxu0 %v855
  %v1610 = vpop.f32.mrf.mxu0
  %v1611 = vadd.f32 %v1552, %v1610
  %v1612 = vpop.f32.mrf.mxu0
  %v1613 = vadd.f32 %v1554, %v1612
  %1614 = vmatmul.bf16.gmra.mxu0 %v863
  %v1615 = vpop.f32.mrf.mxu0
  %v1616 = vadd.f32 %v1557, %v1615
  %v1617 = vpop.f32.mrf.mxu0
  %v1618 = vadd.f32 %v1559, %v1617
  %1619 = vmatmul.bf16.gmra.mxu0 %v871
  %v1620 = vpop.f32.mrf.mxu0
  %v1621 = vadd.f32 %v1562, %v1620
  %v1622 = vpop.f32.mrf.mxu0
  %v1623 = vadd.f32 %v1564, %v1622
  %1624 = vmatmul.bf16.gmra.mxu0 %v879
  %v1625 = vpop.f32.mrf.mxu0
  %v1626 = vadd.f32 %v1567, %v1625
  %v1627 = vpop.f32.mrf.mxu0
  %v1628 = vadd.f32 %v1569, %v1627
  %1629 = vmatmul.bf16.gmra.mxu0 %v887
  %v1630 = vpop.f32.mrf.mxu0
  %v1631 = vadd.f32 %v1572, %v1630
  %v1632 = vpop.f32.mrf.mxu0
  %v1633 = vadd.f32 %v1574, %v1632
  %1634 = vdwg.mxu0
  %1635 = vmatpush.bf16.msra.mxu0 %v1240
  %1636 = vmatpush.bf16.msra.mxu0 %v1238
  %1637 = vmatpush.bf16.msra.mxu0 %v1236
  %1638 = vmatpush.bf16.msra.mxu0 %v1234
  %1639 = vmatpush.bf16.msra.mxu0 %v1232
  %1640 = vmatpush.bf16.msra.mxu0 %v1230
  %1641 = vmatpush.bf16.msra.mxu0 %v1228
  %1642 = vmatpush.bf16.msra.mxu0 %v1226
  %1643 = vmatmul.bf16.gmra.mxu0 %v816
  %v1644 = vpop.f32.mrf.mxu0
  %v1645 = vadd.f32 %v1586, %v1644
  %v1646 = vpop.f32.mrf.mxu0
  %v1647 = vadd.f32 %v1588, %v1646
  %1648 = vmatmul.bf16.gmra.mxu0 %v824
  %v1649 = vpop.f32.mrf.mxu0
  %v1650 = vadd.f32 %v1591, %v1649
  %v1651 = vpop.f32.mrf.mxu0
  %v1652 = vadd.f32 %v1593, %v1651
  %1653 = vmatmul.bf16.gmra.mxu0 %v832
  %v1654 = vpop.f32.mrf.mxu0
  %v1655 = vadd.f32 %v1596, %v1654
  %v1656 = vpop.f32.mrf.mxu0
  %v1657 = vadd.f32 %v1598, %v1656
  %1658 = vmatmul.bf16.gmra.mxu0 %v840
  %v1659 = vpop.f32.mrf.mxu0
  %v1660 = vadd.f32 %v1601, %v1659
  %v1661 = vpop.f32.mrf.mxu0
  %v1662 = vadd.f32 %v1603, %v1661
  %1663 = vmatmul.bf16.gmra.mxu0 %v848
  %v1664 = vpop.f32.mrf.mxu0
  %v1665 = vadd.f32 %v1606, %v1664
  %v1666 = vpop.f32.mrf.mxu0
  %v1667 = vadd.f32 %v1608, %v1666
  %1668 = vmatmul.bf16.gmra.mxu0 %v856
  %v1669 = vpop.f32.mrf.mxu0
  %v1670 = vadd.f32 %v1611, %v1669
  %v1671 = vpop.f32.mrf.mxu0
  %v1672 = vadd.f32 %v1613, %v1671
  %1673 = vmatmul.bf16.gmra.mxu0 %v864
  %v1674 = vpop.f32.mrf.mxu0
  %v1675 = vadd.f32 %v1616, %v1674
  %v1676 = vpop.f32.mrf.mxu0
  %v1677 = vadd.f32 %v1618, %v1676
  %1678 = vmatmul.bf16.gmra.mxu0 %v872
  %v1679 = vpop.f32.mrf.mxu0
  %v1680 = vadd.f32 %v1621, %v1679
  %v1681 = vpop.f32.mrf.mxu0
  %v1682 = vadd.f32 %v1623, %v1681
  %1683 = vmatmul.bf16.gmra.mxu0 %v880
  %v1684 = vpop.f32.mrf.mxu0
  %v1685 = vadd.f32 %v1626, %v1684
  %v1686 = vpop.f32.mrf.mxu0
  %v1687 = vadd.f32 %v1628, %v1686
  %1688 = vmatmul.bf16.gmra.mxu0 %v888
  %v1689 = vpop.f32.mrf.mxu0
  %v1690 = vadd.f32 %v1631, %v1689
  %v1691 = vpop.f32.mrf.mxu0
  %v1692 = vadd.f32 %v1633, %v1691
  %1693 = vdwg.mxu0
  %1694 = vmatpush.bf16.msra.mxu0 0
  %1695 = vmatpush.bf16.msra.mxu0 0
  %1696 = vmatpush.bf16.msra.mxu0 0
  %1697 = vmatpush.bf16.msra.mxu0 0
  %1698 = vmatpush.bf16.msra.mxu0 %v1248
  %1699 = vmatpush.bf16.msra.mxu0 %v1246
  %1700 = vmatpush.bf16.msra.mxu0 %v1244
  %1701 = vmatpush.bf16.msra.mxu0 %v1242
  %1702 = vmatmul.bf16.gmra.mxu0 %v1252
  %v1703 = vpop.f32.mrf.mxu0
  %v1704 = vadd.f32 %v1645, %v1703
  %v1705 = vpop.f32.mrf.mxu0
  %v1706 = vadd.f32 %v1647, %v1705
  %1707 = vmatmul.bf16.gmra.mxu0 %v1255
  %v1708 = vpop.f32.mrf.mxu0
  %v1709 = vadd.f32 %v1650, %v1708
  %v1710 = vpop.f32.mrf.mxu0
  %v1711 = vadd.f32 %v1652, %v1710
  %1712 = vmatmul.bf16.gmra.mxu0 %v1258
  %v1713 = vpop.f32.mrf.mxu0
  %v1714 = vadd.f32 %v1655, %v1713
  %v1715 = vpop.f32.mrf.mxu0
  %v1716 = vadd.f32 %v1657, %v1715
  %1717 = vmatmul.bf16.gmra.mxu0 %v1261
  %v1718 = vpop.f32.mrf.mxu0
  %v1719 = vadd.f32 %v1660, %v1718
  %v1720 = vpop.f32.mrf.mxu0
  %v1721 = vadd.f32 %v1662, %v1720
  %1722 = vmatmul.bf16.gmra.mxu0 %v1264
  %v1723 = vpop.f32.mrf.mxu0
  %v1724 = vadd.f32 %v1665, %v1723
  %v1725 = vpop.f32.mrf.mxu0
  %v1726 = vadd.f32 %v1667, %v1725
  %1727 = vmatmul.bf16.gmra.mxu0 %v1267
  %v1728 = vpop.f32.mrf.mxu0
  %v1729 = vadd.f32 %v1670, %v1728
  %v1730 = vpop.f32.mrf.mxu0
  %v1731 = vadd.f32 %v1672, %v1730
  %1732 = vmatmul.bf16.gmra.mxu0 %v1270
  %v1733 = vpop.f32.mrf.mxu0
  %v1734 = vadd.f32 %v1675, %v1733
  %v1735 = vpop.f32.mrf.mxu0
  %v1736 = vadd.f32 %v1677, %v1735
  %1737 = vmatmul.bf16.gmra.mxu0 %v1273
  %v1738 = vpop.f32.mrf.mxu0
  %v1739 = vadd.f32 %v1680, %v1738
  %v1740 = vpop.f32.mrf.mxu0
  %v1741 = vadd.f32 %v1682, %v1740
  %1742 = vmatmul.bf16.gmra.mxu0 %v1276
  %v1743 = vpop.f32.mrf.mxu0
  %v1744 = vadd.f32 %v1685, %v1743
  %v1745 = vpop.f32.mrf.mxu0
  %v1746 = vadd.f32 %v1687, %v1745
  %1747 = vmatmul.bf16.gmra.mxu0 %v1279
  %v1748 = vpop.f32.mrf.mxu0
  %v1749 = vadd.f32 %v1690, %v1748
  %v1750 = vpop.f32.mrf.mxu0
  %v1751 = vadd.f32 %v1692, %v1750
  %1752 = vdwg.mxu0
  %1753 = vmatpush.bf16.msra.mxu0 %v1145
  %1754 = vmatpush.bf16.msra.mxu0 %v1143
  %1755 = vmatpush.bf16.msra.mxu0 %v1141
  %1756 = vmatpush.bf16.msra.mxu0 %v1139
  %1757 = vmatpush.bf16.msra.mxu0 %v1137
  %1758 = vmatpush.bf16.msra.mxu0 %v1135
  %1759 = vmatpush.bf16.msra.mxu0 %v1133
  %1760 = vmatpush.bf16.msra.mxu0 %v1131
  %1761 = vmatmul.bf16.gmra.mxu0 %v810
  %v1762 = vpop.f32.mrf.mxu0
  %v1763 = vadd.f32 0.0, %v1762
  %v1764 = vpop.f32.mrf.mxu0
  %v1765 = vadd.f32 0.0, %v1764
  %1766 = vmatmul.bf16.gmra.mxu0 %v818
  %v1767 = vpop.f32.mrf.mxu0
  %v1768 = vadd.f32 0.0, %v1767
  %v1769 = vpop.f32.mrf.mxu0
  %v1770 = vadd.f32 0.0, %v1769
  %1771 = vmatmul.bf16.gmra.mxu0 %v826
  %v1772 = vpop.f32.mrf.mxu0
  %v1773 = vadd.f32 0.0, %v1772
  %v1774 = vpop.f32.mrf.mxu0
  %v1775 = vadd.f32 0.0, %v1774
  %1776 = vmatmul.bf16.gmra.mxu0 %v834
  %v1777 = vpop.f32.mrf.mxu0
  %v1778 = vadd.f32 0.0, %v1777
  %v1779 = vpop.f32.mrf.mxu0
  %v1780 = vadd.f32 0.0, %v1779
  %1781 = vmatmul.bf16.gmra.mxu0 %v842
  %v1782 = vpop.f32.mrf.mxu0
  %v1783 = vadd.f32 0.0, %v1782
  %v1784 = vpop.f32.mrf.mxu0
  %v1785 = vadd.f32 0.0, %v1784
  %1786 = vmatmul.bf16.gmra.mxu0 %v850
  %v1787 = vpop.f32.mrf.mxu0
  %v1788 = vadd.f32 0.0, %v1787
  %v1789 = vpop.f32.mrf.mxu0
  %v1790 = vadd.f32 0.0, %v1789
  %1791 = vmatmul.bf16.gmra.mxu0 %v858
  %v1792 = vpop.f32.mrf.mxu0
  %v1793 = vadd.f32 0.0, %v1792
  %v1794 = vpop.f32.mrf.mxu0
  %v1795 = vadd.f32 0.0, %v1794
  %1796 = vmatmul.bf16.gmra.mxu0 %v866
  %v1797 = vpop.f32.mrf.mxu0
  %v1798 = vadd.f32 0.0, %v1797
  %v1799 = vpop.f32.mrf.mxu0
  %v1800 = vadd.f32 0.0, %v1799
  %1801 = vmatmul.bf16.gmra.mxu0 %v874
  %v1802 = vpop.f32.mrf.mxu0
  %v1803 = vadd.f32 0.0, %v1802
  %v1804 = vpop.f32.mrf.mxu0
  %v1805 = vadd.f32 0.0, %v1804
  %1806 = vmatmul.bf16.gmra.mxu0 %v882
  %v1807 = vpop.f32.mrf.mxu0
  %v1808 = vadd.f32 0.0, %v1807
  %v1809 = vpop.f32.mrf.mxu0
  %v1810 = vadd.f32 0.0, %v1809
  %1811 = vdwg.mxu0
  %1812 = vmatpush.bf16.msra.mxu0 %v1161
  %1813 = vmatpush.bf16.msra.mxu0 %v1159
  %1814 = vmatpush.bf16.msra.mxu0 %v1157
  %1815 = vmatpush.bf16.msra.mxu0 %v1155
  %1816 = vmatpush.bf16.msra.mxu0 %v1153
  %1817 = vmatpush.bf16.msra.mxu0 %v1151
  %1818 = vmatpush.bf16.msra.mxu0 %v1149
  %1819 = vmatpush.bf16.msra.mxu0 %v1147
  %1820 = vmatmul.bf16.gmra.mxu0 %v811
  %v1821 = vpop.f32.mrf.mxu0
  %v1822 = vadd.f32 %v1763, %v1821
  %v1823 = vpop.f32.mrf.mxu0
  %v1824 = vadd.f32 %v1765, %v1823
  %1825 = vmatmul.bf16.gmra.mxu0 %v819
  %v1826 = vpop.f32.mrf.mxu0
  %v1827 = vadd.f32 %v1768, %v1826
  %v1828 = vpop.f32.mrf.mxu0
  %v1829 = vadd.f32 %v1770, %v1828
  %1830 = vmatmul.bf16.gmra.mxu0 %v827
  %v1831 = vpop.f32.mrf.mxu0
  %v1832 = vadd.f32 %v1773, %v1831
  %v1833 = vpop.f32.mrf.mxu0
  %v1834 = vadd.f32 %v1775, %v1833
  %1835 = vmatmul.bf16.gmra.mxu0 %v835
  %v1836 = vpop.f32.mrf.mxu0
  %v1837 = vadd.f32 %v1778, %v1836
  %v1838 = vpop.f32.mrf.mxu0
  %v1839 = vadd.f32 %v1780, %v1838
  %1840 = vmatmul.bf16.gmra.mxu0 %v843
  %v1841 = vpop.f32.mrf.mxu0
  %v1842 = vadd.f32 %v1783, %v1841
  %v1843 = vpop.f32.mrf.mxu0
  %v1844 = vadd.f32 %v1785, %v1843
  %1845 = vmatmul.bf16.gmra.mxu0 %v851
  %v1846 = vpop.f32.mrf.mxu0
  %v1847 = vadd.f32 %v1788, %v1846
  %v1848 = vpop.f32.mrf.mxu0
  %v1849 = vadd.f32 %v1790, %v1848
  %1850 = vmatmul.bf16.gmra.mxu0 %v859
  %v1851 = vpop.f32.mrf.mxu0
  %v1852 = vadd.f32 %v1793, %v1851
  %v1853 = vpop.f32.mrf.mxu0
  %v1854 = vadd.f32 %v1795, %v1853
  %1855 = vmatmul.bf16.gmra.mxu0 %v867
  %v1856 = vpop.f32.mrf.mxu0
  %v1857 = vadd.f32 %v1798, %v1856
  %v1858 = vpop.f32.mrf.mxu0
  %v1859 = vadd.f32 %v1800, %v1858
  %1860 = vmatmul.bf16.gmra.mxu0 %v875
  %v1861 = vpop.f32.mrf.mxu0
  %v1862 = vadd.f32 %v1803, %v1861
  %v1863 = vpop.f32.mrf.mxu0
  %v1864 = vadd.f32 %v1805, %v1863
  %1865 = vmatmul.bf16.gmra.mxu0 %v883
  %v1866 = vpop.f32.mrf.mxu0
  %v1867 = vadd.f32 %v1808, %v1866
  %v1868 = vpop.f32.mrf.mxu0
  %v1869 = vadd.f32 %v1810, %v1868
  %1870 = vdwg.mxu0
  %1871 = vmatpush.bf16.msra.mxu0 %v1177
  %1872 = vmatpush.bf16.msra.mxu0 %v1175
  %1873 = vmatpush.bf16.msra.mxu0 %v1173
  %1874 = vmatpush.bf16.msra.mxu0 %v1171
  %1875 = vmatpush.bf16.msra.mxu0 %v1169
  %1876 = vmatpush.bf16.msra.mxu0 %v1167
  %1877 = vmatpush.bf16.msra.mxu0 %v1165
  %1878 = vmatpush.bf16.msra.mxu0 %v1163
  %1879 = vmatmul.bf16.gmra.mxu0 %v812
  %v1880 = vpop.f32.mrf.mxu0
  %v1881 = vadd.f32 %v1822, %v1880
  %v1882 = vpop.f32.mrf.mxu0
  %v1883 = vadd.f32 %v1824, %v1882
  %1884 = vmatmul.bf16.gmra.mxu0 %v820
  %v1885 = vpop.f32.mrf.mxu0
  %v1886 = vadd.f32 %v1827, %v1885
  %v1887 = vpop.f32.mrf.mxu0
  %v1888 = vadd.f32 %v1829, %v1887
  %1889 = vmatmul.bf16.gmra.mxu0 %v828
  %v1890 = vpop.f32.mrf.mxu0
  %v1891 = vadd.f32 %v1832, %v1890
  %v1892 = vpop.f32.mrf.mxu0
  %v1893 = vadd.f32 %v1834, %v1892
  %1894 = vmatmul.bf16.gmra.mxu0 %v836
  %v1895 = vpop.f32.mrf.mxu0
  %v1896 = vadd.f32 %v1837, %v1895
  %v1897 = vpop.f32.mrf.mxu0
  %v1898 = vadd.f32 %v1839, %v1897
  %1899 = vmatmul.bf16.gmra.mxu0 %v844
  %v1900 = vpop.f32.mrf.mxu0
  %v1901 = vadd.f32 %v1842, %v1900
  %v1902 = vpop.f32.mrf.mxu0
  %v1903 = vadd.f32 %v1844, %v1902
  %1904 = vmatmul.bf16.gmra.mxu0 %v852
  %v1905 = vpop.f32.mrf.mxu0
  %v1906 = vadd.f32 %v1847, %v1905
  %v1907 = vpop.f32.mrf.mxu0
  %v1908 = vadd.f32 %v1849, %v1907
  %1909 = vmatmul.bf16.gmra.mxu0 %v860
  %v1910 = vpop.f32.mrf.mxu0
  %v1911 = vadd.f32 %v1852, %v1910
  %v1912 = vpop.f32.mrf.mxu0
  %v1913 = vadd.f32 %v1854, %v1912
  %1914 = vmatmul.bf16.gmra.mxu0 %v868
  %v1915 = vpop.f32.mrf.mxu0
  %v1916 = vadd.f32 %v1857, %v1915
  %v1917 = vpop.f32.mrf.mxu0
  %v1918 = vadd.f32 %v1859, %v1917
  %1919 = vmatmul.bf16.gmra.mxu0 %v876
  %v1920 = vpop.f32.mrf.mxu0
  %v1921 = vadd.f32 %v1862, %v1920
  %v1922 = vpop.f32.mrf.mxu0
  %v1923 = vadd.f32 %v1864, %v1922
  %1924 = vmatmul.bf16.gmra.mxu0 %v884
  %v1925 = vpop.f32.mrf.mxu0
  %v1926 = vadd.f32 %v1867, %v1925
  %v1927 = vpop.f32.mrf.mxu0
  %v1928 = vadd.f32 %v1869, %v1927
  %1929 = vdwg.mxu0
  %1930 = vmatpush.bf16.msra.mxu0 %v1193
  %1931 = vmatpush.bf16.msra.mxu0 %v1191
  %1932 = vmatpush.bf16.msra.mxu0 %v1189
  %1933 = vmatpush.bf16.msra.mxu0 %v1187
  %1934 = vmatpush.bf16.msra.mxu0 %v1185
  %1935 = vmatpush.bf16.msra.mxu0 %v1183
  %1936 = vmatpush.bf16.msra.mxu0 %v1181
  %1937 = vmatpush.bf16.msra.mxu0 %v1179
  %1938 = vmatmul.bf16.gmra.mxu0 %v813
  %v1939 = vpop.f32.mrf.mxu0
  %v1940 = vadd.f32 %v1881, %v1939
  %v1941 = vpop.f32.mrf.mxu0
  %v1942 = vadd.f32 %v1883, %v1941
  %1943 = vmatmul.bf16.gmra.mxu0 %v821
  %v1944 = vpop.f32.mrf.mxu0
  %v1945 = vadd.f32 %v1886, %v1944
  %v1946 = vpop.f32.mrf.mxu0
  %v1947 = vadd.f32 %v1888, %v1946
  %1948 = vmatmul.bf16.gmra.mxu0 %v829
  %v1949 = vpop.f32.mrf.mxu0
  %v1950 = vadd.f32 %v1891, %v1949
  %v1951 = vpop.f32.mrf.mxu0
  %v1952 = vadd.f32 %v1893, %v1951
  %1953 = vmatmul.bf16.gmra.mxu0 %v837
  %v1954 = vpop.f32.mrf.mxu0
  %v1955 = vadd.f32 %v1896, %v1954
  %v1956 = vpop.f32.mrf.mxu0
  %v1957 = vadd.f32 %v1898, %v1956
  %1958 = vmatmul.bf16.gmra.mxu0 %v845
  %v1959 = vpop.f32.mrf.mxu0
  %v1960 = vadd.f32 %v1901, %v1959
  %v1961 = vpop.f32.mrf.mxu0
  %v1962 = vadd.f32 %v1903, %v1961
  %1963 = vmatmul.bf16.gmra.mxu0 %v853
  %v1964 = vpop.f32.mrf.mxu0
  %v1965 = vadd.f32 %v1906, %v1964
  %v1966 = vpop.f32.mrf.mxu0
  %v1967 = vadd.f32 %v1908, %v1966
  %1968 = vmatmul.bf16.gmra.mxu0 %v861
  %v1969 = vpop.f32.mrf.mxu0
  %v1970 = vadd.f32 %v1911, %v1969
  %v1971 = vpop.f32.mrf.mxu0
  %v1972 = vadd.f32 %v1913, %v1971
  %1973 = vmatmul.bf16.gmra.mxu0 %v869
  %v1974 = vpop.f32.mrf.mxu0
  %v1975 = vadd.f32 %v1916, %v1974
  %v1976 = vpop.f32.mrf.mxu0
  %v1977 = vadd.f32 %v1918, %v1976
  %1978 = vmatmul.bf16.gmra.mxu0 %v877
  %v1979 = vpop.f32.mrf.mxu0
  %v1980 = vadd.f32 %v1921, %v1979
  %v1981 = vpop.f32.mrf.mxu0
  %v1982 = vadd.f32 %v1923, %v1981
  %1983 = vmatmul.bf16.gmra.mxu0 %v885
  %v1984 = vpop.f32.mrf.mxu0
  %v1985 = vadd.f32 %v1926, %v1984
  %v1986 = vpop.f32.mrf.mxu0
  %v1987 = vadd.f32 %v1928, %v1986
  %1988 = vdwg.mxu0
  %1989 = vmatpush.bf16.msra.mxu0 %v1209
  %1990 = vmatpush.bf16.msra.mxu0 %v1207
  %1991 = vmatpush.bf16.msra.mxu0 %v1205
  %1992 = vmatpush.bf16.msra.mxu0 %v1203
  %1993 = vmatpush.bf16.msra.mxu0 %v1201
  %1994 = vmatpush.bf16.msra.mxu0 %v1199
  %1995 = vmatpush.bf16.msra.mxu0 %v1197
  %1996 = vmatpush.bf16.msra.mxu0 %v1195
  %1997 = vmatmul.bf16.gmra.mxu0 %v814
  %v1998 = vpop.f32.mrf.mxu0
  %v1999 = vadd.f32 %v1940, %v1998
  %v2000 = vpop.f32.mrf.mxu0
  %v2001 = vadd.f32 %v1942, %v2000
  %2002 = vmatmul.bf16.gmra.mxu0 %v822
  %v2003 = vpop.f32.mrf.mxu0
  %v2004 = vadd.f32 %v1945, %v2003
  %v2005 = vpop.f32.mrf.mxu0
  %v2006 = vadd.f32 %v1947, %v2005
  %2007 = vmatmul.bf16.gmra.mxu0 %v830
  %v2008 = vpop.f32.mrf.mxu0
  %v2009 = vadd.f32 %v1950, %v2008
  %v2010 = vpop.f32.mrf.mxu0
  %v2011 = vadd.f32 %v1952, %v2010
  %2012 = vmatmul.bf16.gmra.mxu0 %v838
  %v2013 = vpop.f32.mrf.mxu0
  %v2014 = vadd.f32 %v1955, %v2013
  %v2015 = vpop.f32.mrf.mxu0
  %v2016 = vadd.f32 %v1957, %v2015
  %2017 = vmatmul.bf16.gmra.mxu0 %v846
  %v2018 = vpop.f32.mrf.mxu0
  %v2019 = vadd.f32 %v1960, %v2018
  %v2020 = vpop.f32.mrf.mxu0
  %v2021 = vadd.f32 %v1962, %v2020
  %2022 = vmatmul.bf16.gmra.mxu0 %v854
  %v2023 = vpop.f32.mrf.mxu0
  %v2024 = vadd.f32 %v1965, %v2023
  %v2025 = vpop.f32.mrf.mxu0
  %v2026 = vadd.f32 %v1967, %v2025
  %2027 = vmatmul.bf16.gmra.mxu0 %v862
  %v2028 = vpop.f32.mrf.mxu0
  %v2029 = vadd.f32 %v1970, %v2028
  %v2030 = vpop.f32.mrf.mxu0
  %v2031 = vadd.f32 %v1972, %v2030
  %2032 = vmatmul.bf16.gmra.mxu0 %v870
  %v2033 = vpop.f32.mrf.mxu0
  %v2034 = vadd.f32 %v1975, %v2033
  %v2035 = vpop.f32.mrf.mxu0
  %v2036 = vadd.f32 %v1977, %v2035
  %2037 = vmatmul.bf16.gmra.mxu0 %v878
  %v2038 = vpop.f32.mrf.mxu0
  %v2039 = vadd.f32 %v1980, %v2038
  %v2040 = vpop.f32.mrf.mxu0
  %v2041 = vadd.f32 %v1982, %v2040
  %2042 = vmatmul.bf16.gmra.mxu0 %v886
  %v2043 = vpop.f32.mrf.mxu0
  %v2044 = vadd.f32 %v1985, %v2043
  %v2045 = vpop.f32.mrf.mxu0
  %v2046 = vadd.f32 %v1987, %v2045
  %2047 = vdwg.mxu0
  %2048 = vmatpush.bf16.msra.mxu0 %v1225
  %2049 = vmatpush.bf16.msra.mxu0 %v1223
  %2050 = vmatpush.bf16.msra.mxu0 %v1221
  %2051 = vmatpush.bf16.msra.mxu0 %v1219
  %2052 = vmatpush.bf16.msra.mxu0 %v1217
  %2053 = vmatpush.bf16.msra.mxu0 %v1215
  %2054 = vmatpush.bf16.msra.mxu0 %v1213
  %2055 = vmatpush.bf16.msra.mxu0 %v1211
  %2056 = vmatmul.bf16.gmra.mxu0 %v815
  %v2057 = vpop.f32.mrf.mxu0
  %v2058 = vadd.f32 %v1999, %v2057
  %v2059 = vpop.f32.mrf.mxu0
  %v2060 = vadd.f32 %v2001, %v2059
  %2061 = vmatmul.bf16.gmra.mxu0 %v823
  %v2062 = vpop.f32.mrf.mxu0
  %v2063 = vadd.f32 %v2004, %v2062
  %v2064 = vpop.f32.mrf.mxu0
  %v2065 = vadd.f32 %v2006, %v2064
  %2066 = vmatmul.bf16.gmra.mxu0 %v831
  %v2067 = vpop.f32.mrf.mxu0
  %v2068 = vadd.f32 %v2009, %v2067
  %v2069 = vpop.f32.mrf.mxu0
  %v2070 = vadd.f32 %v2011, %v2069
  %2071 = vmatmul.bf16.gmra.mxu0 %v839
  %v2072 = vpop.f32.mrf.mxu0
  %v2073 = vadd.f32 %v2014, %v2072
  %v2074 = vpop.f32.mrf.mxu0
  %v2075 = vadd.f32 %v2016, %v2074
  %2076 = vmatmul.bf16.gmra.mxu0 %v847
  %v2077 = vpop.f32.mrf.mxu0
  %v2078 = vadd.f32 %v2019, %v2077
  %v2079 = vpop.f32.mrf.mxu0
  %v2080 = vadd.f32 %v2021, %v2079
  %2081 = vmatmul.bf16.gmra.mxu0 %v855
  %v2082 = vpop.f32.mrf.mxu0
  %v2083 = vadd.f32 %v2024, %v2082
  %v2084 = vpop.f32.mrf.mxu0
  %v2085 = vadd.f32 %v2026, %v2084
  %2086 = vmatmul.bf16.gmra.mxu0 %v863
  %v2087 = vpop.f32.mrf.mxu0
  %v2088 = vadd.f32 %v2029, %v2087
  %v2089 = vpop.f32.mrf.mxu0
  %v2090 = vadd.f32 %v2031, %v2089
  %2091 = vmatmul.bf16.gmra.mxu0 %v871
  %v2092 = vpop.f32.mrf.mxu0
  %v2093 = vadd.f32 %v2034, %v2092
  %v2094 = vpop.f32.mrf.mxu0
  %v2095 = vadd.f32 %v2036, %v2094
  %2096 = vmatmul.bf16.gmra.mxu0 %v879
  %v2097 = vpop.f32.mrf.mxu0
  %v2098 = vadd.f32 %v2039, %v2097
  %v2099 = vpop.f32.mrf.mxu0
  %v2100 = vadd.f32 %v2041, %v2099
  %2101 = vmatmul.bf16.gmra.mxu0 %v887
  %v2102 = vpop.f32.mrf.mxu0
  %v2103 = vadd.f32 %v2044, %v2102
  %v2104 = vpop.f32.mrf.mxu0
  %v2105 = vadd.f32 %v2046, %v2104
  %2106 = vdwg.mxu0
  %2107 = vmatpush.bf16.msra.mxu0 %v1241
  %2108 = vmatpush.bf16.msra.mxu0 %v1239
  %2109 = vmatpush.bf16.msra.mxu0 %v1237
  %2110 = vmatpush.bf16.msra.mxu0 %v1235
  %2111 = vmatpush.bf16.msra.mxu0 %v1233
  %2112 = vmatpush.bf16.msra.mxu0 %v1231
  %2113 = vmatpush.bf16.msra.mxu0 %v1229
  %2114 = vmatpush.bf16.msra.mxu0 %v1227
  %2115 = vmatmul.bf16.gmra.mxu0 %v816
  %v2116 = vpop.f32.mrf.mxu0
  %v2117 = vadd.f32 %v2058, %v2116
  %v2118 = vpop.f32.mrf.mxu0
  %v2119 = vadd.f32 %v2060, %v2118
  %2120 = vmatmul.bf16.gmra.mxu0 %v824
  %v2121 = vpop.f32.mrf.mxu0
  %v2122 = vadd.f32 %v2063, %v2121
  %v2123 = vpop.f32.mrf.mxu0
  %v2124 = vadd.f32 %v2065, %v2123
  %2125 = vmatmul.bf16.gmra.mxu0 %v832
  %v2126 = vpop.f32.mrf.mxu0
  %v2127 = vadd.f32 %v2068, %v2126
  %v2128 = vpop.f32.mrf.mxu0
  %v2129 = vadd.f32 %v2070, %v2128
  %2130 = vmatmul.bf16.gmra.mxu0 %v840
  %v2131 = vpop.f32.mrf.mxu0
  %v2132 = vadd.f32 %v2073, %v2131
  %v2133 = vpop.f32.mrf.mxu0
  %v2134 = vadd.f32 %v2075, %v2133
  %2135 = vmatmul.bf16.gmra.mxu0 %v848
  %v2136 = vpop.f32.mrf.mxu0
  %v2137 = vadd.f32 %v2078, %v2136
  %v2138 = vpop.f32.mrf.mxu0
  %v2139 = vadd.f32 %v2080, %v2138
  %2140 = vmatmul.bf16.gmra.mxu0 %v856
  %v2141 = vpop.f32.mrf.mxu0
  %v2142 = vadd.f32 %v2083, %v2141
  %v2143 = vpop.f32.mrf.mxu0
  %v2144 = vadd.f32 %v2085, %v2143
  %2145 = vmatmul.bf16.gmra.mxu0 %v864
  %v2146 = vpop.f32.mrf.mxu0
  %v2147 = vadd.f32 %v2088, %v2146
  %v2148 = vpop.f32.mrf.mxu0
  %v2149 = vadd.f32 %v2090, %v2148
  %2150 = vmatmul.bf16.gmra.mxu0 %v872
  %v2151 = vpop.f32.mrf.mxu0
  %v2152 = vadd.f32 %v2093, %v2151
  %v2153 = vpop.f32.mrf.mxu0
  %v2154 = vadd.f32 %v2095, %v2153
  %2155 = vmatmul.bf16.gmra.mxu0 %v880
  %v2156 = vpop.f32.mrf.mxu0
  %v2157 = vadd.f32 %v2098, %v2156
  %v2158 = vpop.f32.mrf.mxu0
  %v2159 = vadd.f32 %v2100, %v2158
  %2160 = vmatmul.bf16.gmra.mxu0 %v888
  %v2161 = vpop.f32.mrf.mxu0
  %v2162 = vadd.f32 %v2103, %v2161
  %v2163 = vpop.f32.mrf.mxu0
  %v2164 = vadd.f32 %v2105, %v2163
  %2165 = vdwg.mxu0
  %2166 = vmatpush.bf16.msra.mxu0 0
  %2167 = vmatpush.bf16.msra.mxu0 0
  %2168 = vmatpush.bf16.msra.mxu0 0
  %2169 = vmatpush.bf16.msra.mxu0 0
  %2170 = vmatpush.bf16.msra.mxu0 %v1249
  %2171 = vmatpush.bf16.msra.mxu0 %v1247
  %2172 = vmatpush.bf16.msra.mxu0 %v1245
  %2173 = vmatpush.bf16.msra.mxu0 %v1243
  %2174 = vmatmul.bf16.gmra.mxu0 %v1252
  %v2175 = vpop.f32.mrf.mxu0
  %v2176 = vadd.f32 %v2117, %v2175
  %v2177 = vpop.f32.mrf.mxu0
  %v2178 = vadd.f32 %v2119, %v2177
  %2179 = vmatmul.bf16.gmra.mxu0 %v1255
  %v2180 = vpop.f32.mrf.mxu0
  %v2181 = vadd.f32 %v2122, %v2180
  %v2182 = vpop.f32.mrf.mxu0
  %v2183 = vadd.f32 %v2124, %v2182
  %2184 = vmatmul.bf16.gmra.mxu0 %v1258
  %v2185 = vpop.f32.mrf.mxu0
  %v2186 = vadd.f32 %v2127, %v2185
  %v2187 = vpop.f32.mrf.mxu0
  %v2188 = vadd.f32 %v2129, %v2187
  %2189 = vmatmul.bf16.gmra.mxu0 %v1261
  %v2190 = vpop.f32.mrf.mxu0
  %v2191 = vadd.f32 %v2132, %v2190
  %v2192 = vpop.f32.mrf.mxu0
  %v2193 = vadd.f32 %v2134, %v2192
  %2194 = vmatmul.bf16.gmra.mxu0 %v1264
  %v2195 = vpop.f32.mrf.mxu0
  %v2196 = vadd.f32 %v2137, %v2195
  %v2197 = vpop.f32.mrf.mxu0
  %v2198 = vadd.f32 %v2139, %v2197
  %2199 = vmatmul.bf16.gmra.mxu0 %v1267
  %v2200 = vpop.f32.mrf.mxu0
  %v2201 = vadd.f32 %v2142, %v2200
  %v2202 = vpop.f32.mrf.mxu0
  %v2203 = vadd.f32 %v2144, %v2202
  %2204 = vmatmul.bf16.gmra.mxu0 %v1270
  %v2205 = vpop.f32.mrf.mxu0
  %v2206 = vadd.f32 %v2147, %v2205
  %v2207 = vpop.f32.mrf.mxu0
  %v2208 = vadd.f32 %v2149, %v2207
  %2209 = vmatmul.bf16.gmra.mxu0 %v1273
  %v2210 = vpop.f32.mrf.mxu0
  %v2211 = vadd.f32 %v2152, %v2210
  %v2212 = vpop.f32.mrf.mxu0
  %v2213 = vadd.f32 %v2154, %v2212
  %2214 = vmatmul.bf16.gmra.mxu0 %v1276
  %v2215 = vpop.f32.mrf.mxu0
  %v2216 = vadd.f32 %v2157, %v2215
  %v2217 = vpop.f32.mrf.mxu0
  %v2218 = vadd.f32 %v2159, %v2217
  %2219 = vmatmul.bf16.gmra.mxu0 %v1279
  %v2220 = vpop.f32.mrf.mxu0
  %v2221 = vadd.f32 %v2162, %v2220
  %v2222 = vpop.f32.mrf.mxu0
  %v2223 = vadd.f32 %v2164, %v2222
  %2224 = vdwg.mxu0
  %vm2225 = vcmask 556032
  %v2226 = vsel %vm2225, %v2176, 0.0
  %v2227 = vadd.f32 %v1704, %v2226
  %2228 = vadd.xlane.f32.xlu0 %v2227
  %v2229 = vpop.xlane.xlu0 %2228
  %v2230 = vsel %vm2225, %v2178, 0.0
  %v2231 = vadd.f32 %v1706, %v2230
  %2232 = vadd.xlane.f32.xlu0 %v2231
  %v2233 = vpop.xlane.xlu0 %2232
  %v2234 = vsel %vm2225, %v2181, 0.0
  %v2235 = vadd.f32 %v1709, %v2234
  %2236 = vadd.xlane.f32.xlu0 %v2235
  %v2237 = vpop.xlane.xlu0 %2236
  %v2238 = vsel %vm2225, %v2183, 0.0
  %v2239 = vadd.f32 %v1711, %v2238
  %2240 = vadd.xlane.f32.xlu0 %v2239
  %v2241 = vpop.xlane.xlu0 %2240
  %v2242 = vsel %vm2225, %v2186, 0.0
  %v2243 = vadd.f32 %v1714, %v2242
  %2244 = vadd.xlane.f32.xlu0 %v2243
  %v2245 = vpop.xlane.xlu0 %2244
  %v2246 = vsel %vm2225, %v2188, 0.0
  %v2247 = vadd.f32 %v1716, %v2246
  %2248 = vadd.xlane.f32.xlu0 %v2247
  %v2249 = vpop.xlane.xlu0 %2248
  %v2250 = vsel %vm2225, %v2191, 0.0
  %v2251 = vadd.f32 %v1719, %v2250
  %2252 = vadd.xlane.f32.xlu0 %v2251
  %v2253 = vpop.xlane.xlu0 %2252
  %v2254 = vsel %vm2225, %v2193, 0.0
  %v2255 = vadd.f32 %v1721, %v2254
  %2256 = vadd.xlane.f32.xlu0 %v2255
  %v2257 = vpop.xlane.xlu0 %2256
  %v2258 = vsel %vm2225, %v2196, 0.0
  %v2259 = vadd.f32 %v1724, %v2258
  %2260 = vadd.xlane.f32.xlu0 %v2259
  %v2261 = vpop.xlane.xlu0 %2260
  %v2262 = vsel %vm2225, %v2198, 0.0
  %v2263 = vadd.f32 %v1726, %v2262
  %2264 = vadd.xlane.f32.xlu0 %v2263
  %v2265 = vpop.xlane.xlu0 %2264
  %v2266 = vsel %vm2225, %v2201, 0.0
  %v2267 = vadd.f32 %v1729, %v2266
  %2268 = vadd.xlane.f32.xlu0 %v2267
  %v2269 = vpop.xlane.xlu0 %2268
  %v2270 = vsel %vm2225, %v2203, 0.0
  %v2271 = vadd.f32 %v1731, %v2270
  %2272 = vadd.xlane.f32.xlu0 %v2271
  %v2273 = vpop.xlane.xlu0 %2272
  %v2274 = vsel %vm2225, %v2206, 0.0
  %v2275 = vadd.f32 %v1734, %v2274
  %2276 = vadd.xlane.f32.xlu0 %v2275
  %v2277 = vpop.xlane.xlu0 %2276
  %v2278 = vsel %vm2225, %v2208, 0.0
  %v2279 = vadd.f32 %v1736, %v2278
  %2280 = vadd.xlane.f32.xlu0 %v2279
  %v2281 = vpop.xlane.xlu0 %2280
  %v2282 = vsel %vm2225, %v2211, 0.0
  %v2283 = vadd.f32 %v1739, %v2282
  %2284 = vadd.xlane.f32.xlu0 %v2283
  %v2285 = vpop.xlane.xlu0 %2284
  %v2286 = vsel %vm2225, %v2213, 0.0
  %v2287 = vadd.f32 %v1741, %v2286
  %2288 = vadd.xlane.f32.xlu0 %v2287
  %v2289 = vpop.xlane.xlu0 %2288
  %v2290 = vsel %vm2225, %v2216, 0.0
  %v2291 = vadd.f32 %v1744, %v2290
  %2292 = vadd.xlane.f32.xlu0 %v2291
  %v2293 = vpop.xlane.xlu0 %2292
  %v2294 = vsel %vm2225, %v2218, 0.0
  %v2295 = vadd.f32 %v1746, %v2294
  %2296 = vadd.xlane.f32.xlu0 %v2295
  %v2297 = vpop.xlane.xlu0 %2296
  %v2298 = vsel %vm2225, %v2221, 0.0
  %v2299 = vadd.f32 %v1749, %v2298
  %2300 = vadd.xlane.f32.xlu0 %v2299
  %v2301 = vpop.xlane.xlu0 %2300
  %v2302 = vsel %vm2225, %v2223, 0.0
  %v2303 = vadd.f32 %v1751, %v2302
  %2304 = vadd.xlane.f32.xlu0 %v2303
  %v2305 = vpop.xlane.xlu0 %2304
  %v2306 = vmul.f32 %v1704, %v1704
  %v2307 = vmul.f32 %v2176, %v2176
  %v2308 = vmul.f32 %v1706, %v1706
  %v2309 = vmul.f32 %v2178, %v2178
  %v2310 = vmul.f32 %v1709, %v1709
  %v2311 = vmul.f32 %v2181, %v2181
  %v2312 = vmul.f32 %v1711, %v1711
  %v2313 = vmul.f32 %v2183, %v2183
  %v2314 = vmul.f32 %v1714, %v1714
  %v2315 = vmul.f32 %v2186, %v2186
  %v2316 = vmul.f32 %v1716, %v1716
  %v2317 = vmul.f32 %v2188, %v2188
  %v2318 = vmul.f32 %v1719, %v1719
  %v2319 = vmul.f32 %v2191, %v2191
  %v2320 = vmul.f32 %v1721, %v1721
  %v2321 = vmul.f32 %v2193, %v2193
  %v2322 = vmul.f32 %v1724, %v1724
  %v2323 = vmul.f32 %v2196, %v2196
  %v2324 = vmul.f32 %v1726, %v1726
  %v2325 = vmul.f32 %v2198, %v2198
  %v2326 = vmul.f32 %v1729, %v1729
  %v2327 = vmul.f32 %v2201, %v2201
  %v2328 = vmul.f32 %v1731, %v1731
  %v2329 = vmul.f32 %v2203, %v2203
  %v2330 = vmul.f32 %v1734, %v1734
  %v2331 = vmul.f32 %v2206, %v2206
  %v2332 = vmul.f32 %v1736, %v1736
  %v2333 = vmul.f32 %v2208, %v2208
  %v2334 = vmul.f32 %v1739, %v1739
  %v2335 = vmul.f32 %v2211, %v2211
  %v2336 = vmul.f32 %v1741, %v1741
  %v2337 = vmul.f32 %v2213, %v2213
  %v2338 = vmul.f32 %v1744, %v1744
  %v2339 = vmul.f32 %v2216, %v2216
  %v2340 = vmul.f32 %v1746, %v1746
  %v2341 = vmul.f32 %v2218, %v2218
  %v2342 = vmul.f32 %v1749, %v1749
  %v2343 = vmul.f32 %v2221, %v2221
  %v2344 = vmul.f32 %v1751, %v1751
  %v2345 = vmul.f32 %v2223, %v2223
  %v2346 = vsel %vm2225, %v2307, 0.0
  %v2347 = vadd.f32 %v2306, %v2346
  %2348 = vadd.xlane.f32.xlu0 %v2347
  %v2349 = vpop.xlane.xlu0 %2348
  %v2350 = vsel %vm2225, %v2309, 0.0
  %v2351 = vadd.f32 %v2308, %v2350
  %2352 = vadd.xlane.f32.xlu0 %v2351
  %v2353 = vpop.xlane.xlu0 %2352
  %v2354 = vsel %vm2225, %v2311, 0.0
  %v2355 = vadd.f32 %v2310, %v2354
  %2356 = vadd.xlane.f32.xlu0 %v2355
  %v2357 = vpop.xlane.xlu0 %2356
  %v2358 = vsel %vm2225, %v2313, 0.0
  %v2359 = vadd.f32 %v2312, %v2358
  %2360 = vadd.xlane.f32.xlu0 %v2359
  %v2361 = vpop.xlane.xlu0 %2360
  %v2362 = vsel %vm2225, %v2315, 0.0
  %v2363 = vadd.f32 %v2314, %v2362
  %2364 = vadd.xlane.f32.xlu0 %v2363
  %v2365 = vpop.xlane.xlu0 %2364
  %v2366 = vsel %vm2225, %v2317, 0.0
  %v2367 = vadd.f32 %v2316, %v2366
  %2368 = vadd.xlane.f32.xlu0 %v2367
  %v2369 = vpop.xlane.xlu0 %2368
  %v2370 = vsel %vm2225, %v2319, 0.0
  %v2371 = vadd.f32 %v2318, %v2370
  %2372 = vadd.xlane.f32.xlu0 %v2371
  %v2373 = vpop.xlane.xlu0 %2372
  %v2374 = vsel %vm2225, %v2321, 0.0
  %v2375 = vadd.f32 %v2320, %v2374
  %2376 = vadd.xlane.f32.xlu0 %v2375
  %v2377 = vpop.xlane.xlu0 %2376
  %v2378 = vsel %vm2225, %v2323, 0.0
  %v2379 = vadd.f32 %v2322, %v2378
  %2380 = vadd.xlane.f32.xlu0 %v2379
  %v2381 = vpop.xlane.xlu0 %2380
  %v2382 = vsel %vm2225, %v2325, 0.0
  %v2383 = vadd.f32 %v2324, %v2382
  %2384 = vadd.xlane.f32.xlu0 %v2383
  %v2385 = vpop.xlane.xlu0 %2384
  %v2386 = vsel %vm2225, %v2327, 0.0
  %v2387 = vadd.f32 %v2326, %v2386
  %2388 = vadd.xlane.f32.xlu0 %v2387
  %v2389 = vpop.xlane.xlu0 %2388
  %v2390 = vsel %vm2225, %v2329, 0.0
  %v2391 = vadd.f32 %v2328, %v2390
  %2392 = vadd.xlane.f32.xlu0 %v2391
  %v2393 = vpop.xlane.xlu0 %2392
  %v2394 = vsel %vm2225, %v2331, 0.0
  %v2395 = vadd.f32 %v2330, %v2394
  %2396 = vadd.xlane.f32.xlu0 %v2395
  %v2397 = vpop.xlane.xlu0 %2396
  %v2398 = vsel %vm2225, %v2333, 0.0
  %v2399 = vadd.f32 %v2332, %v2398
  %2400 = vadd.xlane.f32.xlu0 %v2399
  %v2401 = vpop.xlane.xlu0 %2400
  %v2402 = vsel %vm2225, %v2335, 0.0
  %v2403 = vadd.f32 %v2334, %v2402
  %2404 = vadd.xlane.f32.xlu0 %v2403
  %v2405 = vpop.xlane.xlu0 %2404
  %v2406 = vsel %vm2225, %v2337, 0.0
  %v2407 = vadd.f32 %v2336, %v2406
  %2408 = vadd.xlane.f32.xlu0 %v2407
  %v2409 = vpop.xlane.xlu0 %2408
  %v2410 = vsel %vm2225, %v2339, 0.0
  %v2411 = vadd.f32 %v2338, %v2410
  %2412 = vadd.xlane.f32.xlu0 %v2411
  %v2413 = vpop.xlane.xlu0 %2412
  %v2414 = vsel %vm2225, %v2341, 0.0
  %v2415 = vadd.f32 %v2340, %v2414
  %2416 = vadd.xlane.f32.xlu0 %v2415
  %v2417 = vpop.xlane.xlu0 %2416
  %v2418 = vsel %vm2225, %v2343, 0.0
  %v2419 = vadd.f32 %v2342, %v2418
  %2420 = vadd.xlane.f32.xlu0 %v2419
  %v2421 = vpop.xlane.xlu0 %2420
  %v2422 = vsel %vm2225, %v2345, 0.0
  %v2423 = vadd.f32 %v2344, %v2422
  %2424 = vadd.xlane.f32.xlu0 %v2423
  %v2425 = vpop.xlane.xlu0 %2424
  %v2426 = vmul.f32 %v2229, 0.0051020407
  %v2427 = vmul.f32 %v2233, 0.0051020407
  %v2428 = vmul.f32 %v2237, 0.0051020407
  %v2429 = vmul.f32 %v2241, 0.0051020407
  %v2430 = vmul.f32 %v2245, 0.0051020407
  %v2431 = vmul.f32 %v2249, 0.0051020407
  %v2432 = vmul.f32 %v2253, 0.0051020407
  %v2433 = vmul.f32 %v2257, 0.0051020407
  %v2434 = vmul.f32 %v2261, 0.0051020407
  %v2435 = vmul.f32 %v2265, 0.0051020407
  %v2436 = vmul.f32 %v2269, 0.0051020407
  %v2437 = vmul.f32 %v2273, 0.0051020407
  %v2438 = vmul.f32 %v2277, 0.0051020407
  %v2439 = vmul.f32 %v2281, 0.0051020407
  %v2440 = vmul.f32 %v2285, 0.0051020407
  %v2441 = vmul.f32 %v2289, 0.0051020407
  %v2442 = vmul.f32 %v2293, 0.0051020407
  %v2443 = vmul.f32 %v2297, 0.0051020407
  %v2444 = vmul.f32 %v2301, 0.0051020407
  %v2445 = vmul.f32 %v2305, 0.0051020407
  %v2446 = vmul.f32 %v2349, 0.0051020407
  %v2447 = vmul.f32 %v2353, 0.0051020407
  %v2448 = vmul.f32 %v2357, 0.0051020407
  %v2449 = vmul.f32 %v2361, 0.0051020407
  %v2450 = vmul.f32 %v2365, 0.0051020407
  %v2451 = vmul.f32 %v2369, 0.0051020407
  %v2452 = vmul.f32 %v2373, 0.0051020407
  %v2453 = vmul.f32 %v2377, 0.0051020407
  %v2454 = vmul.f32 %v2381, 0.0051020407
  %v2455 = vmul.f32 %v2385, 0.0051020407
  %v2456 = vmul.f32 %v2389, 0.0051020407
  %v2457 = vmul.f32 %v2393, 0.0051020407
  %v2458 = vmul.f32 %v2397, 0.0051020407
  %v2459 = vmul.f32 %v2401, 0.0051020407
  %v2460 = vmul.f32 %v2405, 0.0051020407
  %v2461 = vmul.f32 %v2409, 0.0051020407
  %v2462 = vmul.f32 %v2413, 0.0051020407
  %v2463 = vmul.f32 %v2417, 0.0051020407
  %v2464 = vmul.f32 %v2421, 0.0051020407
  %v2465 = vmul.f32 %v2425, 0.0051020407
  %v2466 = vmul.f32 %v2426, %v2426
  %v2467 = vmul.f32 %v2427, %v2427
  %v2468 = vmul.f32 %v2428, %v2428
  %v2469 = vmul.f32 %v2429, %v2429
  %v2470 = vmul.f32 %v2430, %v2430
  %v2471 = vmul.f32 %v2431, %v2431
  %v2472 = vmul.f32 %v2432, %v2432
  %v2473 = vmul.f32 %v2433, %v2433
  %v2474 = vmul.f32 %v2434, %v2434
  %v2475 = vmul.f32 %v2435, %v2435
  %v2476 = vmul.f32 %v2436, %v2436
  %v2477 = vmul.f32 %v2437, %v2437
  %v2478 = vmul.f32 %v2438, %v2438
  %v2479 = vmul.f32 %v2439, %v2439
  %v2480 = vmul.f32 %v2440, %v2440
  %v2481 = vmul.f32 %v2441, %v2441
  %v2482 = vmul.f32 %v2442, %v2442
  %v2483 = vmul.f32 %v2443, %v2443
  %v2484 = vmul.f32 %v2444, %v2444
  %v2485 = vmul.f32 %v2445, %v2445
  %v2486 = vsub.f32 %v2446, %v2466
  %v2487 = vsub.f32 %v2447, %v2467
  %v2488 = vsub.f32 %v2448, %v2468
  %v2489 = vsub.f32 %v2449, %v2469
  %v2490 = vsub.f32 %v2450, %v2470
  %v2491 = vsub.f32 %v2451, %v2471
  %v2492 = vsub.f32 %v2452, %v2472
  %v2493 = vsub.f32 %v2453, %v2473
  %v2494 = vsub.f32 %v2454, %v2474
  %v2495 = vsub.f32 %v2455, %v2475
  %v2496 = vsub.f32 %v2456, %v2476
  %v2497 = vsub.f32 %v2457, %v2477
  %v2498 = vsub.f32 %v2458, %v2478
  %v2499 = vsub.f32 %v2459, %v2479
  %v2500 = vsub.f32 %v2460, %v2480
  %v2501 = vsub.f32 %v2461, %v2481
  %v2502 = vsub.f32 %v2462, %v2482
  %v2503 = vsub.f32 %v2463, %v2483
  %v2504 = vsub.f32 %v2464, %v2484
  %v2505 = vsub.f32 %v2465, %v2485
  %v2506 = vmax.f32 %v2486, 0.0
  %v2507 = vmax.f32 %v2487, 0.0
  %v2508 = vmax.f32 %v2488, 0.0
  %v2509 = vmax.f32 %v2489, 0.0
  %v2510 = vmax.f32 %v2490, 0.0
  %v2511 = vmax.f32 %v2491, 0.0
  %v2512 = vmax.f32 %v2492, 0.0
  %v2513 = vmax.f32 %v2493, 0.0
  %v2514 = vmax.f32 %v2494, 0.0
  %v2515 = vmax.f32 %v2495, 0.0
  %v2516 = vmax.f32 %v2496, 0.0
  %v2517 = vmax.f32 %v2497, 0.0
  %v2518 = vmax.f32 %v2498, 0.0
  %v2519 = vmax.f32 %v2499, 0.0
  %v2520 = vmax.f32 %v2500, 0.0
  %v2521 = vmax.f32 %v2501, 0.0
  %v2522 = vmax.f32 %v2502, 0.0
  %v2523 = vmax.f32 %v2503, 0.0
  %v2524 = vmax.f32 %v2504, 0.0
  %v2525 = vmax.f32 %v2505, 0.0
  %v2526 = vadd.f32 %v2506, 1e-05
  %v2527 = vadd.f32 %v2507, 1e-05
  %v2528 = vadd.f32 %v2508, 1e-05
  %v2529 = vadd.f32 %v2509, 1e-05
  %v2530 = vadd.f32 %v2510, 1e-05
  %v2531 = vadd.f32 %v2511, 1e-05
  %v2532 = vadd.f32 %v2512, 1e-05
  %v2533 = vadd.f32 %v2513, 1e-05
  %v2534 = vadd.f32 %v2514, 1e-05
  %v2535 = vadd.f32 %v2515, 1e-05
  %v2536 = vadd.f32 %v2516, 1e-05
  %v2537 = vadd.f32 %v2517, 1e-05
  %v2538 = vadd.f32 %v2518, 1e-05
  %v2539 = vadd.f32 %v2519, 1e-05
  %v2540 = vadd.f32 %v2520, 1e-05
  %v2541 = vadd.f32 %v2521, 1e-05
  %v2542 = vadd.f32 %v2522, 1e-05
  %v2543 = vadd.f32 %v2523, 1e-05
  %v2544 = vadd.f32 %v2524, 1e-05
  %v2545 = vadd.f32 %v2525, 1e-05
  %v2546 = vrsqrt.pop %v2526
  %v2547 = vmul.f32 %v2546, %v2526
  %v2548 = vmul.f32 %v2547, %v2546
  %v2549 = vmul.f32 0.5, %v2548
  %v2550 = vsub.f32 1.5, %v2549
  %v2551 = vmul.f32 %v2546, %v2550
  %vm2552 = vweird.f32 %v2526
  %vm2553 = vweird.f32 %v2546
  %vm2554 = vmor %vm2552, %vm2553
  %v2555 = vsel %vm2554, %v2546, %v2551
  %v2556 = vrsqrt.pop %v2527
  %v2557 = vmul.f32 %v2556, %v2527
  %v2558 = vmul.f32 %v2557, %v2556
  %v2559 = vmul.f32 0.5, %v2558
  %v2560 = vsub.f32 1.5, %v2559
  %v2561 = vmul.f32 %v2556, %v2560
  %vm2562 = vweird.f32 %v2527
  %vm2563 = vweird.f32 %v2556
  %vm2564 = vmor %vm2562, %vm2563
  %v2565 = vsel %vm2564, %v2556, %v2561
  %v2566 = vrsqrt.pop %v2528
  %v2567 = vmul.f32 %v2566, %v2528
  %v2568 = vmul.f32 %v2567, %v2566
  %v2569 = vmul.f32 0.5, %v2568
  %v2570 = vsub.f32 1.5, %v2569
  %v2571 = vmul.f32 %v2566, %v2570
  %vm2572 = vweird.f32 %v2528
  %vm2573 = vweird.f32 %v2566
  %vm2574 = vmor %vm2572, %vm2573
  %v2575 = vsel %vm2574, %v2566, %v2571
  %v2576 = vrsqrt.pop %v2529
  %v2577 = vmul.f32 %v2576, %v2529
  %v2578 = vmul.f32 %v2577, %v2576
  %v2579 = vmul.f32 0.5, %v2578
  %v2580 = vsub.f32 1.5, %v2579
  %v2581 = vmul.f32 %v2576, %v2580
  %vm2582 = vweird.f32 %v2529
  %vm2583 = vweird.f32 %v2576
  %vm2584 = vmor %vm2582, %vm2583
  %v2585 = vsel %vm2584, %v2576, %v2581
  %v2586 = vrsqrt.pop %v2530
  %v2587 = vmul.f32 %v2586, %v2530
  %v2588 = vmul.f32 %v2587, %v2586
  %v2589 = vmul.f32 0.5, %v2588
  %v2590 = vsub.f32 1.5, %v2589
  %v2591 = vmul.f32 %v2586, %v2590
  %vm2592 = vweird.f32 %v2530
  %vm2593 = vweird.f32 %v2586
  %vm2594 = vmor %vm2592, %vm2593
  %v2595 = vsel %vm2594, %v2586, %v2591
  %v2596 = vrsqrt.pop %v2531
  %v2597 = vmul.f32 %v2596, %v2531
  %v2598 = vmul.f32 %v2597, %v2596
  %v2599 = vmul.f32 0.5, %v2598
  %v2600 = vsub.f32 1.5, %v2599
  %v2601 = vmul.f32 %v2596, %v2600
  %vm2602 = vweird.f32 %v2531
  %vm2603 = vweird.f32 %v2596
  %vm2604 = vmor %vm2602, %vm2603
  %v2605 = vsel %vm2604, %v2596, %v2601
  %v2606 = vrsqrt.pop %v2532
  %v2607 = vmul.f32 %v2606, %v2532
  %v2608 = vmul.f32 %v2607, %v2606
  %v2609 = vmul.f32 0.5, %v2608
  %v2610 = vsub.f32 1.5, %v2609
  %v2611 = vmul.f32 %v2606, %v2610
  %vm2612 = vweird.f32 %v2532
  %vm2613 = vweird.f32 %v2606
  %vm2614 = vmor %vm2612, %vm2613
  %v2615 = vsel %vm2614, %v2606, %v2611
  %v2616 = vrsqrt.pop %v2533
  %v2617 = vmul.f32 %v2616, %v2533
  %v2618 = vmul.f32 %v2617, %v2616
  %v2619 = vmul.f32 0.5, %v2618
  %v2620 = vsub.f32 1.5, %v2619
  %v2621 = vmul.f32 %v2616, %v2620
  %vm2622 = vweird.f32 %v2533
  %vm2623 = vweird.f32 %v2616
  %vm2624 = vmor %vm2622, %vm2623
  %v2625 = vsel %vm2624, %v2616, %v2621
  %v2626 = vrsqrt.pop %v2534
  %v2627 = vmul.f32 %v2626, %v2534
  %v2628 = vmul.f32 %v2627, %v2626
  %v2629 = vmul.f32 0.5, %v2628
  %v2630 = vsub.f32 1.5, %v2629
  %v2631 = vmul.f32 %v2626, %v2630
  %vm2632 = vweird.f32 %v2534
  %vm2633 = vweird.f32 %v2626
  %vm2634 = vmor %vm2632, %vm2633
  %v2635 = vsel %vm2634, %v2626, %v2631
  %v2636 = vrsqrt.pop %v2535
  %v2637 = vmul.f32 %v2636, %v2535
  %v2638 = vmul.f32 %v2637, %v2636
  %v2639 = vmul.f32 0.5, %v2638
  %v2640 = vsub.f32 1.5, %v2639
  %v2641 = vmul.f32 %v2636, %v2640
  %vm2642 = vweird.f32 %v2535
  %vm2643 = vweird.f32 %v2636
  %vm2644 = vmor %vm2642, %vm2643
  %v2645 = vsel %vm2644, %v2636, %v2641
  %v2646 = vrsqrt.pop %v2536
  %v2647 = vmul.f32 %v2646, %v2536
  %v2648 = vmul.f32 %v2647, %v2646
  %v2649 = vmul.f32 0.5, %v2648
  %v2650 = vsub.f32 1.5, %v2649
  %v2651 = vmul.f32 %v2646, %v2650
  %vm2652 = vweird.f32 %v2536
  %vm2653 = vweird.f32 %v2646
  %vm2654 = vmor %vm2652, %vm2653
  %v2655 = vsel %vm2654, %v2646, %v2651
  %v2656 = vrsqrt.pop %v2537
  %v2657 = vmul.f32 %v2656, %v2537
  %v2658 = vmul.f32 %v2657, %v2656
  %v2659 = vmul.f32 0.5, %v2658
  %v2660 = vsub.f32 1.5, %v2659
  %v2661 = vmul.f32 %v2656, %v2660
  %vm2662 = vweird.f32 %v2537
  %vm2663 = vweird.f32 %v2656
  %vm2664 = vmor %vm2662, %vm2663
  %v2665 = vsel %vm2664, %v2656, %v2661
  %v2666 = vrsqrt.pop %v2538
  %v2667 = vmul.f32 %v2666, %v2538
  %v2668 = vmul.f32 %v2667, %v2666
  %v2669 = vmul.f32 0.5, %v2668
  %v2670 = vsub.f32 1.5, %v2669
  %v2671 = vmul.f32 %v2666, %v2670
  %vm2672 = vweird.f32 %v2538
  %vm2673 = vweird.f32 %v2666
  %vm2674 = vmor %vm2672, %vm2673
  %v2675 = vsel %vm2674, %v2666, %v2671
  %v2676 = vrsqrt.pop %v2539
  %v2677 = vmul.f32 %v2676, %v2539
  %v2678 = vmul.f32 %v2677, %v2676
  %v2679 = vmul.f32 0.5, %v2678
  %v2680 = vsub.f32 1.5, %v2679
  %v2681 = vmul.f32 %v2676, %v2680
  %vm2682 = vweird.f32 %v2539
  %vm2683 = vweird.f32 %v2676
  %vm2684 = vmor %vm2682, %vm2683
  %v2685 = vsel %vm2684, %v2676, %v2681
  %v2686 = vrsqrt.pop %v2540
  %v2687 = vmul.f32 %v2686, %v2540
  %v2688 = vmul.f32 %v2687, %v2686
  %v2689 = vmul.f32 0.5, %v2688
  %v2690 = vsub.f32 1.5, %v2689
  %v2691 = vmul.f32 %v2686, %v2690
  %vm2692 = vweird.f32 %v2540
  %vm2693 = vweird.f32 %v2686
  %vm2694 = vmor %vm2692, %vm2693
  %v2695 = vsel %vm2694, %v2686, %v2691
  %v2696 = vrsqrt.pop %v2541
  %v2697 = vmul.f32 %v2696, %v2541
  %v2698 = vmul.f32 %v2697, %v2696
  %v2699 = vmul.f32 0.5, %v2698
  %v2700 = vsub.f32 1.5, %v2699
  %v2701 = vmul.f32 %v2696, %v2700
  %vm2702 = vweird.f32 %v2541
  %vm2703 = vweird.f32 %v2696
  %vm2704 = vmor %vm2702, %vm2703
  %v2705 = vsel %vm2704, %v2696, %v2701
  %v2706 = vrsqrt.pop %v2542
  %v2707 = vmul.f32 %v2706, %v2542
  %v2708 = vmul.f32 %v2707, %v2706
  %v2709 = vmul.f32 0.5, %v2708
  %v2710 = vsub.f32 1.5, %v2709
  %v2711 = vmul.f32 %v2706, %v2710
  %vm2712 = vweird.f32 %v2542
  %vm2713 = vweird.f32 %v2706
  %vm2714 = vmor %vm2712, %vm2713
  %v2715 = vsel %vm2714, %v2706, %v2711
  %v2716 = vrsqrt.pop %v2543
  %v2717 = vmul.f32 %v2716, %v2543
  %v2718 = vmul.f32 %v2717, %v2716
  %v2719 = vmul.f32 0.5, %v2718
  %v2720 = vsub.f32 1.5, %v2719
  %v2721 = vmul.f32 %v2716, %v2720
  %vm2722 = vweird.f32 %v2543
  %vm2723 = vweird.f32 %v2716
  %vm2724 = vmor %vm2722, %vm2723
  %v2725 = vsel %vm2724, %v2716, %v2721
  %v2726 = vrsqrt.pop %v2544
  %v2727 = vmul.f32 %v2726, %v2544
  %v2728 = vmul.f32 %v2727, %v2726
  %v2729 = vmul.f32 0.5, %v2728
  %v2730 = vsub.f32 1.5, %v2729
  %v2731 = vmul.f32 %v2726, %v2730
  %vm2732 = vweird.f32 %v2544
  %vm2733 = vweird.f32 %v2726
  %vm2734 = vmor %vm2732, %vm2733
  %v2735 = vsel %vm2734, %v2726, %v2731
  %v2736 = vrsqrt.pop %v2545
  %v2737 = vmul.f32 %v2736, %v2545
  %v2738 = vmul.f32 %v2737, %v2736
  %v2739 = vmul.f32 0.5, %v2738
  %v2740 = vsub.f32 1.5, %v2739
  %v2741 = vmul.f32 %v2736, %v2740
  %vm2742 = vweird.f32 %v2545
  %vm2743 = vweird.f32 %v2736
  %vm2744 = vmor %vm2742, %vm2743
  %v2745 = vsel %vm2744, %v2736, %v2741
  %v2746 = vld [vmem:[%s5] sm:$0xff]
  %v2747 = vld [vmem:[%s5 + $0x8] sm:$0xff]
  %v2748 = vld [vmem:[%s5 + $0x10] sm:$0xff]
  %v2749 = vld [vmem:[%s5 + $0x18] sm:$0xff]
  %v2750 = vld [vmem:[%s5 + $0x20] sm:$0xff]
  %v2751 = vld [vmem:[%s5 + $0x28] sm:$0xff]
  %v2752 = vld [vmem:[%s5 + $0x30] sm:$0xff]
  %v2753 = vld [vmem:[%s5 + $0x38] sm:$0xff]
  %v2754 = vld [vmem:[%s5 + $0x40] sm:$0xff]
  %v2755 = vld [vmem:[%s5 + $0x48] sm:$0xff]
  %v2756 = vld [vmem:[%s5 + $0x50] sm:$0xff]
  %v2757 = vld [vmem:[%s5 + $0x58] sm:$0xff]
  %v2758 = vld [vmem:[%s5 + $0x60] sm:$0xff]
  %v2759 = vld [vmem:[%s5 + $0x68] sm:$0xff]
  %v2760 = vld [vmem:[%s5 + $0x70] sm:$0xff]
  %v2761 = vld [vmem:[%s5 + $0x78] sm:$0xff]
  %v2762 = vld [vmem:[%s5 + $0x80] sm:$0xff]
  %v2763 = vld [vmem:[%s5 + $0x88] sm:$0xff]
  %v2764 = vld [vmem:[%s5 + $0x90] sm:$0xff]
  %v2765 = vld [vmem:[%s5 + $0x98] sm:$0xff]
  %v2766 = vmul.f32 %v2555, %v2746
  %v2767 = vmul.f32 %v2565, %v2747
  %v2768 = vmul.f32 %v2575, %v2748
  %v2769 = vmul.f32 %v2585, %v2749
  %v2770 = vmul.f32 %v2595, %v2750
  %v2771 = vmul.f32 %v2605, %v2751
  %v2772 = vmul.f32 %v2615, %v2752
  %v2773 = vmul.f32 %v2625, %v2753
  %v2774 = vmul.f32 %v2635, %v2754
  %v2775 = vmul.f32 %v2645, %v2755
  %v2776 = vmul.f32 %v2655, %v2756
  %v2777 = vmul.f32 %v2665, %v2757
  %v2778 = vmul.f32 %v2675, %v2758
  %v2779 = vmul.f32 %v2685, %v2759
  %v2780 = vmul.f32 %v2695, %v2760
  %v2781 = vmul.f32 %v2705, %v2761
  %v2782 = vmul.f32 %v2715, %v2762
  %v2783 = vmul.f32 %v2725, %v2763
  %v2784 = vmul.f32 %v2735, %v2764
  %v2785 = vmul.f32 %v2745, %v2765
  %v2786 = vsub.f32 %v1704, %v2426
  %v2787 = vsub.f32 %v2176, %v2426
  %v2788 = vsub.f32 %v1706, %v2427
  %v2789 = vsub.f32 %v2178, %v2427
  %v2790 = vsub.f32 %v1709, %v2428
  %v2791 = vsub.f32 %v2181, %v2428
  %v2792 = vsub.f32 %v1711, %v2429
  %v2793 = vsub.f32 %v2183, %v2429
  %v2794 = vsub.f32 %v1714, %v2430
  %v2795 = vsub.f32 %v2186, %v2430
  %v2796 = vsub.f32 %v1716, %v2431
  %v2797 = vsub.f32 %v2188, %v2431
  %v2798 = vsub.f32 %v1719, %v2432
  %v2799 = vsub.f32 %v2191, %v2432
  %v2800 = vsub.f32 %v1721, %v2433
  %v2801 = vsub.f32 %v2193, %v2433
  %v2802 = vsub.f32 %v1724, %v2434
  %v2803 = vsub.f32 %v2196, %v2434
  %v2804 = vsub.f32 %v1726, %v2435
  %v2805 = vsub.f32 %v2198, %v2435
  %v2806 = vsub.f32 %v1729, %v2436
  %v2807 = vsub.f32 %v2201, %v2436
  %v2808 = vsub.f32 %v1731, %v2437
  %v2809 = vsub.f32 %v2203, %v2437
  %v2810 = vsub.f32 %v1734, %v2438
  %v2811 = vsub.f32 %v2206, %v2438
  %v2812 = vsub.f32 %v1736, %v2439
  %v2813 = vsub.f32 %v2208, %v2439
  %v2814 = vsub.f32 %v1739, %v2440
  %v2815 = vsub.f32 %v2211, %v2440
  %v2816 = vsub.f32 %v1741, %v2441
  %v2817 = vsub.f32 %v2213, %v2441
  %v2818 = vsub.f32 %v1744, %v2442
  %v2819 = vsub.f32 %v2216, %v2442
  %v2820 = vsub.f32 %v1746, %v2443
  %v2821 = vsub.f32 %v2218, %v2443
  %v2822 = vsub.f32 %v1749, %v2444
  %v2823 = vsub.f32 %v2221, %v2444
  %v2824 = vsub.f32 %v1751, %v2445
  %v2825 = vsub.f32 %v2223, %v2445
  %2827 = vset.pattern.permute.xlu0 0
  %2828 = vperm.xlu0 %2827, %v2766
  %v2829 = vpop.permute.xlu0 %2828
  %2832 = vset.pattern.permute.xlu0 0
  %2833 = vperm.xlu0 %2832, %v2767
  %v2834 = vpop.permute.xlu0 %2833
  %2837 = vset.pattern.permute.xlu0 0
  %2838 = vperm.xlu0 %2837, %v2768
  %v2839 = vpop.permute.xlu0 %2838
  %2842 = vset.pattern.permute.xlu0 0
  %2843 = vperm.xlu0 %2842, %v2769
  %v2844 = vpop.permute.xlu0 %2843
  %2847 = vset.pattern.permute.xlu0 0
  %2848 = vperm.xlu0 %2847, %v2770
  %v2849 = vpop.permute.xlu0 %2848
  %2852 = vset.pattern.permute.xlu0 0
  %2853 = vperm.xlu0 %2852, %v2771
  %v2854 = vpop.permute.xlu0 %2853
  %2857 = vset.pattern.permute.xlu0 0
  %2858 = vperm.xlu0 %2857, %v2772
  %v2859 = vpop.permute.xlu0 %2858
  %2862 = vset.pattern.permute.xlu0 0
  %2863 = vperm.xlu0 %2862, %v2773
  %v2864 = vpop.permute.xlu0 %2863
  %2867 = vset.pattern.permute.xlu0 0
  %2868 = vperm.xlu0 %2867, %v2774
  %v2869 = vpop.permute.xlu0 %2868
  %2872 = vset.pattern.permute.xlu0 0
  %2873 = vperm.xlu0 %2872, %v2775
  %v2874 = vpop.permute.xlu0 %2873
  %2877 = vset.pattern.permute.xlu0 0
  %2878 = vperm.xlu0 %2877, %v2776
  %v2879 = vpop.permute.xlu0 %2878
  %2882 = vset.pattern.permute.xlu0 0
  %2883 = vperm.xlu0 %2882, %v2777
  %v2884 = vpop.permute.xlu0 %2883
  %2887 = vset.pattern.permute.xlu0 0
  %2888 = vperm.xlu0 %2887, %v2778
  %v2889 = vpop.permute.xlu0 %2888
  %2892 = vset.pattern.permute.xlu0 0
  %2893 = vperm.xlu0 %2892, %v2779
  %v2894 = vpop.permute.xlu0 %2893
  %2897 = vset.pattern.permute.xlu0 0
  %2898 = vperm.xlu0 %2897, %v2780
  %v2899 = vpop.permute.xlu0 %2898
  %2902 = vset.pattern.permute.xlu0 0
  %2903 = vperm.xlu0 %2902, %v2781
  %v2904 = vpop.permute.xlu0 %2903
  %2907 = vset.pattern.permute.xlu0 0
  %2908 = vperm.xlu0 %2907, %v2782
  %v2909 = vpop.permute.xlu0 %2908
  %2912 = vset.pattern.permute.xlu0 0
  %2913 = vperm.xlu0 %2912, %v2783
  %v2914 = vpop.permute.xlu0 %2913
  %2917 = vset.pattern.permute.xlu0 0
  %2918 = vperm.xlu0 %2917, %v2784
  %v2919 = vpop.permute.xlu0 %2918
  %2922 = vset.pattern.permute.xlu0 0
  %2923 = vperm.xlu0 %2922, %v2785
  %v2924 = vpop.permute.xlu0 %2923
  %v2926 = vmul.f32 %v2786, %v2829
  %v2927 = vmul.f32 %v2787, %v2829
  %v2928 = vmul.f32 %v2788, %v2834
  %v2929 = vmul.f32 %v2789, %v2834
  %v2930 = vmul.f32 %v2790, %v2839
  %v2931 = vmul.f32 %v2791, %v2839
  %v2932 = vmul.f32 %v2792, %v2844
  %v2933 = vmul.f32 %v2793, %v2844
  %v2934 = vmul.f32 %v2794, %v2849
  %v2935 = vmul.f32 %v2795, %v2849
  %v2936 = vmul.f32 %v2796, %v2854
  %v2937 = vmul.f32 %v2797, %v2854
  %v2938 = vmul.f32 %v2798, %v2859
  %v2939 = vmul.f32 %v2799, %v2859
  %v2940 = vmul.f32 %v2800, %v2864
  %v2941 = vmul.f32 %v2801, %v2864
  %v2942 = vmul.f32 %v2802, %v2869
  %v2943 = vmul.f32 %v2803, %v2869
  %v2944 = vmul.f32 %v2804, %v2874
  %v2945 = vmul.f32 %v2805, %v2874
  %v2946 = vmul.f32 %v2806, %v2879
  %v2947 = vmul.f32 %v2807, %v2879
  %v2948 = vmul.f32 %v2808, %v2884
  %v2949 = vmul.f32 %v2809, %v2884
  %v2950 = vmul.f32 %v2810, %v2889
  %v2951 = vmul.f32 %v2811, %v2889
  %v2952 = vmul.f32 %v2812, %v2894
  %v2953 = vmul.f32 %v2813, %v2894
  %v2954 = vmul.f32 %v2814, %v2899
  %v2955 = vmul.f32 %v2815, %v2899
  %v2956 = vmul.f32 %v2816, %v2904
  %v2957 = vmul.f32 %v2817, %v2904
  %v2958 = vmul.f32 %v2818, %v2909
  %v2959 = vmul.f32 %v2819, %v2909
  %v2960 = vmul.f32 %v2820, %v2914
  %v2961 = vmul.f32 %v2821, %v2914
  %v2962 = vmul.f32 %v2822, %v2919
  %v2963 = vmul.f32 %v2823, %v2919
  %v2964 = vmul.f32 %v2824, %v2924
  %v2965 = vmul.f32 %v2825, %v2924
  %v2966 = vld [vmem:[%s6] sm:$0xff]
  %v2967 = vld [vmem:[%s6 + $0x8] sm:$0xff]
  %v2968 = vld [vmem:[%s6 + $0x10] sm:$0xff]
  %v2969 = vld [vmem:[%s6 + $0x18] sm:$0xff]
  %v2970 = vld [vmem:[%s6 + $0x20] sm:$0xff]
  %v2971 = vld [vmem:[%s6 + $0x28] sm:$0xff]
  %v2972 = vld [vmem:[%s6 + $0x30] sm:$0xff]
  %v2973 = vld [vmem:[%s6 + $0x38] sm:$0xff]
  %v2974 = vld [vmem:[%s6 + $0x40] sm:$0xff]
  %v2975 = vld [vmem:[%s6 + $0x48] sm:$0xff]
  %v2976 = vld [vmem:[%s6 + $0x50] sm:$0xff]
  %v2977 = vld [vmem:[%s6 + $0x58] sm:$0xff]
  %v2978 = vld [vmem:[%s6 + $0x60] sm:$0xff]
  %v2979 = vld [vmem:[%s6 + $0x68] sm:$0xff]
  %v2980 = vld [vmem:[%s6 + $0x70] sm:$0xff]
  %v2981 = vld [vmem:[%s6 + $0x78] sm:$0xff]
  %v2982 = vld [vmem:[%s6 + $0x80] sm:$0xff]
  %v2983 = vld [vmem:[%s6 + $0x88] sm:$0xff]
  %v2984 = vld [vmem:[%s6 + $0x90] sm:$0xff]
  %v2985 = vld [vmem:[%s6 + $0x98] sm:$0xff]
  %2987 = vset.pattern.permute.xlu0 0
  %2988 = vperm.xlu0 %2987, %v2966
  %v2989 = vpop.permute.xlu0 %2988
  %2992 = vset.pattern.permute.xlu0 0
  %2993 = vperm.xlu0 %2992, %v2967
  %v2994 = vpop.permute.xlu0 %2993
  %2997 = vset.pattern.permute.xlu0 0
  %2998 = vperm.xlu0 %2997, %v2968
  %v2999 = vpop.permute.xlu0 %2998
  %3002 = vset.pattern.permute.xlu0 0
  %3003 = vperm.xlu0 %3002, %v2969
  %v3004 = vpop.permute.xlu0 %3003
  %3007 = vset.pattern.permute.xlu0 0
  %3008 = vperm.xlu0 %3007, %v2970
  %v3009 = vpop.permute.xlu0 %3008
  %3012 = vset.pattern.permute.xlu0 0
  %3013 = vperm.xlu0 %3012, %v2971
  %v3014 = vpop.permute.xlu0 %3013
  %3017 = vset.pattern.permute.xlu0 0
  %3018 = vperm.xlu0 %3017, %v2972
  %v3019 = vpop.permute.xlu0 %3018
  %3022 = vset.pattern.permute.xlu0 0
  %3023 = vperm.xlu0 %3022, %v2973
  %v3024 = vpop.permute.xlu0 %3023
  %3027 = vset.pattern.permute.xlu0 0
  %3028 = vperm.xlu0 %3027, %v2974
  %v3029 = vpop.permute.xlu0 %3028
  %3032 = vset.pattern.permute.xlu0 0
  %3033 = vperm.xlu0 %3032, %v2975
  %v3034 = vpop.permute.xlu0 %3033
  %3037 = vset.pattern.permute.xlu0 0
  %3038 = vperm.xlu0 %3037, %v2976
  %v3039 = vpop.permute.xlu0 %3038
  %3042 = vset.pattern.permute.xlu0 0
  %3043 = vperm.xlu0 %3042, %v2977
  %v3044 = vpop.permute.xlu0 %3043
  %3047 = vset.pattern.permute.xlu0 0
  %3048 = vperm.xlu0 %3047, %v2978
  %v3049 = vpop.permute.xlu0 %3048
  %3052 = vset.pattern.permute.xlu0 0
  %3053 = vperm.xlu0 %3052, %v2979
  %v3054 = vpop.permute.xlu0 %3053
  %3057 = vset.pattern.permute.xlu0 0
  %3058 = vperm.xlu0 %3057, %v2980
  %v3059 = vpop.permute.xlu0 %3058
  %3062 = vset.pattern.permute.xlu0 0
  %3063 = vperm.xlu0 %3062, %v2981
  %v3064 = vpop.permute.xlu0 %3063
  %3067 = vset.pattern.permute.xlu0 0
  %3068 = vperm.xlu0 %3067, %v2982
  %v3069 = vpop.permute.xlu0 %3068
  %3072 = vset.pattern.permute.xlu0 0
  %3073 = vperm.xlu0 %3072, %v2983
  %v3074 = vpop.permute.xlu0 %3073
  %3077 = vset.pattern.permute.xlu0 0
  %3078 = vperm.xlu0 %3077, %v2984
  %v3079 = vpop.permute.xlu0 %3078
  %3082 = vset.pattern.permute.xlu0 0
  %3083 = vperm.xlu0 %3082, %v2985
  %v3084 = vpop.permute.xlu0 %3083
  %v3086 = vadd.f32 %v2926, %v2989
  %v3087 = vadd.f32 %v2927, %v2989
  %v3088 = vadd.f32 %v2928, %v2994
  %v3089 = vadd.f32 %v2929, %v2994
  %v3090 = vadd.f32 %v2930, %v2999
  %v3091 = vadd.f32 %v2931, %v2999
  %v3092 = vadd.f32 %v2932, %v3004
  %v3093 = vadd.f32 %v2933, %v3004
  %v3094 = vadd.f32 %v2934, %v3009
  %v3095 = vadd.f32 %v2935, %v3009
  %v3096 = vadd.f32 %v2936, %v3014
  %v3097 = vadd.f32 %v2937, %v3014
  %v3098 = vadd.f32 %v2938, %v3019
  %v3099 = vadd.f32 %v2939, %v3019
  %v3100 = vadd.f32 %v2940, %v3024
  %v3101 = vadd.f32 %v2941, %v3024
  %v3102 = vadd.f32 %v2942, %v3029
  %v3103 = vadd.f32 %v2943, %v3029
  %v3104 = vadd.f32 %v2944, %v3034
  %v3105 = vadd.f32 %v2945, %v3034
  %v3106 = vadd.f32 %v2946, %v3039
  %v3107 = vadd.f32 %v2947, %v3039
  %v3108 = vadd.f32 %v2948, %v3044
  %v3109 = vadd.f32 %v2949, %v3044
  %v3110 = vadd.f32 %v2950, %v3049
  %v3111 = vadd.f32 %v2951, %v3049
  %v3112 = vadd.f32 %v2952, %v3054
  %v3113 = vadd.f32 %v2953, %v3054
  %v3114 = vadd.f32 %v2954, %v3059
  %v3115 = vadd.f32 %v2955, %v3059
  %v3116 = vadd.f32 %v2956, %v3064
  %v3117 = vadd.f32 %v2957, %v3064
  %v3118 = vadd.f32 %v2958, %v3069
  %v3119 = vadd.f32 %v2959, %v3069
  %v3120 = vadd.f32 %v2960, %v3074
  %v3121 = vadd.f32 %v2961, %v3074
  %v3122 = vadd.f32 %v2962, %v3079
  %v3123 = vadd.f32 %v2963, %v3079
  %v3124 = vadd.f32 %v2964, %v3084
  %v3125 = vadd.f32 %v2965, %v3084
  %3126 = vst [vmem:[%s7] sm:$0xff] %v3086
  %3127 = vst.msk [vmem:[%s7 + $0x8] sm:$0xff] %vm2225, %v3087
  %3128 = vst [vmem:[%s7 + $0x10] sm:$0xff] %v3088
  %3129 = vst.msk [vmem:[%s7 + $0x18] sm:$0xff] %vm2225, %v3089
  %3130 = vst [vmem:[%s7 + $0x20] sm:$0xff] %v3090
  %3131 = vst.msk [vmem:[%s7 + $0x28] sm:$0xff] %vm2225, %v3091
  %3132 = vst [vmem:[%s7 + $0x30] sm:$0xff] %v3092
  %3133 = vst.msk [vmem:[%s7 + $0x38] sm:$0xff] %vm2225, %v3093
  %3134 = vst [vmem:[%s7 + $0x40] sm:$0xff] %v3094
  %3135 = vst.msk [vmem:[%s7 + $0x48] sm:$0xff] %vm2225, %v3095
  %3136 = vst [vmem:[%s7 + $0x50] sm:$0xff] %v3096
  %3137 = vst.msk [vmem:[%s7 + $0x58] sm:$0xff] %vm2225, %v3097
  %3138 = vst [vmem:[%s7 + $0x60] sm:$0xff] %v3098
  %3139 = vst.msk [vmem:[%s7 + $0x68] sm:$0xff] %vm2225, %v3099
  %3140 = vst [vmem:[%s7 + $0x70] sm:$0xff] %v3100
  %3141 = vst.msk [vmem:[%s7 + $0x78] sm:$0xff] %vm2225, %v3101
  %3142 = vst [vmem:[%s7 + $0x80] sm:$0xff] %v3102
  %3143 = vst.msk [vmem:[%s7 + $0x88] sm:$0xff] %vm2225, %v3103
  %3144 = vst [vmem:[%s7 + $0x90] sm:$0xff] %v3104
  %3145 = vst.msk [vmem:[%s7 + $0x98] sm:$0xff] %vm2225, %v3105
  %3146 = vst [vmem:[%s7 + $0xa0] sm:$0xff] %v3106
  %3147 = vst.msk [vmem:[%s7 + $0xa8] sm:$0xff] %vm2225, %v3107
  %3148 = vst [vmem:[%s7 + $0xb0] sm:$0xff] %v3108
  %3149 = vst.msk [vmem:[%s7 + $0xb8] sm:$0xff] %vm2225, %v3109
  %3150 = vst [vmem:[%s7 + $0xc0] sm:$0xff] %v3110
  %3151 = vst.msk [vmem:[%s7 + $0xc8] sm:$0xff] %vm2225, %v3111
  %3152 = vst [vmem:[%s7 + $0xd0] sm:$0xff] %v3112
  %3153 = vst.msk [vmem:[%s7 + $0xd8] sm:$0xff] %vm2225, %v3113
  %3154 = vst [vmem:[%s7 + $0xe0] sm:$0xff] %v3114
  %3155 = vst.msk [vmem:[%s7 + $0xe8] sm:$0xff] %vm2225, %v3115
  %3156 = vst [vmem:[%s7 + $0xf0] sm:$0xff] %v3116
  %3157 = vst.msk [vmem:[%s7 + $0xf8] sm:$0xff] %vm2225, %v3117
  %3158 = vst [vmem:[%s7 + $0x100] sm:$0xff] %v3118
  %3159 = vst.msk [vmem:[%s7 + $0x108] sm:$0xff] %vm2225, %v3119
  %3160 = vst [vmem:[%s7 + $0x110] sm:$0xff] %v3120
  %3161 = vst.msk [vmem:[%s7 + $0x118] sm:$0xff] %vm2225, %v3121
  %3162 = vst [vmem:[%s7 + $0x120] sm:$0xff] %v3122
  %3163 = vst.msk [vmem:[%s7 + $0x128] sm:$0xff] %vm2225, %v3123
  %3164 = vst [vmem:[%s7 + $0x130] sm:$0xff] %v3124
  %3165 = vst.msk [vmem:[%s7 + $0x138] sm:$0xff] %vm2225, %v3125
  // Predicated region
  $region30: #{se_conv_bn.1} parent=0 // pred_check
    _
  $region31: #{se_conv_bn.1} parent=0 // pred_check_branch
    %3167 = sbr.rel (0) target = $region33
  $region32: #{se_conv_bn.1} parent=0 // pred_region
    _
  $region33: #{se_conv_bn.1} parent=0 // pred_fallthru
    _
  // Predicated region
  $region34: #{se_conv_bn.1} parent=0 // pred_check
    _
  $region35: #{se_conv_bn.1} parent=0 // pred_check_branch
    %3169 = sbr.rel (0) target = $region37
  $region36: #{se_conv_bn.1} parent=0 // pred_region
    _
  $region37: #{se_conv_bn.1} parent=0 // pred_fallthru
    _

</llo_original>
